<compile_context>
chip_gen: v6e
topology: v6e:2x2x1
jax: 0.10.0
libtpu: 0.0.40
codegen_flags: <defaults>
</compile_context>

<pallas_src>
import functools
import math

import jax
import jax.numpy as jnp
from jax import lax
from jax.experimental import pallas as pl
from jax.experimental.pallas import tpu as pltpu


def _rca_fused_kernel(x_ref, kv_ref,
                      wq_ref, wk_ref, wv_ref, wo_ref,
                      bq_ref, bk_ref, bv_ref, bo_ref,
                      gamma_ref, beta_ref,
                      out_ref,
                      k_scr, v_scr,
                      *, num_heads, steps, batch, lq, lkv):
    """All `steps` recurrence iterations for the whole (flattened) batch.

    x_ref   : (B*Lq,  E)  query input / residual branch, step-0 state
    kv_ref  : (B*Lkv, E)  key/value source (constant across steps)
    wq/wk/wv/wo : (E, E)  pre-transposed projections (x @ W == x @ W_pt.T)
    bq/bk/bv/bo, gamma, beta : (1, E)
    out_ref : (B*Lq, E)
    k_scr/v_scr : (B*Lkv, E) f32 VMEM scratch for the hoisted K / V projections
    """
    x0 = x_ref[...].astype(jnp.float32)            # (M, E)
    kv = kv_ref[...].astype(jnp.float32)           # (B*Lkv, E)
    M, E = x0.shape
    Dh = E // num_heads
    scale = 1.0 / math.sqrt(Dh)

    # K / V depend only on vision_emb -> one packed, E-wide matmul each, reused by every step.
    k_scr[...] = jnp.dot(kv, wk_ref[...], preferred_element_type=jnp.float32) + bk_ref[...]
    v_scr[...] = jnp.dot(kv, wv_ref[...], preferred_element_type=jnp.float32) + bv_ref[...]

    wq = wq_ref[...]                               # (E, E)
    wo = wo_ref[...]                               # (E, E)
    bq = bq_ref[...]                               # (1, E)

    # Hoist (1,E) -> (M,E) broadcasts out of the recurrence loop (JAX does not CSE them).
    bo = jnp.broadcast_to(bo_ref[...], (M, E)).astype(jnp.float32)
    gamma = jnp.broadcast_to(gamma_ref[...], (M, E)).astype(jnp.float32)
    beta = jnp.broadcast_to(beta_ref[...], (M, E)).astype(jnp.float32)

    # Contract the last dim of both operands: q @ k^T with no explicit transpose.
    nt_dims = (((1,), (1,)), ((), ()))

    def step(_, x):                                # x: (M, E) f32
        # Single packed, MXU-wide Q projection for the whole batch.
        q_all = jnp.dot(x, wq, preferred_element_type=jnp.float32) + bq      # (M, E)
        k_all = k_scr[...]
        v_all = v_scr[...]

        ctx_batches = []
        for b in range(batch):                     # static, tiny
            qb = q_all[b * lq:(b + 1) * lq]        # (Lq,  E) sublane-aligned row slice
            kb = k_all[b * lkv:(b + 1) * lkv]      # (Lkv, E)
            vb = v_all[b * lkv:(b + 1) * lkv]
            ctx_heads = []
            for h in range(num_heads):             # per-head Dh slices only for the small dots
                qh = qb[:, h * Dh:(h + 1) * Dh]
                kh = kb[:, h * Dh:(h + 1) * Dh]
                vh = vb[:, h * Dh:(h + 1) * Dh]
                s = lax.dot_general(qh, kh, dimension_numbers=nt_dims,
                                    preferred_element_type=jnp.float32) * scale   # (Lq, Lkv)
                s = s - jnp.max(s, axis=-1, keepdims=True)
                p = jnp.exp(s)                                      # unnormalized probs (EUP)
                denom = jnp.sum(p, axis=-1, keepdims=True)          # (Lq, 1)
                ctx_h = jnp.dot(p, vh, preferred_element_type=jnp.float32)         # (Lq, Dh)
                # Normalize AFTER P@V: (Lq,Dh) scale instead of (Lq,Lkv) multiply.
                # exact reciprocal kept (approx=True may not hold 1e-4 over 3 steps)
                ctx_heads.append(ctx_h * pl.reciprocal(denom, approx=False))
            ctx_batches.append(jnp.concatenate(ctx_heads, axis=-1))                # (Lq, E)
        ctx = jnp.concatenate(ctx_batches, axis=0)                                  # (M, E)

        # Single fused output projection over all heads / batch rows.
        attn = jnp.dot(ctx, wo, preferred_element_type=jnp.float32) + bo

        # residual + LayerNorm (eps=1e-5, biased variance, matching nn.LayerNorm)
        res = x + attn
        mean = jnp.mean(res, axis=-1, keepdims=True)
        var = jnp.mean(jnp.square(res - mean), axis=-1, keepdims=True)
        return (res - mean) * lax.rsqrt(var + 1e-5) * gamma + beta

    x_final = lax.fori_loop(0, steps, step, x0, unroll=True)
    out_ref[...] = x_final.astype(out_ref.dtype)


def recurrent_cross_attention_fusion(text_emb, vision_emb, params, *, num_heads, steps):
    B, Lq, E = text_emb.shape
    _, Lkv, _ = vision_emb.shape
    assert E % num_heads == 0

    ipw = params["in_proj_weight"]                 # (3E, E) packed q/k/v (PyTorch layout)
    ipb = params["in_proj_bias"]                   # (3E,)

    # 2-D pre-transposed weights: x @ W_pt == x @ W.T (lane dim = output dim = E).
    wq = ipw[0:E].T
    wk = ipw[E:2 * E].T
    wv = ipw[2 * E:3 * E].T
    wo = params["out_proj_weight"].T
    bq = ipb[0:E].reshape(1, E)
    bk = ipb[E:2 * E].reshape(1, E)
    bv = ipb[2 * E:3 * E].reshape(1, E)
    bo = params["out_proj_bias"].reshape(1, E)
    gamma = params["ln_weight"].reshape(1, E)
    beta = params["ln_bias"].reshape(1, E)

    # Flatten batch into the sublane dim: one grid step, no per-batch launch overhead.
    x_flat = text_emb.reshape(B * Lq, E)
    kv_flat = vision_emb.reshape(B * Lkv, E)

    x_spec = pl.BlockSpec((B * Lq, E), lambda i: (0, 0))
    kv_spec = pl.BlockSpec((B * Lkv, E), lambda i: (0, 0))
    w_spec = pl.BlockSpec((E, E), lambda i: (0, 0))
    vec_spec = pl.BlockSpec((1, E), lambda i: (0, 0))

    fn = pl.pallas_call(
        functools.partial(_rca_fused_kernel, num_heads=num_heads, steps=steps,
                          batch=B, lq=Lq, lkv=Lkv),
        out_shape=jax.ShapeDtypeStruct((B * Lq, E), text_emb.dtype),
        grid=(1,),
        in_specs=[x_spec, kv_spec,
                  w_spec, w_spec, w_spec, w_spec,
                  vec_spec, vec_spec, vec_spec, vec_spec,
                  vec_spec, vec_spec],
        out_specs=x_spec,
        scratch_shapes=[pltpu.VMEM((B * Lkv, E), jnp.float32),
                        pltpu.VMEM((B * Lkv, E), jnp.float32)],
        compiler_params=pltpu.CompilerParams(
            dimension_semantics=("arbitrary",),
            vmem_limit_bytes=32 * 1024 * 1024),
    )
    out_flat = fn(x_flat, kv_flat, wq, wk, wv, wo, bq, bk, bv, bo, gamma, beta)
    return out_flat.reshape(B, Lq, E)


def _reference(text_emb, vision_emb, params, *, num_heads, steps):
    """Pure-JAX reference mirroring PyTorch nn.MultiheadAttention + LayerNorm."""
    B, Lq, E = text_emb.shape
    _, Lkv, _ = vision_emb.shape
    H, Dh = num_heads, E // num_heads
    Wq = params["in_proj_weight"][0:E]
    Wk = params["in_proj_weight"][E:2 * E]
    Wv = params["in_proj_weight"][2 * E:3 * E]
    bq = params["in_proj_bias"][0:E]
    bk = params["in_proj_bias"][E:2 * E]
    bv = params["in_proj_bias"][2 * E:3 * E]
    Wo, bo = params["out_proj_weight"], params["out_proj_bias"]
    gamma, beta = params["ln_weight"], params["ln_bias"]

    def mha(x, kv):
        q = (x @ Wq.T + bq).reshape(B, Lq, H, Dh).transpose(0, 2, 1, 3)
        k = (kv @ Wk.T + bk).reshape(B, Lkv, H, Dh).transpose(0, 2, 1, 3)
        v = (kv @ Wv.T + bv).reshape(B, Lkv, H, Dh).transpose(0, 2, 1, 3)
        s = jnp.einsum("bhqd,bhkd->bhqk", q, k) / math.sqrt(Dh)
        p = jax.nn.softmax(s, axis=-1)
        ctx = jnp.einsum("bhqk,bhkd->bhqd", p, v).transpose(0, 2, 1, 3).reshape(B, Lq, E)
        return ctx @ Wo.T + bo

    fused = text_emb
    for _ in range(steps):
        res = fused + mha(fused, vision_emb)
        mean = jnp.mean(res, axis=-1, keepdims=True)
        var = jnp.mean(jnp.square(res - mean), axis=-1, keepdims=True)
        fused = (res - mean) * lax.rsqrt(var + 1e-5) * gamma + beta
    return fused


if __name__ == "__main__":
    # Small, forward-consistent shapes: embed_dim=32, num_heads=4, steps=3,
    # batch=2, text seq len=8, vision seq len=8.
    B, Lq, Lkv, E, H, STEPS = 2, 8, 8, 32, 4, 3

    key = jax.random.PRNGKey(0)
    k_ipw, k_ipb, k_opw, k_opb, k_txt, k_vis = jax.random.split(key, 6)

    params = {
        "in_proj_weight": 0.05 * jax.random.normal(k_ipw, (3 * E, E), jnp.float32),
        "in_proj_bias":   0.01 * jax.random.normal(k_ipb, (3 * E,), jnp.float32),
        "out_proj_weight": 0.05 * jax.random.normal(k_opw, (E, E), jnp.float32),
        "out_proj_bias":   0.01 * jax.random.normal(k_opb, (E,), jnp.float32),
        "ln_weight": jnp.ones((E,), jnp.float32),   # nn.LayerNorm default init
        "ln_bias":   jnp.zeros((E,), jnp.float32),
    }

    text_emb = jax.random.normal(k_txt, (B, Lq, E), jnp.float32)
    vision_emb = jax.random.normal(k_vis, (B, Lkv, E), jnp.float32)

    out = recurrent_cross_attention_fusion(text_emb, vision_emb, params,
                                           num_heads=H, steps=STEPS)
    out = jax.block_until_ready(out)

    ref = _reference(text_emb, vision_emb, params, num_heads=H, steps=STEPS)
    assert out.shape == (B, Lq, E)
    assert bool(jnp.all(jnp.isfinite(out)))
    assert bool(jnp.allclose(out, ref, rtol=1e-4, atol=1e-4)), \
        f"max abs err {float(jnp.max(jnp.abs(out - ref)))}"

    print("KERNEL_OK")
</pallas_src>

<mosaic_0001>
module attributes {stable_mosaic.version = 11 : i64} {
  func.func @_rca_fused_kernel(%arg0: i32, %arg1: memref<16x32xf32, #tpu.memory_space<vmem>>, %arg2: memref<16x32xf32, #tpu.memory_space<vmem>>, %arg3: memref<32x32xf32, #tpu.memory_space<vmem>>, %arg4: memref<32x32xf32, #tpu.memory_space<vmem>>, %arg5: memref<32x32xf32, #tpu.memory_space<vmem>>, %arg6: memref<32x32xf32, #tpu.memory_space<vmem>>, %arg7: memref<1x32xf32, #tpu.memory_space<vmem>>, %arg8: memref<1x32xf32, #tpu.memory_space<vmem>>, %arg9: memref<1x32xf32, #tpu.memory_space<vmem>>, %arg10: memref<1x32xf32, #tpu.memory_space<vmem>>, %arg11: memref<1x32xf32, #tpu.memory_space<vmem>>, %arg12: memref<1x32xf32, #tpu.memory_space<vmem>>, %arg13: memref<16x32xf32, #tpu.memory_space<vmem>>, %arg14: memref<16x32xf32, #tpu.memory_space<vmem>>, %arg15: memref<16x32xf32, #tpu.memory_space<vmem>>) attributes {dimension_semantics = [#tpu.dimension_semantics<arbitrary>], iteration_bounds = array<i64: 1>, scalar_prefetch = 0 : i64, scratch_operands = 2 : i64, tpu.core_type = #tpu.core_type<tc>, window_params = [{pipeline_mode = #tpu.pipeline_mode<synchronous>, transform_indices = @transform_0, window_bounds = array<i64: 16, 32>}, {pipeline_mode = #tpu.pipeline_mode<synchronous>, transform_indices = @transform_1, window_bounds = array<i64: 16, 32>}, {pipeline_mode = #tpu.pipeline_mode<synchronous>, transform_indices = @transform_2, window_bounds = array<i64: 32, 32>}, {pipeline_mode = #tpu.pipeline_mode<synchronous>, transform_indices = @transform_3, window_bounds = array<i64: 32, 32>}, {pipeline_mode = #tpu.pipeline_mode<synchronous>, transform_indices = @transform_4, window_bounds = array<i64: 32, 32>}, {pipeline_mode = #tpu.pipeline_mode<synchronous>, transform_indices = @transform_5, window_bounds = array<i64: 32, 32>}, {pipeline_mode = #tpu.pipeline_mode<synchronous>, transform_indices = @transform_6, window_bounds = array<i64: 1, 32>}, {pipeline_mode = #tpu.pipeline_mode<synchronous>, transform_indices = @transform_7, window_bounds = array<i64: 1, 32>}, {pipeline_mode = #tpu.pipeline_mode<synchronous>, transform_indices = @transform_8, window_bounds = array<i64: 1, 32>}, {pipeline_mode = #tpu.pipeline_mode<synchronous>, transform_indices = @transform_9, window_bounds = array<i64: 1, 32>}, {pipeline_mode = #tpu.pipeline_mode<synchronous>, transform_indices = @transform_10, window_bounds = array<i64: 1, 32>}, {pipeline_mode = #tpu.pipeline_mode<synchronous>, transform_indices = @transform_11, window_bounds = array<i64: 1, 32>}, {pipeline_mode = #tpu.pipeline_mode<synchronous>, transform_indices = @transform_12, window_bounds = array<i64: 16, 32>}]} {
    %c0 = arith.constant 0 : index
    %c0_0 = arith.constant 0 : index
    %0 = vector.load %arg1[%c0, %c0_0] : memref<16x32xf32, #tpu.memory_space<vmem>>, vector<16x32xf32>
    %c0_1 = arith.constant 0 : index
    %c0_2 = arith.constant 0 : index
    %1 = vector.load %arg2[%c0_1, %c0_2] : memref<16x32xf32, #tpu.memory_space<vmem>>, vector<16x32xf32>
    %c0_3 = arith.constant 0 : index
    %c0_4 = arith.constant 0 : index
    %2 = vector.load %arg4[%c0_3, %c0_4] : memref<32x32xf32, #tpu.memory_space<vmem>>, vector<32x32xf32>
    %cst = arith.constant dense<0.000000e+00> : vector<16x32xf32>
    %3 = tpu.matmul %1, %2, %cst {dimension_numbers = #tpu.dot_dimension_numbers<[1], [0], [0], [1], [0, 0, 1, 1], [], []>} : vector<16x32xf32>, vector<32x32xf32>, vector<16x32xf32> -> vector<16x32xf32>
    %c0_5 = arith.constant 0 : index
    %c0_6 = arith.constant 0 : index
    %4 = vector.load %arg8[%c0_5, %c0_6] : memref<1x32xf32, #tpu.memory_space<vmem>>, vector<1x32xf32>
    %5 = vector.broadcast %4 : vector<1x32xf32> to vector<16x32xf32>
    %6 = arith.addf %3, %5 : vector<16x32xf32>
    %c0_7 = arith.constant 0 : index
    %c0_8 = arith.constant 0 : index
    %7 = vector.load %arg14[%c0_7, %c0_8] : memref<16x32xf32, #tpu.memory_space<vmem>>, vector<16x32xf32>
    tpu.vector_store %arg14[%c0_7, %c0_8], %6 {strides = array<i32>} : memref<16x32xf32, #tpu.memory_space<vmem>>, vector<16x32xf32>,
    %c0_9 = arith.constant 0 : index
    %c0_10 = arith.constant 0 : index
    %8 = vector.load %arg5[%c0_9, %c0_10] : memref<32x32xf32, #tpu.memory_space<vmem>>, vector<32x32xf32>
    %cst_11 = arith.constant dense<0.000000e+00> : vector<16x32xf32>
    %9 = tpu.matmul %1, %8, %cst_11 {dimension_numbers = #tpu.dot_dimension_numbers<[1], [0], [0], [1], [0, 0, 1, 1], [], []>} : vector<16x32xf32>, vector<32x32xf32>, vector<16x32xf32> -> vector<16x32xf32>
    %c0_12 = arith.constant 0 : index
    %c0_13 = arith.constant 0 : index
    %10 = vector.load %arg9[%c0_12, %c0_13] : memref<1x32xf32, #tpu.memory_space<vmem>>, vector<1x32xf32>
    %11 = vector.broadcast %10 : vector<1x32xf32> to vector<16x32xf32>
    %12 = arith.addf %9, %11 : vector<16x32xf32>
    %c0_14 = arith.constant 0 : index
    %c0_15 = arith.constant 0 : index
    %13 = vector.load %arg15[%c0_14, %c0_15] : memref<16x32xf32, #tpu.memory_space<vmem>>, vector<16x32xf32>
    tpu.vector_store %arg15[%c0_14, %c0_15], %12 {strides = array<i32>} : memref<16x32xf32, #tpu.memory_space<vmem>>, vector<16x32xf32>,
    %c0_16 = arith.constant 0 : index
    %c0_17 = arith.constant 0 : index
    %14 = vector.load %arg3[%c0_16, %c0_17] : memref<32x32xf32, #tpu.memory_space<vmem>>, vector<32x32xf32>
    %c0_18 = arith.constant 0 : index
    %c0_19 = arith.constant 0 : index
    %15 = vector.load %arg6[%c0_18, %c0_19] : memref<32x32xf32, #tpu.memory_space<vmem>>, vector<32x32xf32>
    %c0_20 = arith.constant 0 : index
    %c0_21 = arith.constant 0 : index
    %16 = vector.load %arg7[%c0_20, %c0_21] : memref<1x32xf32, #tpu.memory_space<vmem>>, vector<1x32xf32>
    %c0_22 = arith.constant 0 : index
    %c0_23 = arith.constant 0 : index
    %17 = vector.load %arg10[%c0_22, %c0_23] : memref<1x32xf32, #tpu.memory_space<vmem>>, vector<1x32xf32>
    %18 = vector.shape_cast %17 : vector<1x32xf32> to vector<1x32xf32>
    %19 = vector.broadcast %18 : vector<1x32xf32> to vector<16x32xf32>
    %c0_24 = arith.constant 0 : index
    %c0_25 = arith.constant 0 : index
    %20 = vector.load %arg11[%c0_24, %c0_25] : memref<1x32xf32, #tpu.memory_space<vmem>>, vector<1x32xf32>
    %21 = vector.shape_cast %20 : vector<1x32xf32> to vector<1x32xf32>
    %22 = vector.broadcast %21 : vector<1x32xf32> to vector<16x32xf32>
    %c0_26 = arith.constant 0 : index
    %c0_27 = arith.constant 0 : index
    %23 = vector.load %arg12[%c0_26, %c0_27] : memref<1x32xf32, #tpu.memory_space<vmem>>, vector<1x32xf32>
    %24 = vector.shape_cast %23 : vector<1x32xf32> to vector<1x32xf32>
    %25 = vector.broadcast %24 : vector<1x32xf32> to vector<16x32xf32>
    %c0_i32 = arith.constant 0 : i32
    %cst_28 = arith.constant dense<0.000000e+00> : vector<16x32xf32>
    %26 = tpu.matmul %0, %14, %cst_28 {dimension_numbers = #tpu.dot_dimension_numbers<[1], [0], [0], [1], [0, 0, 1, 1], [], []>} : vector<16x32xf32>, vector<32x32xf32>, vector<16x32xf32> -> vector<16x32xf32>
    %27 = vector.broadcast %16 : vector<1x32xf32> to vector<16x32xf32>
    %28 = arith.addf %26, %27 : vector<16x32xf32>
    %c0_29 = arith.constant 0 : index
    %c0_30 = arith.constant 0 : index
    %29 = vector.load %arg14[%c0_29, %c0_30] : memref<16x32xf32, #tpu.memory_space<vmem>>, vector<16x32xf32>
    %c0_31 = arith.constant 0 : index
    %c0_32 = arith.constant 0 : index
    %30 = vector.load %arg15[%c0_31, %c0_32] : memref<16x32xf32, #tpu.memory_space<vmem>>, vector<16x32xf32>
    %31 = vector.extract_strided_slice %28 {offsets = [0, 0], sizes = [8, 32], strides = [1, 1]} : vector<16x32xf32> to vector<8x32xf32>
    %32 = vector.extract_strided_slice %29 {offsets = [0, 0], sizes = [8, 32], strides = [1, 1]} : vector<16x32xf32> to vector<8x32xf32>
    %33 = vector.extract_strided_slice %30 {offsets = [0, 0], sizes = [8, 32], strides = [1, 1]} : vector<16x32xf32> to vector<8x32xf32>
    %34 = vector.extract_strided_slice %31 {offsets = [0, 0], sizes = [8, 8], strides = [1, 1]} : vector<8x32xf32> to vector<8x8xf32>
    %35 = vector.extract_strided_slice %32 {offsets = [0, 0], sizes = [8, 8], strides = [1, 1]} : vector<8x32xf32> to vector<8x8xf32>
    %36 = vector.extract_strided_slice %33 {offsets = [0, 0], sizes = [8, 8], strides = [1, 1]} : vector<8x32xf32> to vector<8x8xf32>
    %cst_33 = arith.constant dense<0.000000e+00> : vector<8x8xf32>
    %37 = tpu.matmul %34, %35, %cst_33 {dimension_numbers = #tpu.dot_dimension_numbers<[1], [1], [0], [0], [0, 0, 1, 0], [], []>} : vector<8x8xf32>, vector<8x8xf32>, vector<8x8xf32> -> vector<8x8xf32>
    %cst_34 = arith.constant 0.353553385 : f32
    %38 = vector.broadcast %cst_34 : f32 to vector<8x8xf32>
    %39 = arith.mulf %37, %38 : vector<8x8xf32>
    %cst_35 = arith.constant dense<0xFF800000> : vector<8xf32>
    %40 = vector.multi_reduction <maximumf>, %39, %cst_35 [1] : vector<8x8xf32> to vector<8xf32>
    %41 = vector.shape_cast %40 : vector<8xf32> to vector<8x1xf32>
    %42 = vector.broadcast %41 : vector<8x1xf32> to vector<8x8xf32>
    %43 = arith.subf %39, %42 : vector<8x8xf32>
    %44 = math.exp %43 : vector<8x8xf32>
    %cst_36 = arith.constant dense<0.000000e+00> : vector<8xf32>
    %45 = vector.multi_reduction <add>, %44, %cst_36 [1] : vector<8x8xf32> to vector<8xf32>
    %46 = vector.shape_cast %45 : vector<8xf32> to vector<8x1xf32>
    %cst_37 = arith.constant dense<0.000000e+00> : vector<8x8xf32>
    %47 = tpu.matmul %44, %36, %cst_37 {dimension_numbers = #tpu.dot_dimension_numbers<[1], [0], [0], [1], [0, 0, 1, 1], [], []>} : vector<8x8xf32>, vector<8x8xf32>, vector<8x8xf32> -> vector<8x8xf32>
    %48 = tpu.reciprocal %46 : vector<8x1xf32> -> vector<8x1xf32>
    %49 = vector.broadcast %48 : vector<8x1xf32> to vector<8x8xf32>
    %50 = arith.mulf %47, %49 : vector<8x8xf32>
    %51 = vector.extract_strided_slice %31 {offsets = [0, 8], sizes = [8, 8], strides = [1, 1]} : vector<8x32xf32> to vector<8x8xf32>
    %52 = vector.extract_strided_slice %32 {offsets = [0, 8], sizes = [8, 8], strides = [1, 1]} : vector<8x32xf32> to vector<8x8xf32>
    %53 = vector.extract_strided_slice %33 {offsets = [0, 8], sizes = [8, 8], strides = [1, 1]} : vector<8x32xf32> to vector<8x8xf32>
    %cst_38 = arith.constant dense<0.000000e+00> : vector<8x8xf32>
    %54 = tpu.matmul %51, %52, %cst_38 {dimension_numbers = #tpu.dot_dimension_numbers<[1], [1], [0], [0], [0, 0, 1, 0], [], []>} : vector<8x8xf32>, vector<8x8xf32>, vector<8x8xf32> -> vector<8x8xf32>
    %cst_39 = arith.constant 0.353553385 : f32
    %55 = vector.broadcast %cst_39 : f32 to vector<8x8xf32>
    %56 = arith.mulf %54, %55 : vector<8x8xf32>
    %cst_40 = arith.constant dense<0xFF800000> : vector<8xf32>
    %57 = vector.multi_reduction <maximumf>, %56, %cst_40 [1] : vector<8x8xf32> to vector<8xf32>
    %58 = vector.shape_cast %57 : vector<8xf32> to vector<8x1xf32>
    %59 = vector.broadcast %58 : vector<8x1xf32> to vector<8x8xf32>
    %60 = arith.subf %56, %59 : vector<8x8xf32>
    %61 = math.exp %60 : vector<8x8xf32>
    %cst_41 = arith.constant dense<0.000000e+00> : vector<8xf32>
    %62 = vector.multi_reduction <add>, %61, %cst_41 [1] : vector<8x8xf32> to vector<8xf32>
    %63 = vector.shape_cast %62 : vector<8xf32> to vector<8x1xf32>
    %cst_42 = arith.constant dense<0.000000e+00> : vector<8x8xf32>
    %64 = tpu.matmul %61, %53, %cst_42 {dimension_numbers = #tpu.dot_dimension_numbers<[1], [0], [0], [1], [0, 0, 1, 1], [], []>} : vector<8x8xf32>, vector<8x8xf32>, vector<8x8xf32> -> vector<8x8xf32>
    %65 = tpu.reciprocal %63 : vector<8x1xf32> -> vector<8x1xf32>
    %66 = vector.broadcast %65 : vector<8x1xf32> to vector<8x8xf32>
    %67 = arith.mulf %64, %66 : vector<8x8xf32>
    %68 = vector.extract_strided_slice %31 {offsets = [0, 16], sizes = [8, 8], strides = [1, 1]} : vector<8x32xf32> to vector<8x8xf32>
    %69 = vector.extract_strided_slice %32 {offsets = [0, 16], sizes = [8, 8], strides = [1, 1]} : vector<8x32xf32> to vector<8x8xf32>
    %70 = vector.extract_strided_slice %33 {offsets = [0, 16], sizes = [8, 8], strides = [1, 1]} : vector<8x32xf32> to vector<8x8xf32>
    %cst_43 = arith.constant dense<0.000000e+00> : vector<8x8xf32>
    %71 = tpu.matmul %68, %69, %cst_43 {dimension_numbers = #tpu.dot_dimension_numbers<[1], [1], [0], [0], [0, 0, 1, 0], [], []>} : vector<8x8xf32>, vector<8x8xf32>, vector<8x8xf32> -> vector<8x8xf32>
    %cst_44 = arith.constant 0.353553385 : f32
    %72 = vector.broadcast %cst_44 : f32 to vector<8x8xf32>
    %73 = arith.mulf %71, %72 : vector<8x8xf32>
    %cst_45 = arith.constant dense<0xFF800000> : vector<8xf32>
    %74 = vector.multi_reduction <maximumf>, %73, %cst_45 [1] : vector<8x8xf32> to vector<8xf32>
    %75 = vector.shape_cast %74 : vector<8xf32> to vector<8x1xf32>
    %76 = vector.broadcast %75 : vector<8x1xf32> to vector<8x8xf32>
    %77 = arith.subf %73, %76 : vector<8x8xf32>
    %78 = math.exp %77 : vector<8x8xf32>
    %cst_46 = arith.constant dense<0.000000e+00> : vector<8xf32>
    %79 = vector.multi_reduction <add>, %78, %cst_46 [1] : vector<8x8xf32> to vector<8xf32>
    %80 = vector.shape_cast %79 : vector<8xf32> to vector<8x1xf32>
    %cst_47 = arith.constant dense<0.000000e+00> : vector<8x8xf32>
    %81 = tpu.matmul %78, %70, %cst_47 {dimension_numbers = #tpu.dot_dimension_numbers<[1], [0], [0], [1], [0, 0, 1, 1], [], []>} : vector<8x8xf32>, vector<8x8xf32>, vector<8x8xf32> -> vector<8x8xf32>
    %82 = tpu.reciprocal %80 : vector<8x1xf32> -> vector<8x1xf32>
    %83 = vector.broadcast %82 : vector<8x1xf32> to vector<8x8xf32>
    %84 = arith.mulf %81, %83 : vector<8x8xf32>
    %85 = vector.extract_strided_slice %31 {offsets = [0, 24], sizes = [8, 8], strides = [1, 1]} : vector<8x32xf32> to vector<8x8xf32>
    %86 = vector.extract_strided_slice %32 {offsets = [0, 24], sizes = [8, 8], strides = [1, 1]} : vector<8x32xf32> to vector<8x8xf32>
    %87 = vector.extract_strided_slice %33 {offsets = [0, 24], sizes = [8, 8], strides = [1, 1]} : vector<8x32xf32> to vector<8x8xf32>
    %cst_48 = arith.constant dense<0.000000e+00> : vector<8x8xf32>
    %88 = tpu.matmul %85, %86, %cst_48 {dimension_numbers = #tpu.dot_dimension_numbers<[1], [1], [0], [0], [0, 0, 1, 0], [], []>} : vector<8x8xf32>, vector<8x8xf32>, vector<8x8xf32> -> vector<8x8xf32>
    %cst_49 = arith.constant 0.353553385 : f32
    %89 = vector.broadcast %cst_49 : f32 to vector<8x8xf32>
    %90 = arith.mulf %88, %89 : vector<8x8xf32>
    %cst_50 = arith.constant dense<0xFF800000> : vector<8xf32>
    %91 = vector.multi_reduction <maximumf>, %90, %cst_50 [1] : vector<8x8xf32> to vector<8xf32>
    %92 = vector.shape_cast %91 : vector<8xf32> to vector<8x1xf32>
    %93 = vector.broadcast %92 : vector<8x1xf32> to vector<8x8xf32>
    %94 = arith.subf %90, %93 : vector<8x8xf32>
    %95 = math.exp %94 : vector<8x8xf32>
    %cst_51 = arith.constant dense<0.000000e+00> : vector<8xf32>
    %96 = vector.multi_reduction <add>, %95, %cst_51 [1] : vector<8x8xf32> to vector<8xf32>
    %97 = vector.shape_cast %96 : vector<8xf32> to vector<8x1xf32>
    %cst_52 = arith.constant dense<0.000000e+00> : vector<8x8xf32>
    %98 = tpu.matmul %95, %87, %cst_52 {dimension_numbers = #tpu.dot_dimension_numbers<[1], [0], [0], [1], [0, 0, 1, 1], [], []>} : vector<8x8xf32>, vector<8x8xf32>, vector<8x8xf32> -> vector<8x8xf32>
    %99 = tpu.reciprocal %97 : vector<8x1xf32> -> vector<8x1xf32>
    %100 = vector.broadcast %99 : vector<8x1xf32> to vector<8x8xf32>
    %101 = arith.mulf %98, %100 : vector<8x8xf32>
    %102 = tpu.concatenate %50, %67, %84, %101 in 1 : vector<8x8xf32>, vector<8x8xf32>, vector<8x8xf32>, vector<8x8xf32> -> vector<8x32xf32>
    %103 = vector.extract_strided_slice %28 {offsets = [8, 0], sizes = [8, 32], strides = [1, 1]} : vector<16x32xf32> to vector<8x32xf32>
    %104 = vector.extract_strided_slice %29 {offsets = [8, 0], sizes = [8, 32], strides = [1, 1]} : vector<16x32xf32> to vector<8x32xf32>
    %105 = vector.extract_strided_slice %30 {offsets = [8, 0], sizes = [8, 32], strides = [1, 1]} : vector<16x32xf32> to vector<8x32xf32>
    %106 = vector.extract_strided_slice %103 {offsets = [0, 0], sizes = [8, 8], strides = [1, 1]} : vector<8x32xf32> to vector<8x8xf32>
    %107 = vector.extract_strided_slice %104 {offsets = [0, 0], sizes = [8, 8], strides = [1, 1]} : vector<8x32xf32> to vector<8x8xf32>
    %108 = vector.extract_strided_slice %105 {offsets = [0, 0], sizes = [8, 8], strides = [1, 1]} : vector<8x32xf32> to vector<8x8xf32>
    %cst_53 = arith.constant dense<0.000000e+00> : vector<8x8xf32>
    %109 = tpu.matmul %106, %107, %cst_53 {dimension_numbers = #tpu.dot_dimension_numbers<[1], [1], [0], [0], [0, 0, 1, 0], [], []>} : vector<8x8xf32>, vector<8x8xf32>, vector<8x8xf32> -> vector<8x8xf32>
    %cst_54 = arith.constant 0.353553385 : f32
    %110 = vector.broadcast %cst_54 : f32 to vector<8x8xf32>
    %111 = arith.mulf %109, %110 : vector<8x8xf32>
    %cst_55 = arith.constant dense<0xFF800000> : vector<8xf32>
    %112 = vector.multi_reduction <maximumf>, %111, %cst_55 [1] : vector<8x8xf32> to vector<8xf32>
    %113 = vector.shape_cast %112 : vector<8xf32> to vector<8x1xf32>
    %114 = vector.broadcast %113 : vector<8x1xf32> to vector<8x8xf32>
    %115 = arith.subf %111, %114 : vector<8x8xf32>
    %116 = math.exp %115 : vector<8x8xf32>
    %cst_56 = arith.constant dense<0.000000e+00> : vector<8xf32>
    %117 = vector.multi_reduction <add>, %116, %cst_56 [1] : vector<8x8xf32> to vector<8xf32>
    %118 = vector.shape_cast %117 : vector<8xf32> to vector<8x1xf32>
    %cst_57 = arith.constant dense<0.000000e+00> : vector<8x8xf32>
    %119 = tpu.matmul %116, %108, %cst_57 {dimension_numbers = #tpu.dot_dimension_numbers<[1], [0], [0], [1], [0, 0, 1, 1], [], []>} : vector<8x8xf32>, vector<8x8xf32>, vector<8x8xf32> -> vector<8x8xf32>
    %120 = tpu.reciprocal %118 : vector<8x1xf32> -> vector<8x1xf32>
    %121 = vector.broadcast %120 : vector<8x1xf32> to vector<8x8xf32>
    %122 = arith.mulf %119, %121 : vector<8x8xf32>
    %123 = vector.extract_strided_slice %103 {offsets = [0, 8], sizes = [8, 8], strides = [1, 1]} : vector<8x32xf32> to vector<8x8xf32>
    %124 = vector.extract_strided_slice %104 {offsets = [0, 8], sizes = [8, 8], strides = [1, 1]} : vector<8x32xf32> to vector<8x8xf32>
    %125 = vector.extract_strided_slice %105 {offsets = [0, 8], sizes = [8, 8], strides = [1, 1]} : vector<8x32xf32> to vector<8x8xf32>
    %cst_58 = arith.constant dense<0.000000e+00> : vector<8x8xf32>
    %126 = tpu.matmul %123, %124, %cst_58 {dimension_numbers = #tpu.dot_dimension_numbers<[1], [1], [0], [0], [0, 0, 1, 0], [], []>} : vector<8x8xf32>, vector<8x8xf32>, vector<8x8xf32> -> vector<8x8xf32>
    %cst_59 = arith.constant 0.353553385 : f32
    %127 = vector.broadcast %cst_59 : f32 to vector<8x8xf32>
    %128 = arith.mulf %126, %127 : vector<8x8xf32>
    %cst_60 = arith.constant dense<0xFF800000> : vector<8xf32>
    %129 = vector.multi_reduction <maximumf>, %128, %cst_60 [1] : vector<8x8xf32> to vector<8xf32>
    %130 = vector.shape_cast %129 : vector<8xf32> to vector<8x1xf32>
    %131 = vector.broadcast %130 : vector<8x1xf32> to vector<8x8xf32>
    %132 = arith.subf %128, %131 : vector<8x8xf32>
    %133 = math.exp %132 : vector<8x8xf32>
    %cst_61 = arith.constant dense<0.000000e+00> : vector<8xf32>
    %134 = vector.multi_reduction <add>, %133, %cst_61 [1] : vector<8x8xf32> to vector<8xf32>
    %135 = vector.shape_cast %134 : vector<8xf32> to vector<8x1xf32>
    %cst_62 = arith.constant dense<0.000000e+00> : vector<8x8xf32>
    %136 = tpu.matmul %133, %125, %cst_62 {dimension_numbers = #tpu.dot_dimension_numbers<[1], [0], [0], [1], [0, 0, 1, 1], [], []>} : vector<8x8xf32>, vector<8x8xf32>, vector<8x8xf32> -> vector<8x8xf32>
    %137 = tpu.reciprocal %135 : vector<8x1xf32> -> vector<8x1xf32>
    %138 = vector.broadcast %137 : vector<8x1xf32> to vector<8x8xf32>
    %139 = arith.mulf %136, %138 : vector<8x8xf32>
    %140 = vector.extract_strided_slice %103 {offsets = [0, 16], sizes = [8, 8], strides = [1, 1]} : vector<8x32xf32> to vector<8x8xf32>
    %141 = vector.extract_strided_slice %104 {offsets = [0, 16], sizes = [8, 8], strides = [1, 1]} : vector<8x32xf32> to vector<8x8xf32>
    %142 = vector.extract_strided_slice %105 {offsets = [0, 16], sizes = [8, 8], strides = [1, 1]} : vector<8x32xf32> to vector<8x8xf32>
    %cst_63 = arith.constant dense<0.000000e+00> : vector<8x8xf32>
    %143 = tpu.matmul %140, %141, %cst_63 {dimension_numbers = #tpu.dot_dimension_numbers<[1], [1], [0], [0], [0, 0, 1, 0], [], []>} : vector<8x8xf32>, vector<8x8xf32>, vector<8x8xf32> -> vector<8x8xf32>
    %cst_64 = arith.constant 0.353553385 : f32
    %144 = vector.broadcast %cst_64 : f32 to vector<8x8xf32>
    %145 = arith.mulf %143, %144 : vector<8x8xf32>
    %cst_65 = arith.constant dense<0xFF800000> : vector<8xf32>
    %146 = vector.multi_reduction <maximumf>, %145, %cst_65 [1] : vector<8x8xf32> to vector<8xf32>
    %147 = vector.shape_cast %146 : vector<8xf32> to vector<8x1xf32>
    %148 = vector.broadcast %147 : vector<8x1xf32> to vector<8x8xf32>
    %149 = arith.subf %145, %148 : vector<8x8xf32>
    %150 = math.exp %149 : vector<8x8xf32>
    %cst_66 = arith.constant dense<0.000000e+00> : vector<8xf32>
    %151 = vector.multi_reduction <add>, %150, %cst_66 [1] : vector<8x8xf32> to vector<8xf32>
    %152 = vector.shape_cast %151 : vector<8xf32> to vector<8x1xf32>
    %cst_67 = arith.constant dense<0.000000e+00> : vector<8x8xf32>
    %153 = tpu.matmul %150, %142, %cst_67 {dimension_numbers = #tpu.dot_dimension_numbers<[1], [0], [0], [1], [0, 0, 1, 1], [], []>} : vector<8x8xf32>, vector<8x8xf32>, vector<8x8xf32> -> vector<8x8xf32>
    %154 = tpu.reciprocal %152 : vector<8x1xf32> -> vector<8x1xf32>
    %155 = vector.broadcast %154 : vector<8x1xf32> to vector<8x8xf32>
    %156 = arith.mulf %153, %155 : vector<8x8xf32>
    %157 = vector.extract_strided_slice %103 {offsets = [0, 24], sizes = [8, 8], strides = [1, 1]} : vector<8x32xf32> to vector<8x8xf32>
    %158 = vector.extract_strided_slice %104 {offsets = [0, 24], sizes = [8, 8], strides = [1, 1]} : vector<8x32xf32> to vector<8x8xf32>
    %159 = vector.extract_strided_slice %105 {offsets = [0, 24], sizes = [8, 8], strides = [1, 1]} : vector<8x32xf32> to vector<8x8xf32>
    %cst_68 = arith.constant dense<0.000000e+00> : vector<8x8xf32>
    %160 = tpu.matmul %157, %158, %cst_68 {dimension_numbers = #tpu.dot_dimension_numbers<[1], [1], [0], [0], [0, 0, 1, 0], [], []>} : vector<8x8xf32>, vector<8x8xf32>, vector<8x8xf32> -> vector<8x8xf32>
    %cst_69 = arith.constant 0.353553385 : f32
    %161 = vector.broadcast %cst_69 : f32 to vector<8x8xf32>
    %162 = arith.mulf %160, %161 : vector<8x8xf32>
    %cst_70 = arith.constant dense<0xFF800000> : vector<8xf32>
    %163 = vector.multi_reduction <maximumf>, %162, %cst_70 [1] : vector<8x8xf32> to vector<8xf32>
    %164 = vector.shape_cast %163 : vector<8xf32> to vector<8x1xf32>
    %165 = vector.broadcast %164 : vector<8x1xf32> to vector<8x8xf32>
    %166 = arith.subf %162, %165 : vector<8x8xf32>
    %167 = math.exp %166 : vector<8x8xf32>
    %cst_71 = arith.constant dense<0.000000e+00> : vector<8xf32>
    %168 = vector.multi_reduction <add>, %167, %cst_71 [1] : vector<8x8xf32> to vector<8xf32>
    %169 = vector.shape_cast %168 : vector<8xf32> to vector<8x1xf32>
    %cst_72 = arith.constant dense<0.000000e+00> : vector<8x8xf32>
    %170 = tpu.matmul %167, %159, %cst_72 {dimension_numbers = #tpu.dot_dimension_numbers<[1], [0], [0], [1], [0, 0, 1, 1], [], []>} : vector<8x8xf32>, vector<8x8xf32>, vector<8x8xf32> -> vector<8x8xf32>
    %171 = tpu.reciprocal %169 : vector<8x1xf32> -> vector<8x1xf32>
    %172 = vector.broadcast %171 : vector<8x1xf32> to vector<8x8xf32>
    %173 = arith.mulf %170, %172 : vector<8x8xf32>
    %174 = tpu.concatenate %122, %139, %156, %173 in 1 : vector<8x8xf32>, vector<8x8xf32>, vector<8x8xf32>, vector<8x8xf32> -> vector<8x32xf32>
    %175 = tpu.concatenate %102, %174 in 0 : vector<8x32xf32>, vector<8x32xf32> -> vector<16x32xf32>
    %cst_73 = arith.constant dense<0.000000e+00> : vector<16x32xf32>
    %176 = tpu.matmul %175, %15, %cst_73 {dimension_numbers = #tpu.dot_dimension_numbers<[1], [0], [0], [1], [0, 0, 1, 1], [], []>} : vector<16x32xf32>, vector<32x32xf32>, vector<16x32xf32> -> vector<16x32xf32>
    %177 = arith.addf %176, %19 : vector<16x32xf32>
    %178 = arith.addf %0, %177 : vector<16x32xf32>
    %cst_74 = arith.constant dense<0.000000e+00> : vector<16xf32>
    %179 = vector.multi_reduction <add>, %178, %cst_74 [1] : vector<16x32xf32> to vector<16xf32>
    %180 = vector.shape_cast %179 : vector<16xf32> to vector<16x1xf32>
    %cst_75 = arith.constant 3.200000e+01 : f32
    %181 = vector.broadcast %cst_75 : f32 to vector<16x1xf32>
    %182 = arith.divf %180, %181 : vector<16x1xf32>
    %183 = vector.broadcast %182 : vector<16x1xf32> to vector<16x32xf32>
    %184 = arith.subf %178, %183 : vector<16x32xf32>
    %185 = arith.mulf %184, %184 : vector<16x32xf32>
    %cst_76 = arith.constant dense<0.000000e+00> : vector<16xf32>
    %186 = vector.multi_reduction <add>, %185, %cst_76 [1] : vector<16x32xf32> to vector<16xf32>
    %187 = vector.shape_cast %186 : vector<16xf32> to vector<16x1xf32>
    %cst_77 = arith.constant 3.200000e+01 : f32
    %188 = vector.broadcast %cst_77 : f32 to vector<16x1xf32>
    %189 = arith.divf %187, %188 : vector<16x1xf32>
    %190 = vector.broadcast %182 : vector<16x1xf32> to vector<16x32xf32>
    %191 = arith.subf %178, %190 : vector<16x32xf32>
    %cst_78 = arith.constant 9.99999974E-6 : f32
    %192 = vector.broadcast %cst_78 : f32 to vector<16x1xf32>
    %193 = arith.addf %189, %192 : vector<16x1xf32>
    %194 = math.rsqrt %193 : vector<16x1xf32>
    %195 = vector.broadcast %194 : vector<16x1xf32> to vector<16x32xf32>
    %196 = arith.mulf %191, %195 : vector<16x32xf32>
    %197 = arith.mulf %196, %22 : vector<16x32xf32>
    %198 = arith.addf %197, %25 : vector<16x32xf32>
    %c1_i32 = arith.constant 1 : i32
    %cst_79 = arith.constant dense<0.000000e+00> : vector<16x32xf32>
    %199 = tpu.matmul %198, %14, %cst_79 {dimension_numbers = #tpu.dot_dimension_numbers<[1], [0], [0], [1], [0, 0, 1, 1], [], []>} : vector<16x32xf32>, vector<32x32xf32>, vector<16x32xf32> -> vector<16x32xf32>
    %200 = vector.broadcast %16 : vector<1x32xf32> to vector<16x32xf32>
    %201 = arith.addf %199, %200 : vector<16x32xf32>
    %c0_80 = arith.constant 0 : index
    %c0_81 = arith.constant 0 : index
    %202 = vector.load %arg14[%c0_80, %c0_81] : memref<16x32xf32, #tpu.memory_space<vmem>>, vector<16x32xf32>
    %c0_82 = arith.constant 0 : index
    %c0_83 = arith.constant 0 : index
    %203 = vector.load %arg15[%c0_82, %c0_83] : memref<16x32xf32, #tpu.memory_space<vmem>>, vector<16x32xf32>
    %204 = vector.extract_strided_slice %201 {offsets = [0, 0], sizes = [8, 32], strides = [1, 1]} : vector<16x32xf32> to vector<8x32xf32>
    %205 = vector.extract_strided_slice %202 {offsets = [0, 0], sizes = [8, 32], strides = [1, 1]} : vector<16x32xf32> to vector<8x32xf32>
    %206 = vector.extract_strided_slice %203 {offsets = [0, 0], sizes = [8, 32], strides = [1, 1]} : vector<16x32xf32> to vector<8x32xf32>
    %207 = vector.extract_strided_slice %204 {offsets = [0, 0], sizes = [8, 8], strides = [1, 1]} : vector<8x32xf32> to vector<8x8xf32>
    %208 = vector.extract_strided_slice %205 {offsets = [0, 0], sizes = [8, 8], strides = [1, 1]} : vector<8x32xf32> to vector<8x8xf32>
    %209 = vector.extract_strided_slice %206 {offsets = [0, 0], sizes = [8, 8], strides = [1, 1]} : vector<8x32xf32> to vector<8x8xf32>
    %cst_84 = arith.constant dense<0.000000e+00> : vector<8x8xf32>
    %210 = tpu.matmul %207, %208, %cst_84 {dimension_numbers = #tpu.dot_dimension_numbers<[1], [1], [0], [0], [0, 0, 1, 0], [], []>} : vector<8x8xf32>, vector<8x8xf32>, vector<8x8xf32> -> vector<8x8xf32>
    %cst_85 = arith.constant 0.353553385 : f32
    %211 = vector.broadcast %cst_85 : f32 to vector<8x8xf32>
    %212 = arith.mulf %210, %211 : vector<8x8xf32>
    %cst_86 = arith.constant dense<0xFF800000> : vector<8xf32>
    %213 = vector.multi_reduction <maximumf>, %212, %cst_86 [1] : vector<8x8xf32> to vector<8xf32>
    %214 = vector.shape_cast %213 : vector<8xf32> to vector<8x1xf32>
    %215 = vector.broadcast %214 : vector<8x1xf32> to vector<8x8xf32>
    %216 = arith.subf %212, %215 : vector<8x8xf32>
    %217 = math.exp %216 : vector<8x8xf32>
    %cst_87 = arith.constant dense<0.000000e+00> : vector<8xf32>
    %218 = vector.multi_reduction <add>, %217, %cst_87 [1] : vector<8x8xf32> to vector<8xf32>
    %219 = vector.shape_cast %218 : vector<8xf32> to vector<8x1xf32>
    %cst_88 = arith.constant dense<0.000000e+00> : vector<8x8xf32>
    %220 = tpu.matmul %217, %209, %cst_88 {dimension_numbers = #tpu.dot_dimension_numbers<[1], [0], [0], [1], [0, 0, 1, 1], [], []>} : vector<8x8xf32>, vector<8x8xf32>, vector<8x8xf32> -> vector<8x8xf32>
    %221 = tpu.reciprocal %219 : vector<8x1xf32> -> vector<8x1xf32>
    %222 = vector.broadcast %221 : vector<8x1xf32> to vector<8x8xf32>
    %223 = arith.mulf %220, %222 : vector<8x8xf32>
    %224 = vector.extract_strided_slice %204 {offsets = [0, 8], sizes = [8, 8], strides = [1, 1]} : vector<8x32xf32> to vector<8x8xf32>
    %225 = vector.extract_strided_slice %205 {offsets = [0, 8], sizes = [8, 8], strides = [1, 1]} : vector<8x32xf32> to vector<8x8xf32>
    %226 = vector.extract_strided_slice %206 {offsets = [0, 8], sizes = [8, 8], strides = [1, 1]} : vector<8x32xf32> to vector<8x8xf32>
    %cst_89 = arith.constant dense<0.000000e+00> : vector<8x8xf32>
    %227 = tpu.matmul %224, %225, %cst_89 {dimension_numbers = #tpu.dot_dimension_numbers<[1], [1], [0], [0], [0, 0, 1, 0], [], []>} : vector<8x8xf32>, vector<8x8xf32>, vector<8x8xf32> -> vector<8x8xf32>
    %cst_90 = arith.constant 0.353553385 : f32
    %228 = vector.broadcast %cst_90 : f32 to vector<8x8xf32>
    %229 = arith.mulf %227, %228 : vector<8x8xf32>
    %cst_91 = arith.constant dense<0xFF800000> : vector<8xf32>
    %230 = vector.multi_reduction <maximumf>, %229, %cst_91 [1] : vector<8x8xf32> to vector<8xf32>
    %231 = vector.shape_cast %230 : vector<8xf32> to vector<8x1xf32>
    %232 = vector.broadcast %231 : vector<8x1xf32> to vector<8x8xf32>
    %233 = arith.subf %229, %232 : vector<8x8xf32>
    %234 = math.exp %233 : vector<8x8xf32>
    %cst_92 = arith.constant dense<0.000000e+00> : vector<8xf32>
    %235 = vector.multi_reduction <add>, %234, %cst_92 [1] : vector<8x8xf32> to vector<8xf32>
    %236 = vector.shape_cast %235 : vector<8xf32> to vector<8x1xf32>
    %cst_93 = arith.constant dense<0.000000e+00> : vector<8x8xf32>
    %237 = tpu.matmul %234, %226, %cst_93 {dimension_numbers = #tpu.dot_dimension_numbers<[1], [0], [0], [1], [0, 0, 1, 1], [], []>} : vector<8x8xf32>, vector<8x8xf32>, vector<8x8xf32> -> vector<8x8xf32>
    %238 = tpu.reciprocal %236 : vector<8x1xf32> -> vector<8x1xf32>
    %239 = vector.broadcast %238 : vector<8x1xf32> to vector<8x8xf32>
    %240 = arith.mulf %237, %239 : vector<8x8xf32>
    %241 = vector.extract_strided_slice %204 {offsets = [0, 16], sizes = [8, 8], strides = [1, 1]} : vector<8x32xf32> to vector<8x8xf32>
    %242 = vector.extract_strided_slice %205 {offsets = [0, 16], sizes = [8, 8], strides = [1, 1]} : vector<8x32xf32> to vector<8x8xf32>
    %243 = vector.extract_strided_slice %206 {offsets = [0, 16], sizes = [8, 8], strides = [1, 1]} : vector<8x32xf32> to vector<8x8xf32>
    %cst_94 = arith.constant dense<0.000000e+00> : vector<8x8xf32>
    %244 = tpu.matmul %241, %242, %cst_94 {dimension_numbers = #tpu.dot_dimension_numbers<[1], [1], [0], [0], [0, 0, 1, 0], [], []>} : vector<8x8xf32>, vector<8x8xf32>, vector<8x8xf32> -> vector<8x8xf32>
    %cst_95 = arith.constant 0.353553385 : f32
    %245 = vector.broadcast %cst_95 : f32 to vector<8x8xf32>
    %246 = arith.mulf %244, %245 : vector<8x8xf32>
    %cst_96 = arith.constant dense<0xFF800000> : vector<8xf32>
    %247 = vector.multi_reduction <maximumf>, %246, %cst_96 [1] : vector<8x8xf32> to vector<8xf32>
    %248 = vector.shape_cast %247 : vector<8xf32> to vector<8x1xf32>
    %249 = vector.broadcast %248 : vector<8x1xf32> to vector<8x8xf32>
    %250 = arith.subf %246, %249 : vector<8x8xf32>
    %251 = math.exp %250 : vector<8x8xf32>
    %cst_97 = arith.constant dense<0.000000e+00> : vector<8xf32>
    %252 = vector.multi_reduction <add>, %251, %cst_97 [1] : vector<8x8xf32> to vector<8xf32>
    %253 = vector.shape_cast %252 : vector<8xf32> to vector<8x1xf32>
    %cst_98 = arith.constant dense<0.000000e+00> : vector<8x8xf32>
    %254 = tpu.matmul %251, %243, %cst_98 {dimension_numbers = #tpu.dot_dimension_numbers<[1], [0], [0], [1], [0, 0, 1, 1], [], []>} : vector<8x8xf32>, vector<8x8xf32>, vector<8x8xf32> -> vector<8x8xf32>
    %255 = tpu.reciprocal %253 : vector<8x1xf32> -> vector<8x1xf32>
    %256 = vector.broadcast %255 : vector<8x1xf32> to vector<8x8xf32>
    %257 = arith.mulf %254, %256 : vector<8x8xf32>
    %258 = vector.extract_strided_slice %204 {offsets = [0, 24], sizes = [8, 8], strides = [1, 1]} : vector<8x32xf32> to vector<8x8xf32>
    %259 = vector.extract_strided_slice %205 {offsets = [0, 24], sizes = [8, 8], strides = [1, 1]} : vector<8x32xf32> to vector<8x8xf32>
    %260 = vector.extract_strided_slice %206 {offsets = [0, 24], sizes = [8, 8], strides = [1, 1]} : vector<8x32xf32> to vector<8x8xf32>
    %cst_99 = arith.constant dense<0.000000e+00> : vector<8x8xf32>
    %261 = tpu.matmul %258, %259, %cst_99 {dimension_numbers = #tpu.dot_dimension_numbers<[1], [1], [0], [0], [0, 0, 1, 0], [], []>} : vector<8x8xf32>, vector<8x8xf32>, vector<8x8xf32> -> vector<8x8xf32>
    %cst_100 = arith.constant 0.353553385 : f32
    %262 = vector.broadcast %cst_100 : f32 to vector<8x8xf32>
    %263 = arith.mulf %261, %262 : vector<8x8xf32>
    %cst_101 = arith.constant dense<0xFF800000> : vector<8xf32>
    %264 = vector.multi_reduction <maximumf>, %263, %cst_101 [1] : vector<8x8xf32> to vector<8xf32>
    %265 = vector.shape_cast %264 : vector<8xf32> to vector<8x1xf32>
    %266 = vector.broadcast %265 : vector<8x1xf32> to vector<8x8xf32>
    %267 = arith.subf %263, %266 : vector<8x8xf32>
    %268 = math.exp %267 : vector<8x8xf32>
    %cst_102 = arith.constant dense<0.000000e+00> : vector<8xf32>
    %269 = vector.multi_reduction <add>, %268, %cst_102 [1] : vector<8x8xf32> to vector<8xf32>
    %270 = vector.shape_cast %269 : vector<8xf32> to vector<8x1xf32>
    %cst_103 = arith.constant dense<0.000000e+00> : vector<8x8xf32>
    %271 = tpu.matmul %268, %260, %cst_103 {dimension_numbers = #tpu.dot_dimension_numbers<[1], [0], [0], [1], [0, 0, 1, 1], [], []>} : vector<8x8xf32>, vector<8x8xf32>, vector<8x8xf32> -> vector<8x8xf32>
    %272 = tpu.reciprocal %270 : vector<8x1xf32> -> vector<8x1xf32>
    %273 = vector.broadcast %272 : vector<8x1xf32> to vector<8x8xf32>
    %274 = arith.mulf %271, %273 : vector<8x8xf32>
    %275 = tpu.concatenate %223, %240, %257, %274 in 1 : vector<8x8xf32>, vector<8x8xf32>, vector<8x8xf32>, vector<8x8xf32> -> vector<8x32xf32>
    %276 = vector.extract_strided_slice %201 {offsets = [8, 0], sizes = [8, 32], strides = [1, 1]} : vector<16x32xf32> to vector<8x32xf32>
    %277 = vector.extract_strided_slice %202 {offsets = [8, 0], sizes = [8, 32], strides = [1, 1]} : vector<16x32xf32> to vector<8x32xf32>
    %278 = vector.extract_strided_slice %203 {offsets = [8, 0], sizes = [8, 32], strides = [1, 1]} : vector<16x32xf32> to vector<8x32xf32>
    %279 = vector.extract_strided_slice %276 {offsets = [0, 0], sizes = [8, 8], strides = [1, 1]} : vector<8x32xf32> to vector<8x8xf32>
    %280 = vector.extract_strided_slice %277 {offsets = [0, 0], sizes = [8, 8], strides = [1, 1]} : vector<8x32xf32> to vector<8x8xf32>
    %281 = vector.extract_strided_slice %278 {offsets = [0, 0], sizes = [8, 8], strides = [1, 1]} : vector<8x32xf32> to vector<8x8xf32>
    %cst_104 = arith.constant dense<0.000000e+00> : vector<8x8xf32>
    %282 = tpu.matmul %279, %280, %cst_104 {dimension_numbers = #tpu.dot_dimension_numbers<[1], [1], [0], [0], [0, 0, 1, 0], [], []>} : vector<8x8xf32>, vector<8x8xf32>, vector<8x8xf32> -> vector<8x8xf32>
    %cst_105 = arith.constant 0.353553385 : f32
    %283 = vector.broadcast %cst_105 : f32 to vector<8x8xf32>
    %284 = arith.mulf %282, %283 : vector<8x8xf32>
    %cst_106 = arith.constant dense<0xFF800000> : vector<8xf32>
    %285 = vector.multi_reduction <maximumf>, %284, %cst_106 [1] : vector<8x8xf32> to vector<8xf32>
    %286 = vector.shape_cast %285 : vector<8xf32> to vector<8x1xf32>
    %287 = vector.broadcast %286 : vector<8x1xf32> to vector<8x8xf32>
    %288 = arith.subf %284, %287 : vector<8x8xf32>
    %289 = math.exp %288 : vector<8x8xf32>
    %cst_107 = arith.constant dense<0.000000e+00> : vector<8xf32>
    %290 = vector.multi_reduction <add>, %289, %cst_107 [1] : vector<8x8xf32> to vector<8xf32>
    %291 = vector.shape_cast %290 : vector<8xf32> to vector<8x1xf32>
    %cst_108 = arith.constant dense<0.000000e+00> : vector<8x8xf32>
    %292 = tpu.matmul %289, %281, %cst_108 {dimension_numbers = #tpu.dot_dimension_numbers<[1], [0], [0], [1], [0, 0, 1, 1], [], []>} : vector<8x8xf32>, vector<8x8xf32>, vector<8x8xf32> -> vector<8x8xf32>
    %293 = tpu.reciprocal %291 : vector<8x1xf32> -> vector<8x1xf32>
    %294 = vector.broadcast %293 : vector<8x1xf32> to vector<8x8xf32>
    %295 = arith.mulf %292, %294 : vector<8x8xf32>
    %296 = vector.extract_strided_slice %276 {offsets = [0, 8], sizes = [8, 8], strides = [1, 1]} : vector<8x32xf32> to vector<8x8xf32>
    %297 = vector.extract_strided_slice %277 {offsets = [0, 8], sizes = [8, 8], strides = [1, 1]} : vector<8x32xf32> to vector<8x8xf32>
    %298 = vector.extract_strided_slice %278 {offsets = [0, 8], sizes = [8, 8], strides = [1, 1]} : vector<8x32xf32> to vector<8x8xf32>
    %cst_109 = arith.constant dense<0.000000e+00> : vector<8x8xf32>
    %299 = tpu.matmul %296, %297, %cst_109 {dimension_numbers = #tpu.dot_dimension_numbers<[1], [1], [0], [0], [0, 0, 1, 0], [], []>} : vector<8x8xf32>, vector<8x8xf32>, vector<8x8xf32> -> vector<8x8xf32>
    %cst_110 = arith.constant 0.353553385 : f32
    %300 = vector.broadcast %cst_110 : f32 to vector<8x8xf32>
    %301 = arith.mulf %299, %300 : vector<8x8xf32>
    %cst_111 = arith.constant dense<0xFF800000> : vector<8xf32>
    %302 = vector.multi_reduction <maximumf>, %301, %cst_111 [1] : vector<8x8xf32> to vector<8xf32>
    %303 = vector.shape_cast %302 : vector<8xf32> to vector<8x1xf32>
    %304 = vector.broadcast %303 : vector<8x1xf32> to vector<8x8xf32>
    %305 = arith.subf %301, %304 : vector<8x8xf32>
    %306 = math.exp %305 : vector<8x8xf32>
    %cst_112 = arith.constant dense<0.000000e+00> : vector<8xf32>
    %307 = vector.multi_reduction <add>, %306, %cst_112 [1] : vector<8x8xf32> to vector<8xf32>
    %308 = vector.shape_cast %307 : vector<8xf32> to vector<8x1xf32>
    %cst_113 = arith.constant dense<0.000000e+00> : vector<8x8xf32>
    %309 = tpu.matmul %306, %298, %cst_113 {dimension_numbers = #tpu.dot_dimension_numbers<[1], [0], [0], [1], [0, 0, 1, 1], [], []>} : vector<8x8xf32>, vector<8x8xf32>, vector<8x8xf32> -> vector<8x8xf32>
    %310 = tpu.reciprocal %308 : vector<8x1xf32> -> vector<8x1xf32>
    %311 = vector.broadcast %310 : vector<8x1xf32> to vector<8x8xf32>
    %312 = arith.mulf %309, %311 : vector<8x8xf32>
    %313 = vector.extract_strided_slice %276 {offsets = [0, 16], sizes = [8, 8], strides = [1, 1]} : vector<8x32xf32> to vector<8x8xf32>
    %314 = vector.extract_strided_slice %277 {offsets = [0, 16], sizes = [8, 8], strides = [1, 1]} : vector<8x32xf32> to vector<8x8xf32>
    %315 = vector.extract_strided_slice %278 {offsets = [0, 16], sizes = [8, 8], strides = [1, 1]} : vector<8x32xf32> to vector<8x8xf32>
    %cst_114 = arith.constant dense<0.000000e+00> : vector<8x8xf32>
    %316 = tpu.matmul %313, %314, %cst_114 {dimension_numbers = #tpu.dot_dimension_numbers<[1], [1], [0], [0], [0, 0, 1, 0], [], []>} : vector<8x8xf32>, vector<8x8xf32>, vector<8x8xf32> -> vector<8x8xf32>
    %cst_115 = arith.constant 0.353553385 : f32
    %317 = vector.broadcast %cst_115 : f32 to vector<8x8xf32>
    %318 = arith.mulf %316, %317 : vector<8x8xf32>
    %cst_116 = arith.constant dense<0xFF800000> : vector<8xf32>
    %319 = vector.multi_reduction <maximumf>, %318, %cst_116 [1] : vector<8x8xf32> to vector<8xf32>
    %320 = vector.shape_cast %319 : vector<8xf32> to vector<8x1xf32>
    %321 = vector.broadcast %320 : vector<8x1xf32> to vector<8x8xf32>
    %322 = arith.subf %318, %321 : vector<8x8xf32>
    %323 = math.exp %322 : vector<8x8xf32>
    %cst_117 = arith.constant dense<0.000000e+00> : vector<8xf32>
    %324 = vector.multi_reduction <add>, %323, %cst_117 [1] : vector<8x8xf32> to vector<8xf32>
    %325 = vector.shape_cast %324 : vector<8xf32> to vector<8x1xf32>
    %cst_118 = arith.constant dense<0.000000e+00> : vector<8x8xf32>
    %326 = tpu.matmul %323, %315, %cst_118 {dimension_numbers = #tpu.dot_dimension_numbers<[1], [0], [0], [1], [0, 0, 1, 1], [], []>} : vector<8x8xf32>, vector<8x8xf32>, vector<8x8xf32> -> vector<8x8xf32>
    %327 = tpu.reciprocal %325 : vector<8x1xf32> -> vector<8x1xf32>
    %328 = vector.broadcast %327 : vector<8x1xf32> to vector<8x8xf32>
    %329 = arith.mulf %326, %328 : vector<8x8xf32>
    %330 = vector.extract_strided_slice %276 {offsets = [0, 24], sizes = [8, 8], strides = [1, 1]} : vector<8x32xf32> to vector<8x8xf32>
    %331 = vector.extract_strided_slice %277 {offsets = [0, 24], sizes = [8, 8], strides = [1, 1]} : vector<8x32xf32> to vector<8x8xf32>
    %332 = vector.extract_strided_slice %278 {offsets = [0, 24], sizes = [8, 8], strides = [1, 1]} : vector<8x32xf32> to vector<8x8xf32>
    %cst_119 = arith.constant dense<0.000000e+00> : vector<8x8xf32>
    %333 = tpu.matmul %330, %331, %cst_119 {dimension_numbers = #tpu.dot_dimension_numbers<[1], [1], [0], [0], [0, 0, 1, 0], [], []>} : vector<8x8xf32>, vector<8x8xf32>, vector<8x8xf32> -> vector<8x8xf32>
    %cst_120 = arith.constant 0.353553385 : f32
    %334 = vector.broadcast %cst_120 : f32 to vector<8x8xf32>
    %335 = arith.mulf %333, %334 : vector<8x8xf32>
    %cst_121 = arith.constant dense<0xFF800000> : vector<8xf32>
    %336 = vector.multi_reduction <maximumf>, %335, %cst_121 [1] : vector<8x8xf32> to vector<8xf32>
    %337 = vector.shape_cast %336 : vector<8xf32> to vector<8x1xf32>
    %338 = vector.broadcast %337 : vector<8x1xf32> to vector<8x8xf32>
    %339 = arith.subf %335, %338 : vector<8x8xf32>
    %340 = math.exp %339 : vector<8x8xf32>
    %cst_122 = arith.constant dense<0.000000e+00> : vector<8xf32>
    %341 = vector.multi_reduction <add>, %340, %cst_122 [1] : vector<8x8xf32> to vector<8xf32>
    %342 = vector.shape_cast %341 : vector<8xf32> to vector<8x1xf32>
    %cst_123 = arith.constant dense<0.000000e+00> : vector<8x8xf32>
    %343 = tpu.matmul %340, %332, %cst_123 {dimension_numbers = #tpu.dot_dimension_numbers<[1], [0], [0], [1], [0, 0, 1, 1], [], []>} : vector<8x8xf32>, vector<8x8xf32>, vector<8x8xf32> -> vector<8x8xf32>
    %344 = tpu.reciprocal %342 : vector<8x1xf32> -> vector<8x1xf32>
    %345 = vector.broadcast %344 : vector<8x1xf32> to vector<8x8xf32>
    %346 = arith.mulf %343, %345 : vector<8x8xf32>
    %347 = tpu.concatenate %295, %312, %329, %346 in 1 : vector<8x8xf32>, vector<8x8xf32>, vector<8x8xf32>, vector<8x8xf32> -> vector<8x32xf32>
    %348 = tpu.concatenate %275, %347 in 0 : vector<8x32xf32>, vector<8x32xf32> -> vector<16x32xf32>
    %cst_124 = arith.constant dense<0.000000e+00> : vector<16x32xf32>
    %349 = tpu.matmul %348, %15, %cst_124 {dimension_numbers = #tpu.dot_dimension_numbers<[1], [0], [0], [1], [0, 0, 1, 1], [], []>} : vector<16x32xf32>, vector<32x32xf32>, vector<16x32xf32> -> vector<16x32xf32>
    %350 = arith.addf %349, %19 : vector<16x32xf32>
    %351 = arith.addf %198, %350 : vector<16x32xf32>
    %cst_125 = arith.constant dense<0.000000e+00> : vector<16xf32>
    %352 = vector.multi_reduction <add>, %351, %cst_125 [1] : vector<16x32xf32> to vector<16xf32>
    %353 = vector.shape_cast %352 : vector<16xf32> to vector<16x1xf32>
    %cst_126 = arith.constant 3.200000e+01 : f32
    %354 = vector.broadcast %cst_126 : f32 to vector<16x1xf32>
    %355 = arith.divf %353, %354 : vector<16x1xf32>
    %356 = vector.broadcast %355 : vector<16x1xf32> to vector<16x32xf32>
    %357 = arith.subf %351, %356 : vector<16x32xf32>
    %358 = arith.mulf %357, %357 : vector<16x32xf32>
    %cst_127 = arith.constant dense<0.000000e+00> : vector<16xf32>
    %359 = vector.multi_reduction <add>, %358, %cst_127 [1] : vector<16x32xf32> to vector<16xf32>
    %360 = vector.shape_cast %359 : vector<16xf32> to vector<16x1xf32>
    %cst_128 = arith.constant 3.200000e+01 : f32
    %361 = vector.broadcast %cst_128 : f32 to vector<16x1xf32>
    %362 = arith.divf %360, %361 : vector<16x1xf32>
    %363 = vector.broadcast %355 : vector<16x1xf32> to vector<16x32xf32>
    %364 = arith.subf %351, %363 : vector<16x32xf32>
    %cst_129 = arith.constant 9.99999974E-6 : f32
    %365 = vector.broadcast %cst_129 : f32 to vector<16x1xf32>
    %366 = arith.addf %362, %365 : vector<16x1xf32>
    %367 = math.rsqrt %366 : vector<16x1xf32>
    %368 = vector.broadcast %367 : vector<16x1xf32> to vector<16x32xf32>
    %369 = arith.mulf %364, %368 : vector<16x32xf32>
    %370 = arith.mulf %369, %22 : vector<16x32xf32>
    %371 = arith.addf %370, %25 : vector<16x32xf32>
    %c2_i32 = arith.constant 2 : i32
    %cst_130 = arith.constant dense<0.000000e+00> : vector<16x32xf32>
    %372 = tpu.matmul %371, %14, %cst_130 {dimension_numbers = #tpu.dot_dimension_numbers<[1], [0], [0], [1], [0, 0, 1, 1], [], []>} : vector<16x32xf32>, vector<32x32xf32>, vector<16x32xf32> -> vector<16x32xf32>
    %373 = vector.broadcast %16 : vector<1x32xf32> to vector<16x32xf32>
    %374 = arith.addf %372, %373 : vector<16x32xf32>
    %c0_131 = arith.constant 0 : index
    %c0_132 = arith.constant 0 : index
    %375 = vector.load %arg14[%c0_131, %c0_132] : memref<16x32xf32, #tpu.memory_space<vmem>>, vector<16x32xf32>
    %c0_133 = arith.constant 0 : index
    %c0_134 = arith.constant 0 : index
    %376 = vector.load %arg15[%c0_133, %c0_134] : memref<16x32xf32, #tpu.memory_space<vmem>>, vector<16x32xf32>
    %377 = vector.extract_strided_slice %374 {offsets = [0, 0], sizes = [8, 32], strides = [1, 1]} : vector<16x32xf32> to vector<8x32xf32>
    %378 = vector.extract_strided_slice %375 {offsets = [0, 0], sizes = [8, 32], strides = [1, 1]} : vector<16x32xf32> to vector<8x32xf32>
    %379 = vector.extract_strided_slice %376 {offsets = [0, 0], sizes = [8, 32], strides = [1, 1]} : vector<16x32xf32> to vector<8x32xf32>
    %380 = vector.extract_strided_slice %377 {offsets = [0, 0], sizes = [8, 8], strides = [1, 1]} : vector<8x32xf32> to vector<8x8xf32>
    %381 = vector.extract_strided_slice %378 {offsets = [0, 0], sizes = [8, 8], strides = [1, 1]} : vector<8x32xf32> to vector<8x8xf32>
    %382 = vector.extract_strided_slice %379 {offsets = [0, 0], sizes = [8, 8], strides = [1, 1]} : vector<8x32xf32> to vector<8x8xf32>
    %cst_135 = arith.constant dense<0.000000e+00> : vector<8x8xf32>
    %383 = tpu.matmul %380, %381, %cst_135 {dimension_numbers = #tpu.dot_dimension_numbers<[1], [1], [0], [0], [0, 0, 1, 0], [], []>} : vector<8x8xf32>, vector<8x8xf32>, vector<8x8xf32> -> vector<8x8xf32>
    %cst_136 = arith.constant 0.353553385 : f32
    %384 = vector.broadcast %cst_136 : f32 to vector<8x8xf32>
    %385 = arith.mulf %383, %384 : vector<8x8xf32>
    %cst_137 = arith.constant dense<0xFF800000> : vector<8xf32>
    %386 = vector.multi_reduction <maximumf>, %385, %cst_137 [1] : vector<8x8xf32> to vector<8xf32>
    %387 = vector.shape_cast %386 : vector<8xf32> to vector<8x1xf32>
    %388 = vector.broadcast %387 : vector<8x1xf32> to vector<8x8xf32>
    %389 = arith.subf %385, %388 : vector<8x8xf32>
    %390 = math.exp %389 : vector<8x8xf32>
    %cst_138 = arith.constant dense<0.000000e+00> : vector<8xf32>
    %391 = vector.multi_reduction <add>, %390, %cst_138 [1] : vector<8x8xf32> to vector<8xf32>
    %392 = vector.shape_cast %391 : vector<8xf32> to vector<8x1xf32>
    %cst_139 = arith.constant dense<0.000000e+00> : vector<8x8xf32>
    %393 = tpu.matmul %390, %382, %cst_139 {dimension_numbers = #tpu.dot_dimension_numbers<[1], [0], [0], [1], [0, 0, 1, 1], [], []>} : vector<8x8xf32>, vector<8x8xf32>, vector<8x8xf32> -> vector<8x8xf32>
    %394 = tpu.reciprocal %392 : vector<8x1xf32> -> vector<8x1xf32>
    %395 = vector.broadcast %394 : vector<8x1xf32> to vector<8x8xf32>
    %396 = arith.mulf %393, %395 : vector<8x8xf32>
    %397 = vector.extract_strided_slice %377 {offsets = [0, 8], sizes = [8, 8], strides = [1, 1]} : vector<8x32xf32> to vector<8x8xf32>
    %398 = vector.extract_strided_slice %378 {offsets = [0, 8], sizes = [8, 8], strides = [1, 1]} : vector<8x32xf32> to vector<8x8xf32>
    %399 = vector.extract_strided_slice %379 {offsets = [0, 8], sizes = [8, 8], strides = [1, 1]} : vector<8x32xf32> to vector<8x8xf32>
    %cst_140 = arith.constant dense<0.000000e+00> : vector<8x8xf32>
    %400 = tpu.matmul %397, %398, %cst_140 {dimension_numbers = #tpu.dot_dimension_numbers<[1], [1], [0], [0], [0, 0, 1, 0], [], []>} : vector<8x8xf32>, vector<8x8xf32>, vector<8x8xf32> -> vector<8x8xf32>
    %cst_141 = arith.constant 0.353553385 : f32
    %401 = vector.broadcast %cst_141 : f32 to vector<8x8xf32>
    %402 = arith.mulf %400, %401 : vector<8x8xf32>
    %cst_142 = arith.constant dense<0xFF800000> : vector<8xf32>
    %403 = vector.multi_reduction <maximumf>, %402, %cst_142 [1] : vector<8x8xf32> to vector<8xf32>
    %404 = vector.shape_cast %403 : vector<8xf32> to vector<8x1xf32>
    %405 = vector.broadcast %404 : vector<8x1xf32> to vector<8x8xf32>
    %406 = arith.subf %402, %405 : vector<8x8xf32>
    %407 = math.exp %406 : vector<8x8xf32>
    %cst_143 = arith.constant dense<0.000000e+00> : vector<8xf32>
    %408 = vector.multi_reduction <add>, %407, %cst_143 [1] : vector<8x8xf32> to vector<8xf32>
    %409 = vector.shape_cast %408 : vector<8xf32> to vector<8x1xf32>
    %cst_144 = arith.constant dense<0.000000e+00> : vector<8x8xf32>
    %410 = tpu.matmul %407, %399, %cst_144 {dimension_numbers = #tpu.dot_dimension_numbers<[1], [0], [0], [1], [0, 0, 1, 1], [], []>} : vector<8x8xf32>, vector<8x8xf32>, vector<8x8xf32> -> vector<8x8xf32>
    %411 = tpu.reciprocal %409 : vector<8x1xf32> -> vector<8x1xf32>
    %412 = vector.broadcast %411 : vector<8x1xf32> to vector<8x8xf32>
    %413 = arith.mulf %410, %412 : vector<8x8xf32>
    %414 = vector.extract_strided_slice %377 {offsets = [0, 16], sizes = [8, 8], strides = [1, 1]} : vector<8x32xf32> to vector<8x8xf32>
    %415 = vector.extract_strided_slice %378 {offsets = [0, 16], sizes = [8, 8], strides = [1, 1]} : vector<8x32xf32> to vector<8x8xf32>
    %416 = vector.extract_strided_slice %379 {offsets = [0, 16], sizes = [8, 8], strides = [1, 1]} : vector<8x32xf32> to vector<8x8xf32>
    %cst_145 = arith.constant dense<0.000000e+00> : vector<8x8xf32>
    %417 = tpu.matmul %414, %415, %cst_145 {dimension_numbers = #tpu.dot_dimension_numbers<[1], [1], [0], [0], [0, 0, 1, 0], [], []>} : vector<8x8xf32>, vector<8x8xf32>, vector<8x8xf32> -> vector<8x8xf32>
    %cst_146 = arith.constant 0.353553385 : f32
    %418 = vector.broadcast %cst_146 : f32 to vector<8x8xf32>
    %419 = arith.mulf %417, %418 : vector<8x8xf32>
    %cst_147 = arith.constant dense<0xFF800000> : vector<8xf32>
    %420 = vector.multi_reduction <maximumf>, %419, %cst_147 [1] : vector<8x8xf32> to vector<8xf32>
    %421 = vector.shape_cast %420 : vector<8xf32> to vector<8x1xf32>
    %422 = vector.broadcast %421 : vector<8x1xf32> to vector<8x8xf32>
    %423 = arith.subf %419, %422 : vector<8x8xf32>
    %424 = math.exp %423 : vector<8x8xf32>
    %cst_148 = arith.constant dense<0.000000e+00> : vector<8xf32>
    %425 = vector.multi_reduction <add>, %424, %cst_148 [1] : vector<8x8xf32> to vector<8xf32>
    %426 = vector.shape_cast %425 : vector<8xf32> to vector<8x1xf32>
    %cst_149 = arith.constant dense<0.000000e+00> : vector<8x8xf32>
    %427 = tpu.matmul %424, %416, %cst_149 {dimension_numbers = #tpu.dot_dimension_numbers<[1], [0], [0], [1], [0, 0, 1, 1], [], []>} : vector<8x8xf32>, vector<8x8xf32>, vector<8x8xf32> -> vector<8x8xf32>
    %428 = tpu.reciprocal %426 : vector<8x1xf32> -> vector<8x1xf32>
    %429 = vector.broadcast %428 : vector<8x1xf32> to vector<8x8xf32>
    %430 = arith.mulf %427, %429 : vector<8x8xf32>
    %431 = vector.extract_strided_slice %377 {offsets = [0, 24], sizes = [8, 8], strides = [1, 1]} : vector<8x32xf32> to vector<8x8xf32>
    %432 = vector.extract_strided_slice %378 {offsets = [0, 24], sizes = [8, 8], strides = [1, 1]} : vector<8x32xf32> to vector<8x8xf32>
    %433 = vector.extract_strided_slice %379 {offsets = [0, 24], sizes = [8, 8], strides = [1, 1]} : vector<8x32xf32> to vector<8x8xf32>
    %cst_150 = arith.constant dense<0.000000e+00> : vector<8x8xf32>
    %434 = tpu.matmul %431, %432, %cst_150 {dimension_numbers = #tpu.dot_dimension_numbers<[1], [1], [0], [0], [0, 0, 1, 0], [], []>} : vector<8x8xf32>, vector<8x8xf32>, vector<8x8xf32> -> vector<8x8xf32>
    %cst_151 = arith.constant 0.353553385 : f32
    %435 = vector.broadcast %cst_151 : f32 to vector<8x8xf32>
    %436 = arith.mulf %434, %435 : vector<8x8xf32>
    %cst_152 = arith.constant dense<0xFF800000> : vector<8xf32>
    %437 = vector.multi_reduction <maximumf>, %436, %cst_152 [1] : vector<8x8xf32> to vector<8xf32>
    %438 = vector.shape_cast %437 : vector<8xf32> to vector<8x1xf32>
    %439 = vector.broadcast %438 : vector<8x1xf32> to vector<8x8xf32>
    %440 = arith.subf %436, %439 : vector<8x8xf32>
    %441 = math.exp %440 : vector<8x8xf32>
    %cst_153 = arith.constant dense<0.000000e+00> : vector<8xf32>
    %442 = vector.multi_reduction <add>, %441, %cst_153 [1] : vector<8x8xf32> to vector<8xf32>
    %443 = vector.shape_cast %442 : vector<8xf32> to vector<8x1xf32>
    %cst_154 = arith.constant dense<0.000000e+00> : vector<8x8xf32>
    %444 = tpu.matmul %441, %433, %cst_154 {dimension_numbers = #tpu.dot_dimension_numbers<[1], [0], [0], [1], [0, 0, 1, 1], [], []>} : vector<8x8xf32>, vector<8x8xf32>, vector<8x8xf32> -> vector<8x8xf32>
    %445 = tpu.reciprocal %443 : vector<8x1xf32> -> vector<8x1xf32>
    %446 = vector.broadcast %445 : vector<8x1xf32> to vector<8x8xf32>
    %447 = arith.mulf %444, %446 : vector<8x8xf32>
    %448 = tpu.concatenate %396, %413, %430, %447 in 1 : vector<8x8xf32>, vector<8x8xf32>, vector<8x8xf32>, vector<8x8xf32> -> vector<8x32xf32>
    %449 = vector.extract_strided_slice %374 {offsets = [8, 0], sizes = [8, 32], strides = [1, 1]} : vector<16x32xf32> to vector<8x32xf32>
    %450 = vector.extract_strided_slice %375 {offsets = [8, 0], sizes = [8, 32], strides = [1, 1]} : vector<16x32xf32> to vector<8x32xf32>
    %451 = vector.extract_strided_slice %376 {offsets = [8, 0], sizes = [8, 32], strides = [1, 1]} : vector<16x32xf32> to vector<8x32xf32>
    %452 = vector.extract_strided_slice %449 {offsets = [0, 0], sizes = [8, 8], strides = [1, 1]} : vector<8x32xf32> to vector<8x8xf32>
    %453 = vector.extract_strided_slice %450 {offsets = [0, 0], sizes = [8, 8], strides = [1, 1]} : vector<8x32xf32> to vector<8x8xf32>
    %454 = vector.extract_strided_slice %451 {offsets = [0, 0], sizes = [8, 8], strides = [1, 1]} : vector<8x32xf32> to vector<8x8xf32>
    %cst_155 = arith.constant dense<0.000000e+00> : vector<8x8xf32>
    %455 = tpu.matmul %452, %453, %cst_155 {dimension_numbers = #tpu.dot_dimension_numbers<[1], [1], [0], [0], [0, 0, 1, 0], [], []>} : vector<8x8xf32>, vector<8x8xf32>, vector<8x8xf32> -> vector<8x8xf32>
    %cst_156 = arith.constant 0.353553385 : f32
    %456 = vector.broadcast %cst_156 : f32 to vector<8x8xf32>
    %457 = arith.mulf %455, %456 : vector<8x8xf32>
    %cst_157 = arith.constant dense<0xFF800000> : vector<8xf32>
    %458 = vector.multi_reduction <maximumf>, %457, %cst_157 [1] : vector<8x8xf32> to vector<8xf32>
    %459 = vector.shape_cast %458 : vector<8xf32> to vector<8x1xf32>
    %460 = vector.broadcast %459 : vector<8x1xf32> to vector<8x8xf32>
    %461 = arith.subf %457, %460 : vector<8x8xf32>
    %462 = math.exp %461 : vector<8x8xf32>
    %cst_158 = arith.constant dense<0.000000e+00> : vector<8xf32>
    %463 = vector.multi_reduction <add>, %462, %cst_158 [1] : vector<8x8xf32> to vector<8xf32>
    %464 = vector.shape_cast %463 : vector<8xf32> to vector<8x1xf32>
    %cst_159 = arith.constant dense<0.000000e+00> : vector<8x8xf32>
    %465 = tpu.matmul %462, %454, %cst_159 {dimension_numbers = #tpu.dot_dimension_numbers<[1], [0], [0], [1], [0, 0, 1, 1], [], []>} : vector<8x8xf32>, vector<8x8xf32>, vector<8x8xf32> -> vector<8x8xf32>
    %466 = tpu.reciprocal %464 : vector<8x1xf32> -> vector<8x1xf32>
    %467 = vector.broadcast %466 : vector<8x1xf32> to vector<8x8xf32>
    %468 = arith.mulf %465, %467 : vector<8x8xf32>
    %469 = vector.extract_strided_slice %449 {offsets = [0, 8], sizes = [8, 8], strides = [1, 1]} : vector<8x32xf32> to vector<8x8xf32>
    %470 = vector.extract_strided_slice %450 {offsets = [0, 8], sizes = [8, 8], strides = [1, 1]} : vector<8x32xf32> to vector<8x8xf32>
    %471 = vector.extract_strided_slice %451 {offsets = [0, 8], sizes = [8, 8], strides = [1, 1]} : vector<8x32xf32> to vector<8x8xf32>
    %cst_160 = arith.constant dense<0.000000e+00> : vector<8x8xf32>
    %472 = tpu.matmul %469, %470, %cst_160 {dimension_numbers = #tpu.dot_dimension_numbers<[1], [1], [0], [0], [0, 0, 1, 0], [], []>} : vector<8x8xf32>, vector<8x8xf32>, vector<8x8xf32> -> vector<8x8xf32>
    %cst_161 = arith.constant 0.353553385 : f32
    %473 = vector.broadcast %cst_161 : f32 to vector<8x8xf32>
    %474 = arith.mulf %472, %473 : vector<8x8xf32>
    %cst_162 = arith.constant dense<0xFF800000> : vector<8xf32>
    %475 = vector.multi_reduction <maximumf>, %474, %cst_162 [1] : vector<8x8xf32> to vector<8xf32>
    %476 = vector.shape_cast %475 : vector<8xf32> to vector<8x1xf32>
    %477 = vector.broadcast %476 : vector<8x1xf32> to vector<8x8xf32>
    %478 = arith.subf %474, %477 : vector<8x8xf32>
    %479 = math.exp %478 : vector<8x8xf32>
    %cst_163 = arith.constant dense<0.000000e+00> : vector<8xf32>
    %480 = vector.multi_reduction <add>, %479, %cst_163 [1] : vector<8x8xf32> to vector<8xf32>
    %481 = vector.shape_cast %480 : vector<8xf32> to vector<8x1xf32>
    %cst_164 = arith.constant dense<0.000000e+00> : vector<8x8xf32>
    %482 = tpu.matmul %479, %471, %cst_164 {dimension_numbers = #tpu.dot_dimension_numbers<[1], [0], [0], [1], [0, 0, 1, 1], [], []>} : vector<8x8xf32>, vector<8x8xf32>, vector<8x8xf32> -> vector<8x8xf32>
    %483 = tpu.reciprocal %481 : vector<8x1xf32> -> vector<8x1xf32>
    %484 = vector.broadcast %483 : vector<8x1xf32> to vector<8x8xf32>
    %485 = arith.mulf %482, %484 : vector<8x8xf32>
    %486 = vector.extract_strided_slice %449 {offsets = [0, 16], sizes = [8, 8], strides = [1, 1]} : vector<8x32xf32> to vector<8x8xf32>
    %487 = vector.extract_strided_slice %450 {offsets = [0, 16], sizes = [8, 8], strides = [1, 1]} : vector<8x32xf32> to vector<8x8xf32>
    %488 = vector.extract_strided_slice %451 {offsets = [0, 16], sizes = [8, 8], strides = [1, 1]} : vector<8x32xf32> to vector<8x8xf32>
    %cst_165 = arith.constant dense<0.000000e+00> : vector<8x8xf32>
    %489 = tpu.matmul %486, %487, %cst_165 {dimension_numbers = #tpu.dot_dimension_numbers<[1], [1], [0], [0], [0, 0, 1, 0], [], []>} : vector<8x8xf32>, vector<8x8xf32>, vector<8x8xf32> -> vector<8x8xf32>
    %cst_166 = arith.constant 0.353553385 : f32
    %490 = vector.broadcast %cst_166 : f32 to vector<8x8xf32>
    %491 = arith.mulf %489, %490 : vector<8x8xf32>
    %cst_167 = arith.constant dense<0xFF800000> : vector<8xf32>
    %492 = vector.multi_reduction <maximumf>, %491, %cst_167 [1] : vector<8x8xf32> to vector<8xf32>
    %493 = vector.shape_cast %492 : vector<8xf32> to vector<8x1xf32>
    %494 = vector.broadcast %493 : vector<8x1xf32> to vector<8x8xf32>
    %495 = arith.subf %491, %494 : vector<8x8xf32>
    %496 = math.exp %495 : vector<8x8xf32>
    %cst_168 = arith.constant dense<0.000000e+00> : vector<8xf32>
    %497 = vector.multi_reduction <add>, %496, %cst_168 [1] : vector<8x8xf32> to vector<8xf32>
    %498 = vector.shape_cast %497 : vector<8xf32> to vector<8x1xf32>
    %cst_169 = arith.constant dense<0.000000e+00> : vector<8x8xf32>
    %499 = tpu.matmul %496, %488, %cst_169 {dimension_numbers = #tpu.dot_dimension_numbers<[1], [0], [0], [1], [0, 0, 1, 1], [], []>} : vector<8x8xf32>, vector<8x8xf32>, vector<8x8xf32> -> vector<8x8xf32>
    %500 = tpu.reciprocal %498 : vector<8x1xf32> -> vector<8x1xf32>
    %501 = vector.broadcast %500 : vector<8x1xf32> to vector<8x8xf32>
    %502 = arith.mulf %499, %501 : vector<8x8xf32>
    %503 = vector.extract_strided_slice %449 {offsets = [0, 24], sizes = [8, 8], strides = [1, 1]} : vector<8x32xf32> to vector<8x8xf32>
    %504 = vector.extract_strided_slice %450 {offsets = [0, 24], sizes = [8, 8], strides = [1, 1]} : vector<8x32xf32> to vector<8x8xf32>
    %505 = vector.extract_strided_slice %451 {offsets = [0, 24], sizes = [8, 8], strides = [1, 1]} : vector<8x32xf32> to vector<8x8xf32>
    %cst_170 = arith.constant dense<0.000000e+00> : vector<8x8xf32>
    %506 = tpu.matmul %503, %504, %cst_170 {dimension_numbers = #tpu.dot_dimension_numbers<[1], [1], [0], [0], [0, 0, 1, 0], [], []>} : vector<8x8xf32>, vector<8x8xf32>, vector<8x8xf32> -> vector<8x8xf32>
    %cst_171 = arith.constant 0.353553385 : f32
    %507 = vector.broadcast %cst_171 : f32 to vector<8x8xf32>
    %508 = arith.mulf %506, %507 : vector<8x8xf32>
    %cst_172 = arith.constant dense<0xFF800000> : vector<8xf32>
    %509 = vector.multi_reduction <maximumf>, %508, %cst_172 [1] : vector<8x8xf32> to vector<8xf32>
    %510 = vector.shape_cast %509 : vector<8xf32> to vector<8x1xf32>
    %511 = vector.broadcast %510 : vector<8x1xf32> to vector<8x8xf32>
    %512 = arith.subf %508, %511 : vector<8x8xf32>
    %513 = math.exp %512 : vector<8x8xf32>
    %cst_173 = arith.constant dense<0.000000e+00> : vector<8xf32>
    %514 = vector.multi_reduction <add>, %513, %cst_173 [1] : vector<8x8xf32> to vector<8xf32>
    %515 = vector.shape_cast %514 : vector<8xf32> to vector<8x1xf32>
    %cst_174 = arith.constant dense<0.000000e+00> : vector<8x8xf32>
    %516 = tpu.matmul %513, %505, %cst_174 {dimension_numbers = #tpu.dot_dimension_numbers<[1], [0], [0], [1], [0, 0, 1, 1], [], []>} : vector<8x8xf32>, vector<8x8xf32>, vector<8x8xf32> -> vector<8x8xf32>
    %517 = tpu.reciprocal %515 : vector<8x1xf32> -> vector<8x1xf32>
    %518 = vector.broadcast %517 : vector<8x1xf32> to vector<8x8xf32>
    %519 = arith.mulf %516, %518 : vector<8x8xf32>
    %520 = tpu.concatenate %468, %485, %502, %519 in 1 : vector<8x8xf32>, vector<8x8xf32>, vector<8x8xf32>, vector<8x8xf32> -> vector<8x32xf32>
    %521 = tpu.concatenate %448, %520 in 0 : vector<8x32xf32>, vector<8x32xf32> -> vector<16x32xf32>
    %cst_175 = arith.constant dense<0.000000e+00> : vector<16x32xf32>
    %522 = tpu.matmul %521, %15, %cst_175 {dimension_numbers = #tpu.dot_dimension_numbers<[1], [0], [0], [1], [0, 0, 1, 1], [], []>} : vector<16x32xf32>, vector<32x32xf32>, vector<16x32xf32> -> vector<16x32xf32>
    %523 = arith.addf %522, %19 : vector<16x32xf32>
    %524 = arith.addf %371, %523 : vector<16x32xf32>
    %cst_176 = arith.constant dense<0.000000e+00> : vector<16xf32>
    %525 = vector.multi_reduction <add>, %524, %cst_176 [1] : vector<16x32xf32> to vector<16xf32>
    %526 = vector.shape_cast %525 : vector<16xf32> to vector<16x1xf32>
    %cst_177 = arith.constant 3.200000e+01 : f32
    %527 = vector.broadcast %cst_177 : f32 to vector<16x1xf32>
    %528 = arith.divf %526, %527 : vector<16x1xf32>
    %529 = vector.broadcast %528 : vector<16x1xf32> to vector<16x32xf32>
    %530 = arith.subf %524, %529 : vector<16x32xf32>
    %531 = arith.mulf %530, %530 : vector<16x32xf32>
    %cst_178 = arith.constant dense<0.000000e+00> : vector<16xf32>
    %532 = vector.multi_reduction <add>, %531, %cst_178 [1] : vector<16x32xf32> to vector<16xf32>
    %533 = vector.shape_cast %532 : vector<16xf32> to vector<16x1xf32>
    %cst_179 = arith.constant 3.200000e+01 : f32
    %534 = vector.broadcast %cst_179 : f32 to vector<16x1xf32>
    %535 = arith.divf %533, %534 : vector<16x1xf32>
    %536 = vector.broadcast %528 : vector<16x1xf32> to vector<16x32xf32>
    %537 = arith.subf %524, %536 : vector<16x32xf32>
    %cst_180 = arith.constant 9.99999974E-6 : f32
    %538 = vector.broadcast %cst_180 : f32 to vector<16x1xf32>
    %539 = arith.addf %535, %538 : vector<16x1xf32>
    %540 = math.rsqrt %539 : vector<16x1xf32>
    %541 = vector.broadcast %540 : vector<16x1xf32> to vector<16x32xf32>
    %542 = arith.mulf %537, %541 : vector<16x32xf32>
    %543 = arith.mulf %542, %22 : vector<16x32xf32>
    %544 = arith.addf %543, %25 : vector<16x32xf32>
    %c0_181 = arith.constant 0 : index
    %c0_182 = arith.constant 0 : index
    %545 = vector.load %arg13[%c0_181, %c0_182] : memref<16x32xf32, #tpu.memory_space<vmem>>, vector<16x32xf32>
    tpu.vector_store %arg13[%c0_181, %c0_182], %544 {strides = array<i32>} : memref<16x32xf32, #tpu.memory_space<vmem>>, vector<16x32xf32>,
    return
  }
  func.func @transform_0(%arg0: i32) -> (i32, i32) {
    %c0_i32 = arith.constant 0 : i32
    %c0_i32_0 = arith.constant 0 : i32
    %c0_i32_1 = arith.constant 0 : i32
    return %c0_i32, %c0_i32_0 : i32, i32
  }
  func.func @transform_1(%arg0: i32) -> (i32, i32) {
    %c0_i32 = arith.constant 0 : i32
    %c0_i32_0 = arith.constant 0 : i32
    %c0_i32_1 = arith.constant 0 : i32
    return %c0_i32, %c0_i32_0 : i32, i32
  }
  func.func @transform_2(%arg0: i32) -> (i32, i32) {
    %c0_i32 = arith.constant 0 : i32
    %c0_i32_0 = arith.constant 0 : i32
    %c0_i32_1 = arith.constant 0 : i32
    return %c0_i32, %c0_i32_0 : i32, i32
  }
  func.func @transform_3(%arg0: i32) -> (i32, i32) {
    %c0_i32 = arith.constant 0 : i32
    %c0_i32_0 = arith.constant 0 : i32
    %c0_i32_1 = arith.constant 0 : i32
    return %c0_i32, %c0_i32_0 : i32, i32
  }
  func.func @transform_4(%arg0: i32) -> (i32, i32) {
    %c0_i32 = arith.constant 0 : i32
    %c0_i32_0 = arith.constant 0 : i32
    %c0_i32_1 = arith.constant 0 : i32
    return %c0_i32, %c0_i32_0 : i32, i32
  }
  func.func @transform_5(%arg0: i32) -> (i32, i32) {
    %c0_i32 = arith.constant 0 : i32
    %c0_i32_0 = arith.constant 0 : i32
    %c0_i32_1 = arith.constant 0 : i32
    return %c0_i32, %c0_i32_0 : i32, i32
  }
  func.func @transform_6(%arg0: i32) -> (i32, i32) {
    %c0_i32 = arith.constant 0 : i32
    %c0_i32_0 = arith.constant 0 : i32
    %c0_i32_1 = arith.constant 0 : i32
    return %c0_i32, %c0_i32_0 : i32, i32
  }
  func.func @transform_7(%arg0: i32) -> (i32, i32) {
    %c0_i32 = arith.constant 0 : i32
    %c0_i32_0 = arith.constant 0 : i32
    %c0_i32_1 = arith.constant 0 : i32
    return %c0_i32, %c0_i32_0 : i32, i32
  }
  func.func @transform_8(%arg0: i32) -> (i32, i32) {
    %c0_i32 = arith.constant 0 : i32
    %c0_i32_0 = arith.constant 0 : i32
    %c0_i32_1 = arith.constant 0 : i32
    return %c0_i32, %c0_i32_0 : i32, i32
  }
  func.func @transform_9(%arg0: i32) -> (i32, i32) {
    %c0_i32 = arith.constant 0 : i32
    %c0_i32_0 = arith.constant 0 : i32
    %c0_i32_1 = arith.constant 0 : i32
    return %c0_i32, %c0_i32_0 : i32, i32
  }
  func.func @transform_10(%arg0: i32) -> (i32, i32) {
    %c0_i32 = arith.constant 0 : i32
    %c0_i32_0 = arith.constant 0 : i32
    %c0_i32_1 = arith.constant 0 : i32
    return %c0_i32, %c0_i32_0 : i32, i32
  }
  func.func @transform_11(%arg0: i32) -> (i32, i32) {
    %c0_i32 = arith.constant 0 : i32
    %c0_i32_0 = arith.constant 0 : i32
    %c0_i32_1 = arith.constant 0 : i32
    return %c0_i32, %c0_i32_0 : i32, i32
  }
  func.func @transform_12(%arg0: i32) -> (i32, i32) {
    %c0_i32 = arith.constant 0 : i32
    %c0_i32_0 = arith.constant 0 : i32
    %c0_i32_1 = arith.constant 0 : i32
    return %c0_i32, %c0_i32_0 : i32, i32
  }
}

</mosaic_0001>

<llo_original>
// kernel: tpu_custom_call.1
$region0: #{tpu_custom_call.1}
  #allocation0 [shape = 'u32[]', space=smem, size = 0x4, offset = 0x4, fixed_abs, tag = 'smem constant byte address 0x4 - core index']
  #allocation1 [shape = 'u32[144,128]{1,0:T(1,128)}', space=vmem, size = 0x12000, scoped, tag = 'internal scratch']
  #allocation2 [shape = 'f32[16,32]{1,0:T(8,128)}', space=vmem, size = 0x2000, scoped, tag = 'scratch operand']
  #allocation3 [shape = 'f32[16,32]{1,0:T(8,128)}', space=vmem, size = 0x2000, scoped, tag = 'scratch operand']
  %s0 = inlined_call_operand.hbm [shape: f32[16,32], index: 0, kind: input, shape index: {}]
  %s1 = inlined_call_operand.hbm [shape: f32[16,32], index: 1, kind: input, shape index: {}]
  %s2 = inlined_call_operand.hbm [shape: f32[32,32], index: 2, kind: input, shape index: {}]
  %s3 = inlined_call_operand.hbm [shape: f32[32,32], index: 3, kind: input, shape index: {}]
  %s4 = inlined_call_operand.hbm [shape: f32[32,32], index: 4, kind: input, shape index: {}]
  %s5 = inlined_call_operand.hbm [shape: f32[32,32], index: 5, kind: input, shape index: {}]
  %s6 = inlined_call_operand.vmem [shape: f32[1,32], index: 6, kind: input, shape index: {}]
  %s7 = inlined_call_operand.vmem [shape: f32[1,32], index: 7, kind: input, shape index: {}]
  %s8 = inlined_call_operand.vmem [shape: f32[1,32], index: 8, kind: input, shape index: {}]
  %s9 = inlined_call_operand.vmem [shape: f32[1,32], index: 9, kind: input, shape index: {}]
  %s10 = inlined_call_operand.vmem [shape: f32[1,32], index: 10, kind: input, shape index: {}]
  %s11 = inlined_call_operand.vmem [shape: f32[1,32], index: 11, kind: input, shape index: {}]
  %s12 = inlined_call_operand.hbm [shape: f32[16,32], index: 12, kind: output, shape index: {}]
  %s13 = sld [smem:[#allocation0]]
  $region82: #{tpu_custom_call.1} parent=0
    _
  %s15 = ssub.s32 1, %s13
  %s16 = scalar_select 0, %s15, %s13
  $region1: #{tpu_custom_call.1} parent=0
    #allocation4 [shape = 'u8[8192]{0}', space=vmem, size = 0x2000, scoped, tag = 'input window, operand 0, single buffered']
    #allocation5 [shape = 's32[1]{0}', space=sflag, size = 0x4, scoped, tag = 'scoped memory for tpu_custom_call.1']
    #allocation6 [shape = 's32[1]{0}', space=sflag, size = 0x4, scoped, tag = 'scoped memory for tpu_custom_call.1']
    #allocation7 [shape = 'u8[8192]{0}', space=vmem, size = 0x2000, scoped, tag = 'input window, operand 1, single buffered']
    #allocation8 [shape = 's32[1]{0}', space=sflag, size = 0x4, scoped, tag = 'scoped memory for tpu_custom_call.1']
    #allocation9 [shape = 'u8[16384]{0}', space=vmem, size = 0x4000, scoped, tag = 'input window, operand 2, single buffered']
    #allocation10 [shape = 'u8[16384]{0}', space=vmem, size = 0x4000, scoped, tag = 'input window, operand 3, single buffered']
    #allocation11 [shape = 's32[1]{0}', space=sflag, size = 0x4, scoped, tag = 'scoped memory for tpu_custom_call.1']
    #allocation12 [shape = 'u8[16384]{0}', space=vmem, size = 0x4000, scoped, tag = 'input window, operand 4, single buffered']
    #allocation13 [shape = 'u8[16384]{0}', space=vmem, size = 0x4000, scoped, tag = 'input window, operand 5, single buffered']
    #allocation14 [shape = 's32[1]{0}', space=sflag, size = 0x4, scoped, tag = 'scoped memory for tpu_custom_call.1']
    #allocation15 [shape = 'u8[8192]{0}', space=vmem, size = 0x2000, scoped, tag = 'output window, operand 0, single buffered']
    %17 = vsyncpa [#allocation5], 0
    %18 = vsyncpa [#allocation8], 0
    %19 = vsyncpa [#allocation11], 0
    %20 = vsyncpa [#allocation14], 0
    %21 = vsyncpa [#allocation6], 0
    // Predicated region
    $region2: #{tpu_custom_call.1} parent=1 // pred_check
      _
    $region3: #{tpu_custom_call.1} parent=1 // pred_check_branch
      %23 = sbr.rel (0) target = $region5
    $region4: #{tpu_custom_call.1} parent=1 // pred_region
      %s25 = ssub.s32 256, 256
      %26 = vsyncadd [#allocation5], %s25
      %s27 = sshll.u32 [#allocation4], 4
      %s28 = int_to_ptr.vmem [resolvable:$true] %s27
      %33 = dma.hbm_to_vmem [thread:$0]  %s0, 256, %s28, [#allocation5], 128, 128, 8
    $region5: #{tpu_custom_call.1} parent=1 // pred_fallthru
      _
    // Predicated region
    $region6: #{tpu_custom_call.1} parent=1 // pred_check
      _
    $region7: #{tpu_custom_call.1} parent=1 // pred_check_branch
      %35 = sbr.rel (0) target = $region9
    $region8: #{tpu_custom_call.1} parent=1 // pred_region
      %s37 = ssub.s32 256, 256
      %38 = vsyncadd [#allocation8], %s37
      %s39 = sshll.u32 [#allocation7], 4
      %s40 = int_to_ptr.vmem [resolvable:$true] %s39
      %45 = dma.hbm_to_vmem [thread:$0]  %s1, 256, %s40, [#allocation8], 128, 128, 8
    $region9: #{tpu_custom_call.1} parent=1 // pred_fallthru
      _
    // Predicated region
    $region10: #{tpu_custom_call.1} parent=1 // pred_check
      _
    $region11: #{tpu_custom_call.1} parent=1 // pred_check_branch
      %47 = sbr.rel (0) target = $region13
    $region12: #{tpu_custom_call.1} parent=1 // pred_region
      %s49 = ssub.s32 512, 512
      %50 = vsyncadd [#allocation8], %s49
      %s51 = sshll.u32 [#allocation9], 4
      %s52 = int_to_ptr.vmem [resolvable:$true] %s51
      %57 = dma.hbm_to_vmem [thread:$0]  %s2, 512, %s52, [#allocation8], 128, 128, 8
    $region13: #{tpu_custom_call.1} parent=1 // pred_fallthru
      _
    // Predicated region
    $region14: #{tpu_custom_call.1} parent=1 // pred_check
      _
    $region15: #{tpu_custom_call.1} parent=1 // pred_check_branch
      %59 = sbr.rel (0) target = $region17
    $region16: #{tpu_custom_call.1} parent=1 // pred_region
      %s61 = ssub.s32 512, 512
      %62 = vsyncadd [#allocation11], %s61
      %s63 = sshll.u32 [#allocation10], 4
      %s64 = int_to_ptr.vmem [resolvable:$true] %s63
      %69 = dma.hbm_to_vmem [thread:$0]  %s3, 512, %s64, [#allocation11], 128, 128, 8
    $region17: #{tpu_custom_call.1} parent=1 // pred_fallthru
      _
    // Predicated region
    $region18: #{tpu_custom_call.1} parent=1 // pred_check
      _
    $region19: #{tpu_custom_call.1} parent=1 // pred_check_branch
      %71 = sbr.rel (0) target = $region21
    $region20: #{tpu_custom_call.1} parent=1 // pred_region
      %s73 = ssub.s32 512, 512
      %74 = vsyncadd [#allocation11], %s73
      %s75 = sshll.u32 [#allocation12], 4
      %s76 = int_to_ptr.vmem [resolvable:$true] %s75
      %81 = dma.hbm_to_vmem [thread:$0]  %s4, 512, %s76, [#allocation11], 128, 128, 8
    $region21: #{tpu_custom_call.1} parent=1 // pred_fallthru
      _
    // Predicated region
    $region22: #{tpu_custom_call.1} parent=1 // pred_check
      _
    $region23: #{tpu_custom_call.1} parent=1 // pred_check_branch
      %83 = sbr.rel (0) target = $region25
    $region24: #{tpu_custom_call.1} parent=1 // pred_region
      %s85 = ssub.s32 512, 512
      %86 = vsyncadd [#allocation14], %s85
      %s87 = sshll.u32 [#allocation13], 4
      %s88 = int_to_ptr.vmem [resolvable:$true] %s87
      %93 = dma.hbm_to_vmem [thread:$0]  %s5, 512, %s88, [#allocation14], 128, 128, 8
    $region25: #{tpu_custom_call.1} parent=1 // pred_fallthru
      _
    // Predicated region
    $region26: #{tpu_custom_call.1} parent=1 // pred_check
      _
    $region27: #{tpu_custom_call.1} parent=1 // pred_check_branch
      %95 = sbr.rel (0) target = $region29
    $region28: #{tpu_custom_call.1} parent=1 // pred_region
      _
    $region29: #{tpu_custom_call.1} parent=1 // pred_fallthru
      _
    // Predicated region
    $region30: #{tpu_custom_call.1} parent=1 // pred_check
      _
    $region31: #{tpu_custom_call.1} parent=1 // pred_check_branch
      %97 = sbr.rel (0) target = $region33
    $region32: #{tpu_custom_call.1} parent=1 // pred_region
      _
    $region33: #{tpu_custom_call.1} parent=1 // pred_fallthru
      _
    // Predicated region
    $region34: #{tpu_custom_call.1} parent=1 // pred_check
      _
    $region35: #{tpu_custom_call.1} parent=1 // pred_check_branch
      %99 = sbr.rel (0) target = $region37
    $region36: #{tpu_custom_call.1} parent=1 // pred_region
      _
    $region37: #{tpu_custom_call.1} parent=1 // pred_fallthru
      _
    // Predicated region
    $region38: #{tpu_custom_call.1} parent=1 // pred_check
      _
    $region39: #{tpu_custom_call.1} parent=1 // pred_check_branch
      %101 = sbr.rel (0) target = $region41
    $region40: #{tpu_custom_call.1} parent=1 // pred_region
      _
    $region41: #{tpu_custom_call.1} parent=1 // pred_fallthru
      _
    // Predicated region
    $region42: #{tpu_custom_call.1} parent=1 // pred_check
      _
    $region43: #{tpu_custom_call.1} parent=1 // pred_check_branch
      %103 = sbr.rel (0) target = $region45
    $region44: #{tpu_custom_call.1} parent=1 // pred_region
      _
    $region45: #{tpu_custom_call.1} parent=1 // pred_fallthru
      _
    // Predicated region
    $region46: #{tpu_custom_call.1} parent=1 // pred_check
      _
    $region47: #{tpu_custom_call.1} parent=1 // pred_check_branch
      %105 = sbr.rel (0) target = $region49
    $region48: #{tpu_custom_call.1} parent=1 // pred_region
      _
    $region49: #{tpu_custom_call.1} parent=1 // pred_fallthru
      _
    // Predicated region
    $region50: #{tpu_custom_call.1} parent=1 // pred_check
      _
    $region51: #{tpu_custom_call.1} parent=1 // pred_check_branch
      %107 = sbr.rel (0) target = $region53
    $region52: #{tpu_custom_call.1} parent=1 // pred_region
      %108 = dma.done [#allocation5], 256
    $region53: #{tpu_custom_call.1} parent=1 // pred_fallthru
      _
    // Predicated region
    $region54: #{tpu_custom_call.1} parent=1 // pred_check
      _
    $region55: #{tpu_custom_call.1} parent=1 // pred_check_branch
      %110 = sbr.rel (0) target = $region57
    $region56: #{tpu_custom_call.1} parent=1 // pred_region
      %111 = dma.done [#allocation8], 256
    $region57: #{tpu_custom_call.1} parent=1 // pred_fallthru
      _
    // Predicated region
    $region58: #{tpu_custom_call.1} parent=1 // pred_check
      _
    $region59: #{tpu_custom_call.1} parent=1 // pred_check_branch
      %113 = sbr.rel (0) target = $region61
    $region60: #{tpu_custom_call.1} parent=1 // pred_region
      %114 = dma.done [#allocation8], 512
    $region61: #{tpu_custom_call.1} parent=1 // pred_fallthru
      _
    // Predicated region
    $region62: #{tpu_custom_call.1} parent=1 // pred_check
      _
    $region63: #{tpu_custom_call.1} parent=1 // pred_check_branch
      %116 = sbr.rel (0) target = $region65
    $region64: #{tpu_custom_call.1} parent=1 // pred_region
      %117 = dma.done [#allocation11], 512
    $region65: #{tpu_custom_call.1} parent=1 // pred_fallthru
      _
    // Predicated region
    $region66: #{tpu_custom_call.1} parent=1 // pred_check
      _
    $region67: #{tpu_custom_call.1} parent=1 // pred_check_branch
      %119 = sbr.rel (0) target = $region69
    $region68: #{tpu_custom_call.1} parent=1 // pred_region
      %120 = dma.done [#allocation11], 512
    $region69: #{tpu_custom_call.1} parent=1 // pred_fallthru
      _
    // Predicated region
    $region70: #{tpu_custom_call.1} parent=1 // pred_check
      _
    $region71: #{tpu_custom_call.1} parent=1 // pred_check_branch
      %122 = sbr.rel (0) target = $region73
    $region72: #{tpu_custom_call.1} parent=1 // pred_region
      %123 = dma.done [#allocation14], 512
    $region73: #{tpu_custom_call.1} parent=1 // pred_fallthru
      _
    %v124 = vld [vmem:[#allocation4] sm:$0xff]
    %v125 = vld [vmem:[#allocation4 + $0x8] sm:$0xff]
    %v126 = vld [vmem:[#allocation7] sm:$0xff]
    %v127 = vld [vmem:[#allocation7 + $0x8] sm:$0xff]
    %v128 = vld [vmem:[#allocation10] sm:$0xff]
    %v129 = vld [vmem:[#allocation10 + $0x8] sm:$0xff]
    %v130 = vld [vmem:[#allocation10 + $0x10] sm:$0xff]
    %v131 = vld [vmem:[#allocation10 + $0x18] sm:$0xff]
    %v132 = vld [vmem:[%s7] sm:$0x1]
    %v134 = vlaneseq
    %v135 = vshrl.u32 %v134, 7
    %v136 = vsub.s32 0, %v135
    %v137 = vrot.slane %v132, %v136
    %vm139 = vcmask 261120
    %v141 = vsel %vm139, %v126, 0
    %v144 = vsel %vm139, %v127, 0
    %146 = vmatprep.subr.mxu0 0.0
    %147 = vmatpush1.msra.mxu0 0.0
    %148 = vmatprep.subr.mxu0 0.0
    %149 = vmatpush1.msra.mxu0 0.0
    %150 = vmatprep.subr.mxu0 0.0
    %151 = vmatpush1.msra.mxu0 0.0
    %152 = vmatprep.subr.mxu0 0.0
    %153 = vmatpush1.msra.mxu0 0.0
    %154 = vmatprep.subr.mxu0 0.0
    %155 = vmatpush1.msra.mxu0 0.0
    %156 = vmatprep.subr.mxu0 0.0
    %157 = vmatpush1.msra.mxu0 0.0
    %158 = vmatprep.subr.mxu0 0.0
    %159 = vmatpush1.msra.mxu0 0.0
    %160 = vmatprep.subr.mxu0 0.0
    %161 = vmatpush1.msra.mxu0 0.0
    %162 = vmatprep.subr.mxu0 0.0
    %163 = vmatpush1.msra.mxu0 0.0
    %164 = vmatprep.subr.mxu0 0.0
    %165 = vmatpush1.msra.mxu0 0.0
    %166 = vmatprep.subr.mxu0 0.0
    %167 = vmatpush1.msra.mxu0 0.0
    %168 = vmatprep.subr.mxu0 0.0
    %169 = vmatpush1.msra.mxu0 0.0
    %170 = vmatprep.subr.mxu0 0.0
    %171 = vmatpush1.msra.mxu0 %v131
    %172 = vmatprep.subr.mxu0 0.0
    %173 = vmatpush1.msra.mxu0 %v130
    %174 = vmatprep.subr.mxu0 0.0
    %175 = vmatpush1.msra.mxu0 %v129
    %176 = vmatprep.subr.mxu0 0.0
    %177 = vmatpush1.msra.mxu0 %v128
    %178 = vmatprep.subr.mxu0 0.0
    %179 = vmatpush2.msra.mxu0 0.0
    %180 = vmatprep.subr.mxu0 0.0
    %181 = vmatpush2.msra.mxu0 0.0
    %182 = vmatprep.subr.mxu0 0.0
    %183 = vmatpush2.msra.mxu0 0.0
    %184 = vmatprep.subr.mxu0 0.0
    %185 = vmatpush2.msra.mxu0 0.0
    %186 = vmatprep.subr.mxu0 0.0
    %187 = vmatpush2.msra.mxu0 0.0
    %188 = vmatprep.subr.mxu0 0.0
    %189 = vmatpush2.msra.mxu0 0.0
    %190 = vmatprep.subr.mxu0 0.0
    %191 = vmatpush2.msra.mxu0 0.0
    %192 = vmatprep.subr.mxu0 0.0
    %193 = vmatpush2.msra.mxu0 0.0
    %194 = vmatprep.subr.mxu0 0.0
    %195 = vmatpush2.msra.mxu0 0.0
    %196 = vmatprep.subr.mxu0 0.0
    %197 = vmatpush2.msra.mxu0 0.0
    %198 = vmatprep.subr.mxu0 0.0
    %199 = vmatpush2.msra.mxu0 0.0
    %200 = vmatprep.subr.mxu0 0.0
    %201 = vmatpush2.msra.mxu0 0.0
    %202 = vmatprep.subr.mxu0 0.0
    %203 = vmatpush2.msra.mxu0 0.0
    %204 = vmatprep.subr.mxu0 0.0
    %205 = vmatpush2.msra.mxu0 0.0
    %206 = vmatprep.subr.mxu0 0.0
    %207 = vmatpush2.msra.mxu0 0.0
    %208 = vmatprep.subr.mxu0 0.0
    %209 = vmatpush2.msra.mxu0 0.0
    %210 = vmatprep.mubr.f32.mxu0 0.0
    %211 = vmatmul.mubr.f32.gmra.mxu0 %v141
    %v212 = vpop.f32.mrf.mxu0
    %v213 = vadd.f32 %v137, %v212
    %v214 = vpop.f32.mrf.mxu0
    %215 = vmatprep.mubr.f32.mxu0 0.0
    %216 = vmatmul.mubr.f32.gmra.mxu0 %v144
    %v217 = vpop.f32.mrf.mxu0
    %v218 = vadd.f32 %v137, %v217
    %v219 = vpop.f32.mrf.mxu0
    %220 = vdwg.mxu0
    %221 = vst.msk [vmem:[#allocation2] sm:$0xff] %vm139, %v213
    %222 = vst.msk [vmem:[#allocation2 + $0x8] sm:$0xff] %vm139, %v218
    %v223 = vld [vmem:[#allocation12] sm:$0xff]
    %v224 = vld [vmem:[#allocation12 + $0x8] sm:$0xff]
    %v225 = vld [vmem:[#allocation12 + $0x10] sm:$0xff]
    %v226 = vld [vmem:[#allocation12 + $0x18] sm:$0xff]
    %v227 = vld [vmem:[%s8] sm:$0x1]
    %v229 = vlaneseq
    %v230 = vshrl.u32 %v229, 7
    %v231 = vsub.s32 0, %v230
    %v232 = vrot.slane %v227, %v231
    %234 = vmatprep.subr.mxu0 0.0
    %235 = vmatpush1.msra.mxu0 0.0
    %236 = vmatprep.subr.mxu0 0.0
    %237 = vmatpush1.msra.mxu0 0.0
    %238 = vmatprep.subr.mxu0 0.0
    %239 = vmatpush1.msra.mxu0 0.0
    %240 = vmatprep.subr.mxu0 0.0
    %241 = vmatpush1.msra.mxu0 0.0
    %242 = vmatprep.subr.mxu0 0.0
    %243 = vmatpush1.msra.mxu0 0.0
    %244 = vmatprep.subr.mxu0 0.0
    %245 = vmatpush1.msra.mxu0 0.0
    %246 = vmatprep.subr.mxu0 0.0
    %247 = vmatpush1.msra.mxu0 0.0
    %248 = vmatprep.subr.mxu0 0.0
    %249 = vmatpush1.msra.mxu0 0.0
    %250 = vmatprep.subr.mxu0 0.0
    %251 = vmatpush1.msra.mxu0 0.0
    %252 = vmatprep.subr.mxu0 0.0
    %253 = vmatpush1.msra.mxu0 0.0
    %254 = vmatprep.subr.mxu0 0.0
    %255 = vmatpush1.msra.mxu0 0.0
    %256 = vmatprep.subr.mxu0 0.0
    %257 = vmatpush1.msra.mxu0 0.0
    %258 = vmatprep.subr.mxu0 0.0
    %259 = vmatpush1.msra.mxu0 %v226
    %260 = vmatprep.subr.mxu0 0.0
    %261 = vmatpush1.msra.mxu0 %v225
    %262 = vmatprep.subr.mxu0 0.0
    %263 = vmatpush1.msra.mxu0 %v224
    %264 = vmatprep.subr.mxu0 0.0
    %265 = vmatpush1.msra.mxu0 %v223
    %266 = vmatprep.subr.mxu0 0.0
    %267 = vmatpush2.msra.mxu0 0.0
    %268 = vmatprep.subr.mxu0 0.0
    %269 = vmatpush2.msra.mxu0 0.0
    %270 = vmatprep.subr.mxu0 0.0
    %271 = vmatpush2.msra.mxu0 0.0
    %272 = vmatprep.subr.mxu0 0.0
    %273 = vmatpush2.msra.mxu0 0.0
    %274 = vmatprep.subr.mxu0 0.0
    %275 = vmatpush2.msra.mxu0 0.0
    %276 = vmatprep.subr.mxu0 0.0
    %277 = vmatpush2.msra.mxu0 0.0
    %278 = vmatprep.subr.mxu0 0.0
    %279 = vmatpush2.msra.mxu0 0.0
    %280 = vmatprep.subr.mxu0 0.0
    %281 = vmatpush2.msra.mxu0 0.0
    %282 = vmatprep.subr.mxu0 0.0
    %283 = vmatpush2.msra.mxu0 0.0
    %284 = vmatprep.subr.mxu0 0.0
    %285 = vmatpush2.msra.mxu0 0.0
    %286 = vmatprep.subr.mxu0 0.0
    %287 = vmatpush2.msra.mxu0 0.0
    %288 = vmatprep.subr.mxu0 0.0
    %289 = vmatpush2.msra.mxu0 0.0
    %290 = vmatprep.subr.mxu0 0.0
    %291 = vmatpush2.msra.mxu0 0.0
    %292 = vmatprep.subr.mxu0 0.0
    %293 = vmatpush2.msra.mxu0 0.0
    %294 = vmatprep.subr.mxu0 0.0
    %295 = vmatpush2.msra.mxu0 0.0
    %296 = vmatprep.subr.mxu0 0.0
    %297 = vmatpush2.msra.mxu0 0.0
    %298 = vmatprep.mubr.f32.mxu0 0.0
    %299 = vmatmul.mubr.f32.gmra.mxu0 %v141
    %v300 = vpop.f32.mrf.mxu0
    %v301 = vadd.f32 %v232, %v300
    %v302 = vpop.f32.mrf.mxu0
    %303 = vmatprep.mubr.f32.mxu0 0.0
    %304 = vmatmul.mubr.f32.gmra.mxu0 %v144
    %v305 = vpop.f32.mrf.mxu0
    %v306 = vadd.f32 %v232, %v305
    %v307 = vpop.f32.mrf.mxu0
    %308 = vdwg.mxu0
    %309 = vst.msk [vmem:[#allocation3] sm:$0xff] %vm139, %v301
    %310 = vst.msk [vmem:[#allocation3 + $0x8] sm:$0xff] %vm139, %v306
    %v311 = vld [vmem:[#allocation9] sm:$0xff]
    %v312 = vld [vmem:[#allocation9 + $0x8] sm:$0xff]
    %v313 = vld [vmem:[#allocation9 + $0x10] sm:$0xff]
    %v314 = vld [vmem:[#allocation9 + $0x18] sm:$0xff]
    %v315 = vld [vmem:[#allocation13] sm:$0xff]
    %v316 = vld [vmem:[#allocation13 + $0x8] sm:$0xff]
    %v317 = vld [vmem:[#allocation13 + $0x10] sm:$0xff]
    %v318 = vld [vmem:[#allocation13 + $0x18] sm:$0xff]
    %v319 = vld [vmem:[%s6] sm:$0x1]
    %v320 = vld [vmem:[%s9] sm:$0x1]
    %v322 = vlaneseq
    %v323 = vshrl.u32 %v322, 7
    %v324 = vsub.s32 0, %v323
    %v325 = vrot.slane %v320, %v324
    %v327 = vld [vmem:[%s10] sm:$0x1]
    %v329 = vlaneseq
    %v330 = vshrl.u32 %v329, 7
    %v331 = vsub.s32 0, %v330
    %v332 = vrot.slane %v327, %v331
    %v334 = vld [vmem:[%s11] sm:$0x1]
    %v336 = vlaneseq
    %v337 = vshrl.u32 %v336, 7
    %v338 = vsub.s32 0, %v337
    %v339 = vrot.slane %v334, %v338
    %v342 = vlaneseq
    %v343 = vshrl.u32 %v342, 7
    %v344 = vsub.s32 0, %v343
    %v345 = vrot.slane %v319, %v344
    %v348 = vsel %vm139, %v124, 0
    %v351 = vsel %vm139, %v125, 0
    %353 = vmatprep.subr.mxu0 0.0
    %354 = vmatpush1.msra.mxu0 0.0
    %355 = vmatprep.subr.mxu0 0.0
    %356 = vmatpush1.msra.mxu0 0.0
    %357 = vmatprep.subr.mxu0 0.0
    %358 = vmatpush1.msra.mxu0 0.0
    %359 = vmatprep.subr.mxu0 0.0
    %360 = vmatpush1.msra.mxu0 0.0
    %361 = vmatprep.subr.mxu0 0.0
    %362 = vmatpush1.msra.mxu0 0.0
    %363 = vmatprep.subr.mxu0 0.0
    %364 = vmatpush1.msra.mxu0 0.0
    %365 = vmatprep.subr.mxu0 0.0
    %366 = vmatpush1.msra.mxu0 0.0
    %367 = vmatprep.subr.mxu0 0.0
    %368 = vmatpush1.msra.mxu0 0.0
    %369 = vmatprep.subr.mxu0 0.0
    %370 = vmatpush1.msra.mxu0 0.0
    %371 = vmatprep.subr.mxu0 0.0
    %372 = vmatpush1.msra.mxu0 0.0
    %373 = vmatprep.subr.mxu0 0.0
    %374 = vmatpush1.msra.mxu0 0.0
    %375 = vmatprep.subr.mxu0 0.0
    %376 = vmatpush1.msra.mxu0 0.0
    %377 = vmatprep.subr.mxu0 0.0
    %378 = vmatpush1.msra.mxu0 %v314
    %379 = vmatprep.subr.mxu0 0.0
    %380 = vmatpush1.msra.mxu0 %v313
    %381 = vmatprep.subr.mxu0 0.0
    %382 = vmatpush1.msra.mxu0 %v312
    %383 = vmatprep.subr.mxu0 0.0
    %384 = vmatpush1.msra.mxu0 %v311
    %385 = vmatprep.subr.mxu0 0.0
    %386 = vmatpush2.msra.mxu0 0.0
    %387 = vmatprep.subr.mxu0 0.0
    %388 = vmatpush2.msra.mxu0 0.0
    %389 = vmatprep.subr.mxu0 0.0
    %390 = vmatpush2.msra.mxu0 0.0
    %391 = vmatprep.subr.mxu0 0.0
    %392 = vmatpush2.msra.mxu0 0.0
    %393 = vmatprep.subr.mxu0 0.0
    %394 = vmatpush2.msra.mxu0 0.0
    %395 = vmatprep.subr.mxu0 0.0
    %396 = vmatpush2.msra.mxu0 0.0
    %397 = vmatprep.subr.mxu0 0.0
    %398 = vmatpush2.msra.mxu0 0.0
    %399 = vmatprep.subr.mxu0 0.0
    %400 = vmatpush2.msra.mxu0 0.0
    %401 = vmatprep.subr.mxu0 0.0
    %402 = vmatpush2.msra.mxu0 0.0
    %403 = vmatprep.subr.mxu0 0.0
    %404 = vmatpush2.msra.mxu0 0.0
    %405 = vmatprep.subr.mxu0 0.0
    %406 = vmatpush2.msra.mxu0 0.0
    %407 = vmatprep.subr.mxu0 0.0
    %408 = vmatpush2.msra.mxu0 0.0
    %409 = vmatprep.subr.mxu0 0.0
    %410 = vmatpush2.msra.mxu0 0.0
    %411 = vmatprep.subr.mxu0 0.0
    %412 = vmatpush2.msra.mxu0 0.0
    %413 = vmatprep.subr.mxu0 0.0
    %414 = vmatpush2.msra.mxu0 0.0
    %415 = vmatprep.subr.mxu0 0.0
    %416 = vmatpush2.msra.mxu0 0.0
    %417 = vmatprep.mubr.f32.mxu0 0.0
    %418 = vmatmul.mubr.f32.gmra.mxu0 %v348
    %v419 = vpop.f32.mrf.mxu0
    %v420 = vadd.f32 %v345, %v419
    %v421 = vpop.f32.mrf.mxu0
    %422 = vmatprep.mubr.f32.mxu0 0.0
    %423 = vmatmul.mubr.f32.gmra.mxu0 %v351
    %v424 = vpop.f32.mrf.mxu0
    %v425 = vadd.f32 %v345, %v424
    %v426 = vpop.f32.mrf.mxu0
    %427 = vdwg.mxu0
    %v428 = vld [vmem:[#allocation2] sm:$0xff]
    %v429 = vld [vmem:[#allocation2 + $0x8] sm:$0xff]
    %v430 = vld [vmem:[#allocation3] sm:$0xff]
    %v431 = vld [vmem:[#allocation3 + $0x8] sm:$0xff]
    %vm432 = vcmask 64512
    %v434 = vsel %vm432, %v420, 0
    %v437 = vsel %vm432, %v428, 0
    %439 = vmatprep.subr.mxu0 0.0
    %440 = vmatpush1.xpose.msra.mxu0 0.0
    %441 = vmatprep.subr.mxu0 0.0
    %442 = vmatpush1.xpose.msra.mxu0 0.0
    %443 = vmatprep.subr.mxu0 0.0
    %444 = vmatpush1.xpose.msra.mxu0 0.0
    %445 = vmatprep.subr.mxu0 0.0
    %446 = vmatpush1.xpose.msra.mxu0 0.0
    %447 = vmatprep.subr.mxu0 0.0
    %448 = vmatpush1.xpose.msra.mxu0 0.0
    %449 = vmatprep.subr.mxu0 0.0
    %450 = vmatpush1.xpose.msra.mxu0 0.0
    %451 = vmatprep.subr.mxu0 0.0
    %452 = vmatpush1.xpose.msra.mxu0 0.0
    %453 = vmatprep.subr.mxu0 0.0
    %454 = vmatpush1.xpose.msra.mxu0 0.0
    %455 = vmatprep.subr.mxu0 0.0
    %456 = vmatpush1.xpose.msra.mxu0 0.0
    %457 = vmatprep.subr.mxu0 0.0
    %458 = vmatpush1.xpose.msra.mxu0 0.0
    %459 = vmatprep.subr.mxu0 0.0
    %460 = vmatpush1.xpose.msra.mxu0 0.0
    %461 = vmatprep.subr.mxu0 0.0
    %462 = vmatpush1.xpose.msra.mxu0 0.0
    %463 = vmatprep.subr.mxu0 0.0
    %464 = vmatpush1.xpose.msra.mxu0 0.0
    %465 = vmatprep.subr.mxu0 0.0
    %466 = vmatpush1.xpose.msra.mxu0 0.0
    %467 = vmatprep.subr.mxu0 0.0
    %468 = vmatpush1.xpose.msra.mxu0 0.0
    %469 = vmatprep.subr.mxu0 0.0
    %470 = vmatpush1.xpose.msra.mxu0 %v437
    %471 = vmatprep.subr.mxu0 0.0
    %472 = vmatpush2.xpose.msra.mxu0 0.0
    %473 = vmatprep.subr.mxu0 0.0
    %474 = vmatpush2.xpose.msra.mxu0 0.0
    %475 = vmatprep.subr.mxu0 0.0
    %476 = vmatpush2.xpose.msra.mxu0 0.0
    %477 = vmatprep.subr.mxu0 0.0
    %478 = vmatpush2.xpose.msra.mxu0 0.0
    %479 = vmatprep.subr.mxu0 0.0
    %480 = vmatpush2.xpose.msra.mxu0 0.0
    %481 = vmatprep.subr.mxu0 0.0
    %482 = vmatpush2.xpose.msra.mxu0 0.0
    %483 = vmatprep.subr.mxu0 0.0
    %484 = vmatpush2.xpose.msra.mxu0 0.0
    %485 = vmatprep.subr.mxu0 0.0
    %486 = vmatpush2.xpose.msra.mxu0 0.0
    %487 = vmatprep.subr.mxu0 0.0
    %488 = vmatpush2.xpose.msra.mxu0 0.0
    %489 = vmatprep.subr.mxu0 0.0
    %490 = vmatpush2.xpose.msra.mxu0 0.0
    %491 = vmatprep.subr.mxu0 0.0
    %492 = vmatpush2.xpose.msra.mxu0 0.0
    %493 = vmatprep.subr.mxu0 0.0
    %494 = vmatpush2.xpose.msra.mxu0 0.0
    %495 = vmatprep.subr.mxu0 0.0
    %496 = vmatpush2.xpose.msra.mxu0 0.0
    %497 = vmatprep.subr.mxu0 0.0
    %498 = vmatpush2.xpose.msra.mxu0 0.0
    %499 = vmatprep.subr.mxu0 0.0
    %500 = vmatpush2.xpose.msra.mxu0 0.0
    %501 = vmatprep.subr.mxu0 0.0
    %502 = vmatpush2.xpose.msra.mxu0 0.0
    %503 = vmatprep.mubr.f32.mxu0 0.0
    %504 = vmatmul.mubr.f32.gmra.mxu0 %v434
    %v505 = vpop.f32.mrf.mxu0
    %v506 = vadd.f32 0.0, %v505
    %v507 = vpop.f32.mrf.mxu0
    %508 = vdwg.mxu0
    %v509 = vmul.f32 %v506, 0.35355338
    %v510 = vsel %vm432, %v509, -inf
    %511 = vmax.xlane.f32.xlu0 %v510
    %v512 = vpop.xlane.xlu0 %511
    %v513 = vsub.f32 %v509, %v512
    %v514 = vmul.f32 %v513, 1.442695
    %v515 = vpow.pop %v514
    %v516 = vsel %vm432, %v515, 0.0
    %517 = vadd.xlane.f32.xlu0 %v516
    %v518 = vpop.xlane.xlu0 %517
    %v520 = vsel %vm432, %v515, 0
    %522 = vmatprep.subr.mxu0 0.0
    %523 = vmatpush1.msra.mxu0 0.0
    %524 = vmatprep.subr.mxu0 0.0
    %525 = vmatpush1.msra.mxu0 0.0
    %526 = vmatprep.subr.mxu0 0.0
    %527 = vmatpush1.msra.mxu0 0.0
    %528 = vmatprep.subr.mxu0 0.0
    %529 = vmatpush1.msra.mxu0 0.0
    %530 = vmatprep.subr.mxu0 0.0
    %531 = vmatpush1.msra.mxu0 0.0
    %532 = vmatprep.subr.mxu0 0.0
    %533 = vmatpush1.msra.mxu0 0.0
    %534 = vmatprep.subr.mxu0 0.0
    %535 = vmatpush1.msra.mxu0 0.0
    %536 = vmatprep.subr.mxu0 0.0
    %537 = vmatpush1.msra.mxu0 0.0
    %538 = vmatprep.subr.mxu0 0.0
    %539 = vmatpush1.msra.mxu0 0.0
    %540 = vmatprep.subr.mxu0 0.0
    %541 = vmatpush1.msra.mxu0 0.0
    %542 = vmatprep.subr.mxu0 0.0
    %543 = vmatpush1.msra.mxu0 0.0
    %544 = vmatprep.subr.mxu0 0.0
    %545 = vmatpush1.msra.mxu0 0.0
    %546 = vmatprep.subr.mxu0 0.0
    %547 = vmatpush1.msra.mxu0 0.0
    %548 = vmatprep.subr.mxu0 0.0
    %549 = vmatpush1.msra.mxu0 0.0
    %550 = vmatprep.subr.mxu0 0.0
    %551 = vmatpush1.msra.mxu0 0.0
    %552 = vmatprep.subr.mxu0 0.0
    %553 = vmatpush1.msra.mxu0 %v430
    %554 = vmatprep.subr.mxu0 0.0
    %555 = vmatpush2.msra.mxu0 0.0
    %556 = vmatprep.subr.mxu0 0.0
    %557 = vmatpush2.msra.mxu0 0.0
    %558 = vmatprep.subr.mxu0 0.0
    %559 = vmatpush2.msra.mxu0 0.0
    %560 = vmatprep.subr.mxu0 0.0
    %561 = vmatpush2.msra.mxu0 0.0
    %562 = vmatprep.subr.mxu0 0.0
    %563 = vmatpush2.msra.mxu0 0.0
    %564 = vmatprep.subr.mxu0 0.0
    %565 = vmatpush2.msra.mxu0 0.0
    %566 = vmatprep.subr.mxu0 0.0
    %567 = vmatpush2.msra.mxu0 0.0
    %568 = vmatprep.subr.mxu0 0.0
    %569 = vmatpush2.msra.mxu0 0.0
    %570 = vmatprep.subr.mxu0 0.0
    %571 = vmatpush2.msra.mxu0 0.0
    %572 = vmatprep.subr.mxu0 0.0
    %573 = vmatpush2.msra.mxu0 0.0
    %574 = vmatprep.subr.mxu0 0.0
    %575 = vmatpush2.msra.mxu0 0.0
    %576 = vmatprep.subr.mxu0 0.0
    %577 = vmatpush2.msra.mxu0 0.0
    %578 = vmatprep.subr.mxu0 0.0
    %579 = vmatpush2.msra.mxu0 0.0
    %580 = vmatprep.subr.mxu0 0.0
    %581 = vmatpush2.msra.mxu0 0.0
    %582 = vmatprep.subr.mxu0 0.0
    %583 = vmatpush2.msra.mxu0 0.0
    %584 = vmatprep.subr.mxu0 0.0
    %585 = vmatpush2.msra.mxu0 0.0
    %586 = vmatprep.mubr.f32.mxu0 0.0
    %587 = vmatmul.mubr.f32.gmra.mxu0 %v520
    %v588 = vpop.f32.mrf.mxu0
    %v589 = vadd.f32 0.0, %v588
    %v590 = vpop.f32.mrf.mxu0
    %591 = vdwg.mxu0
    %v592 = vrcp.pop %v518
    %v593 = vmul.f32 %v589, %v592
    %594 = vrot.lane.b32.xlu0 %v420, 120
    %v595 = vpop.permute.xlu0 %594
    %596 = vrot.lane.b32.xlu0 %v428, 120
    %v597 = vpop.permute.xlu0 %596
    %v598 = vsel %vm432, %v595, 0
    %v600 = vsel %vm432, %v597, 0
    %602 = vmatprep.subr.mxu0 0.0
    %603 = vmatpush1.xpose.msra.mxu0 0.0
    %604 = vmatprep.subr.mxu0 0.0
    %605 = vmatpush1.xpose.msra.mxu0 0.0
    %606 = vmatprep.subr.mxu0 0.0
    %607 = vmatpush1.xpose.msra.mxu0 0.0
    %608 = vmatprep.subr.mxu0 0.0
    %609 = vmatpush1.xpose.msra.mxu0 0.0
    %610 = vmatprep.subr.mxu0 0.0
    %611 = vmatpush1.xpose.msra.mxu0 0.0
    %612 = vmatprep.subr.mxu0 0.0
    %613 = vmatpush1.xpose.msra.mxu0 0.0
    %614 = vmatprep.subr.mxu0 0.0
    %615 = vmatpush1.xpose.msra.mxu0 0.0
    %616 = vmatprep.subr.mxu0 0.0
    %617 = vmatpush1.xpose.msra.mxu0 0.0
    %618 = vmatprep.subr.mxu0 0.0
    %619 = vmatpush1.xpose.msra.mxu0 0.0
    %620 = vmatprep.subr.mxu0 0.0
    %621 = vmatpush1.xpose.msra.mxu0 0.0
    %622 = vmatprep.subr.mxu0 0.0
    %623 = vmatpush1.xpose.msra.mxu0 0.0
    %624 = vmatprep.subr.mxu0 0.0
    %625 = vmatpush1.xpose.msra.mxu0 0.0
    %626 = vmatprep.subr.mxu0 0.0
    %627 = vmatpush1.xpose.msra.mxu0 0.0
    %628 = vmatprep.subr.mxu0 0.0
    %629 = vmatpush1.xpose.msra.mxu0 0.0
    %630 = vmatprep.subr.mxu0 0.0
    %631 = vmatpush1.xpose.msra.mxu0 0.0
    %632 = vmatprep.subr.mxu0 0.0
    %633 = vmatpush1.xpose.msra.mxu0 %v600
    %634 = vmatprep.subr.mxu0 0.0
    %635 = vmatpush2.xpose.msra.mxu0 0.0
    %636 = vmatprep.subr.mxu0 0.0
    %637 = vmatpush2.xpose.msra.mxu0 0.0
    %638 = vmatprep.subr.mxu0 0.0
    %639 = vmatpush2.xpose.msra.mxu0 0.0
    %640 = vmatprep.subr.mxu0 0.0
    %641 = vmatpush2.xpose.msra.mxu0 0.0
    %642 = vmatprep.subr.mxu0 0.0
    %643 = vmatpush2.xpose.msra.mxu0 0.0
    %644 = vmatprep.subr.mxu0 0.0
    %645 = vmatpush2.xpose.msra.mxu0 0.0
    %646 = vmatprep.subr.mxu0 0.0
    %647 = vmatpush2.xpose.msra.mxu0 0.0
    %648 = vmatprep.subr.mxu0 0.0
    %649 = vmatpush2.xpose.msra.mxu0 0.0
    %650 = vmatprep.subr.mxu0 0.0
    %651 = vmatpush2.xpose.msra.mxu0 0.0
    %652 = vmatprep.subr.mxu0 0.0
    %653 = vmatpush2.xpose.msra.mxu0 0.0
    %654 = vmatprep.subr.mxu0 0.0
    %655 = vmatpush2.xpose.msra.mxu0 0.0
    %656 = vmatprep.subr.mxu0 0.0
    %657 = vmatpush2.xpose.msra.mxu0 0.0
    %658 = vmatprep.subr.mxu0 0.0
    %659 = vmatpush2.xpose.msra.mxu0 0.0
    %660 = vmatprep.subr.mxu0 0.0
    %661 = vmatpush2.xpose.msra.mxu0 0.0
    %662 = vmatprep.subr.mxu0 0.0
    %663 = vmatpush2.xpose.msra.mxu0 0.0
    %664 = vmatprep.subr.mxu0 0.0
    %665 = vmatpush2.xpose.msra.mxu0 0.0
    %666 = vmatprep.mubr.f32.mxu0 0.0
    %667 = vmatmul.mubr.f32.gmra.mxu0 %v598
    %v668 = vpop.f32.mrf.mxu0
    %v669 = vadd.f32 0.0, %v668
    %v670 = vpop.f32.mrf.mxu0
    %671 = vdwg.mxu0
    %v672 = vmul.f32 %v669, 0.35355338
    %v673 = vsel %vm432, %v672, -inf
    %674 = vmax.xlane.f32.xlu0 %v673
    %v675 = vpop.xlane.xlu0 %674
    %v676 = vsub.f32 %v672, %v675
    %v677 = vmul.f32 %v676, 1.442695
    %v678 = vpow.pop %v677
    %v679 = vsel %vm432, %v678, 0.0
    %680 = vadd.xlane.f32.xlu0 %v679
    %v681 = vpop.xlane.xlu0 %680
    %683 = vrot.lane.b32.xlu0 %v430, 120
    %v684 = vpop.permute.xlu0 %683
    %v687 = vsel %vm432, %v678, 0
    %689 = vmatprep.subr.mxu0 0.0
    %690 = vmatpush1.msra.mxu0 0.0
    %691 = vmatprep.subr.mxu0 0.0
    %692 = vmatpush1.msra.mxu0 0.0
    %693 = vmatprep.subr.mxu0 0.0
    %694 = vmatpush1.msra.mxu0 0.0
    %695 = vmatprep.subr.mxu0 0.0
    %696 = vmatpush1.msra.mxu0 0.0
    %697 = vmatprep.subr.mxu0 0.0
    %698 = vmatpush1.msra.mxu0 0.0
    %699 = vmatprep.subr.mxu0 0.0
    %700 = vmatpush1.msra.mxu0 0.0
    %701 = vmatprep.subr.mxu0 0.0
    %702 = vmatpush1.msra.mxu0 0.0
    %703 = vmatprep.subr.mxu0 0.0
    %704 = vmatpush1.msra.mxu0 0.0
    %705 = vmatprep.subr.mxu0 0.0
    %706 = vmatpush1.msra.mxu0 0.0
    %707 = vmatprep.subr.mxu0 0.0
    %708 = vmatpush1.msra.mxu0 0.0
    %709 = vmatprep.subr.mxu0 0.0
    %710 = vmatpush1.msra.mxu0 0.0
    %711 = vmatprep.subr.mxu0 0.0
    %712 = vmatpush1.msra.mxu0 0.0
    %713 = vmatprep.subr.mxu0 0.0
    %714 = vmatpush1.msra.mxu0 0.0
    %715 = vmatprep.subr.mxu0 0.0
    %716 = vmatpush1.msra.mxu0 0.0
    %717 = vmatprep.subr.mxu0 0.0
    %718 = vmatpush1.msra.mxu0 0.0
    %719 = vmatprep.subr.mxu0 0.0
    %720 = vmatpush1.msra.mxu0 %v684
    %721 = vmatprep.subr.mxu0 0.0
    %722 = vmatpush2.msra.mxu0 0.0
    %723 = vmatprep.subr.mxu0 0.0
    %724 = vmatpush2.msra.mxu0 0.0
    %725 = vmatprep.subr.mxu0 0.0
    %726 = vmatpush2.msra.mxu0 0.0
    %727 = vmatprep.subr.mxu0 0.0
    %728 = vmatpush2.msra.mxu0 0.0
    %729 = vmatprep.subr.mxu0 0.0
    %730 = vmatpush2.msra.mxu0 0.0
    %731 = vmatprep.subr.mxu0 0.0
    %732 = vmatpush2.msra.mxu0 0.0
    %733 = vmatprep.subr.mxu0 0.0
    %734 = vmatpush2.msra.mxu0 0.0
    %735 = vmatprep.subr.mxu0 0.0
    %736 = vmatpush2.msra.mxu0 0.0
    %737 = vmatprep.subr.mxu0 0.0
    %738 = vmatpush2.msra.mxu0 0.0
    %739 = vmatprep.subr.mxu0 0.0
    %740 = vmatpush2.msra.mxu0 0.0
    %741 = vmatprep.subr.mxu0 0.0
    %742 = vmatpush2.msra.mxu0 0.0
    %743 = vmatprep.subr.mxu0 0.0
    %744 = vmatpush2.msra.mxu0 0.0
    %745 = vmatprep.subr.mxu0 0.0
    %746 = vmatpush2.msra.mxu0 0.0
    %747 = vmatprep.subr.mxu0 0.0
    %748 = vmatpush2.msra.mxu0 0.0
    %749 = vmatprep.subr.mxu0 0.0
    %750 = vmatpush2.msra.mxu0 0.0
    %751 = vmatprep.subr.mxu0 0.0
    %752 = vmatpush2.msra.mxu0 0.0
    %753 = vmatprep.mubr.f32.mxu0 0.0
    %754 = vmatmul.mubr.f32.gmra.mxu0 %v687
    %v755 = vpop.f32.mrf.mxu0
    %v756 = vadd.f32 0.0, %v755
    %v757 = vpop.f32.mrf.mxu0
    %758 = vdwg.mxu0
    %v759 = vrcp.pop %v681
    %v760 = vmul.f32 %v756, %v759
    %761 = vrot.lane.b32.xlu0 %v420, 112
    %v762 = vpop.permute.xlu0 %761
    %763 = vrot.lane.b32.xlu0 %v428, 112
    %v764 = vpop.permute.xlu0 %763
    %v765 = vsel %vm432, %v762, 0
    %v767 = vsel %vm432, %v764, 0
    %769 = vmatprep.subr.mxu0 0.0
    %770 = vmatpush1.xpose.msra.mxu0 0.0
    %771 = vmatprep.subr.mxu0 0.0
    %772 = vmatpush1.xpose.msra.mxu0 0.0
    %773 = vmatprep.subr.mxu0 0.0
    %774 = vmatpush1.xpose.msra.mxu0 0.0
    %775 = vmatprep.subr.mxu0 0.0
    %776 = vmatpush1.xpose.msra.mxu0 0.0
    %777 = vmatprep.subr.mxu0 0.0
    %778 = vmatpush1.xpose.msra.mxu0 0.0
    %779 = vmatprep.subr.mxu0 0.0
    %780 = vmatpush1.xpose.msra.mxu0 0.0
    %781 = vmatprep.subr.mxu0 0.0
    %782 = vmatpush1.xpose.msra.mxu0 0.0
    %783 = vmatprep.subr.mxu0 0.0
    %784 = vmatpush1.xpose.msra.mxu0 0.0
    %785 = vmatprep.subr.mxu0 0.0
    %786 = vmatpush1.xpose.msra.mxu0 0.0
    %787 = vmatprep.subr.mxu0 0.0
    %788 = vmatpush1.xpose.msra.mxu0 0.0
    %789 = vmatprep.subr.mxu0 0.0
    %790 = vmatpush1.xpose.msra.mxu0 0.0
    %791 = vmatprep.subr.mxu0 0.0
    %792 = vmatpush1.xpose.msra.mxu0 0.0
    %793 = vmatprep.subr.mxu0 0.0
    %794 = vmatpush1.xpose.msra.mxu0 0.0
    %795 = vmatprep.subr.mxu0 0.0
    %796 = vmatpush1.xpose.msra.mxu0 0.0
    %797 = vmatprep.subr.mxu0 0.0
    %798 = vmatpush1.xpose.msra.mxu0 0.0
    %799 = vmatprep.subr.mxu0 0.0
    %800 = vmatpush1.xpose.msra.mxu0 %v767
    %801 = vmatprep.subr.mxu0 0.0
    %802 = vmatpush2.xpose.msra.mxu0 0.0
    %803 = vmatprep.subr.mxu0 0.0
    %804 = vmatpush2.xpose.msra.mxu0 0.0
    %805 = vmatprep.subr.mxu0 0.0
    %806 = vmatpush2.xpose.msra.mxu0 0.0
    %807 = vmatprep.subr.mxu0 0.0
    %808 = vmatpush2.xpose.msra.mxu0 0.0
    %809 = vmatprep.subr.mxu0 0.0
    %810 = vmatpush2.xpose.msra.mxu0 0.0
    %811 = vmatprep.subr.mxu0 0.0
    %812 = vmatpush2.xpose.msra.mxu0 0.0
    %813 = vmatprep.subr.mxu0 0.0
    %814 = vmatpush2.xpose.msra.mxu0 0.0
    %815 = vmatprep.subr.mxu0 0.0
    %816 = vmatpush2.xpose.msra.mxu0 0.0
    %817 = vmatprep.subr.mxu0 0.0
    %818 = vmatpush2.xpose.msra.mxu0 0.0
    %819 = vmatprep.subr.mxu0 0.0
    %820 = vmatpush2.xpose.msra.mxu0 0.0
    %821 = vmatprep.subr.mxu0 0.0
    %822 = vmatpush2.xpose.msra.mxu0 0.0
    %823 = vmatprep.subr.mxu0 0.0
    %824 = vmatpush2.xpose.msra.mxu0 0.0
    %825 = vmatprep.subr.mxu0 0.0
    %826 = vmatpush2.xpose.msra.mxu0 0.0
    %827 = vmatprep.subr.mxu0 0.0
    %828 = vmatpush2.xpose.msra.mxu0 0.0
    %829 = vmatprep.subr.mxu0 0.0
    %830 = vmatpush2.xpose.msra.mxu0 0.0
    %831 = vmatprep.subr.mxu0 0.0
    %832 = vmatpush2.xpose.msra.mxu0 0.0
    %833 = vmatprep.mubr.f32.mxu0 0.0
    %834 = vmatmul.mubr.f32.gmra.mxu0 %v765
    %v835 = vpop.f32.mrf.mxu0
    %v836 = vadd.f32 0.0, %v835
    %v837 = vpop.f32.mrf.mxu0
    %838 = vdwg.mxu0
    %v839 = vmul.f32 %v836, 0.35355338
    %v840 = vsel %vm432, %v839, -inf
    %841 = vmax.xlane.f32.xlu0 %v840
    %v842 = vpop.xlane.xlu0 %841
    %v843 = vsub.f32 %v839, %v842
    %v844 = vmul.f32 %v843, 1.442695
    %v845 = vpow.pop %v844
    %v846 = vsel %vm432, %v845, 0.0
    %847 = vadd.xlane.f32.xlu0 %v846
    %v848 = vpop.xlane.xlu0 %847
    %849 = vrot.lane.b32.xlu0 %v430, 112
    %v850 = vpop.permute.xlu0 %849
    %v853 = vsel %vm432, %v845, 0
    %855 = vmatprep.subr.mxu0 0.0
    %856 = vmatpush1.msra.mxu0 0.0
    %857 = vmatprep.subr.mxu0 0.0
    %858 = vmatpush1.msra.mxu0 0.0
    %859 = vmatprep.subr.mxu0 0.0
    %860 = vmatpush1.msra.mxu0 0.0
    %861 = vmatprep.subr.mxu0 0.0
    %862 = vmatpush1.msra.mxu0 0.0
    %863 = vmatprep.subr.mxu0 0.0
    %864 = vmatpush1.msra.mxu0 0.0
    %865 = vmatprep.subr.mxu0 0.0
    %866 = vmatpush1.msra.mxu0 0.0
    %867 = vmatprep.subr.mxu0 0.0
    %868 = vmatpush1.msra.mxu0 0.0
    %869 = vmatprep.subr.mxu0 0.0
    %870 = vmatpush1.msra.mxu0 0.0
    %871 = vmatprep.subr.mxu0 0.0
    %872 = vmatpush1.msra.mxu0 0.0
    %873 = vmatprep.subr.mxu0 0.0
    %874 = vmatpush1.msra.mxu0 0.0
    %875 = vmatprep.subr.mxu0 0.0
    %876 = vmatpush1.msra.mxu0 0.0
    %877 = vmatprep.subr.mxu0 0.0
    %878 = vmatpush1.msra.mxu0 0.0
    %879 = vmatprep.subr.mxu0 0.0
    %880 = vmatpush1.msra.mxu0 0.0
    %881 = vmatprep.subr.mxu0 0.0
    %882 = vmatpush1.msra.mxu0 0.0
    %883 = vmatprep.subr.mxu0 0.0
    %884 = vmatpush1.msra.mxu0 0.0
    %885 = vmatprep.subr.mxu0 0.0
    %886 = vmatpush1.msra.mxu0 %v850
    %887 = vmatprep.subr.mxu0 0.0
    %888 = vmatpush2.msra.mxu0 0.0
    %889 = vmatprep.subr.mxu0 0.0
    %890 = vmatpush2.msra.mxu0 0.0
    %891 = vmatprep.subr.mxu0 0.0
    %892 = vmatpush2.msra.mxu0 0.0
    %893 = vmatprep.subr.mxu0 0.0
    %894 = vmatpush2.msra.mxu0 0.0
    %895 = vmatprep.subr.mxu0 0.0
    %896 = vmatpush2.msra.mxu0 0.0
    %897 = vmatprep.subr.mxu0 0.0
    %898 = vmatpush2.msra.mxu0 0.0
    %899 = vmatprep.subr.mxu0 0.0
    %900 = vmatpush2.msra.mxu0 0.0
    %901 = vmatprep.subr.mxu0 0.0
    %902 = vmatpush2.msra.mxu0 0.0
    %903 = vmatprep.subr.mxu0 0.0
    %904 = vmatpush2.msra.mxu0 0.0
    %905 = vmatprep.subr.mxu0 0.0
    %906 = vmatpush2.msra.mxu0 0.0
    %907 = vmatprep.subr.mxu0 0.0
    %908 = vmatpush2.msra.mxu0 0.0
    %909 = vmatprep.subr.mxu0 0.0
    %910 = vmatpush2.msra.mxu0 0.0
    %911 = vmatprep.subr.mxu0 0.0
    %912 = vmatpush2.msra.mxu0 0.0
    %913 = vmatprep.subr.mxu0 0.0
    %914 = vmatpush2.msra.mxu0 0.0
    %915 = vmatprep.subr.mxu0 0.0
    %916 = vmatpush2.msra.mxu0 0.0
    %917 = vmatprep.subr.mxu0 0.0
    %918 = vmatpush2.msra.mxu0 0.0
    %919 = vmatprep.mubr.f32.mxu0 0.0
    %920 = vmatmul.mubr.f32.gmra.mxu0 %v853
    %v921 = vpop.f32.mrf.mxu0
    %v922 = vadd.f32 0.0, %v921
    %v923 = vpop.f32.mrf.mxu0
    %924 = vdwg.mxu0
    %v925 = vrcp.pop %v848
    %v926 = vmul.f32 %v922, %v925
    %927 = vrot.lane.b32.xlu0 %v420, 104
    %v928 = vpop.permute.xlu0 %927
    %929 = vrot.lane.b32.xlu0 %v428, 104
    %v930 = vpop.permute.xlu0 %929
    %v931 = vsel %vm432, %v928, 0
    %v933 = vsel %vm432, %v930, 0
    %935 = vmatprep.subr.mxu0 0.0
    %936 = vmatpush1.xpose.msra.mxu0 0.0
    %937 = vmatprep.subr.mxu0 0.0
    %938 = vmatpush1.xpose.msra.mxu0 0.0
    %939 = vmatprep.subr.mxu0 0.0
    %940 = vmatpush1.xpose.msra.mxu0 0.0
    %941 = vmatprep.subr.mxu0 0.0
    %942 = vmatpush1.xpose.msra.mxu0 0.0
    %943 = vmatprep.subr.mxu0 0.0
    %944 = vmatpush1.xpose.msra.mxu0 0.0
    %945 = vmatprep.subr.mxu0 0.0
    %946 = vmatpush1.xpose.msra.mxu0 0.0
    %947 = vmatprep.subr.mxu0 0.0
    %948 = vmatpush1.xpose.msra.mxu0 0.0
    %949 = vmatprep.subr.mxu0 0.0
    %950 = vmatpush1.xpose.msra.mxu0 0.0
    %951 = vmatprep.subr.mxu0 0.0
    %952 = vmatpush1.xpose.msra.mxu0 0.0
    %953 = vmatprep.subr.mxu0 0.0
    %954 = vmatpush1.xpose.msra.mxu0 0.0
    %955 = vmatprep.subr.mxu0 0.0
    %956 = vmatpush1.xpose.msra.mxu0 0.0
    %957 = vmatprep.subr.mxu0 0.0
    %958 = vmatpush1.xpose.msra.mxu0 0.0
    %959 = vmatprep.subr.mxu0 0.0
    %960 = vmatpush1.xpose.msra.mxu0 0.0
    %961 = vmatprep.subr.mxu0 0.0
    %962 = vmatpush1.xpose.msra.mxu0 0.0
    %963 = vmatprep.subr.mxu0 0.0
    %964 = vmatpush1.xpose.msra.mxu0 0.0
    %965 = vmatprep.subr.mxu0 0.0
    %966 = vmatpush1.xpose.msra.mxu0 %v933
    %967 = vmatprep.subr.mxu0 0.0
    %968 = vmatpush2.xpose.msra.mxu0 0.0
    %969 = vmatprep.subr.mxu0 0.0
    %970 = vmatpush2.xpose.msra.mxu0 0.0
    %971 = vmatprep.subr.mxu0 0.0
    %972 = vmatpush2.xpose.msra.mxu0 0.0
    %973 = vmatprep.subr.mxu0 0.0
    %974 = vmatpush2.xpose.msra.mxu0 0.0
    %975 = vmatprep.subr.mxu0 0.0
    %976 = vmatpush2.xpose.msra.mxu0 0.0
    %977 = vmatprep.subr.mxu0 0.0
    %978 = vmatpush2.xpose.msra.mxu0 0.0
    %979 = vmatprep.subr.mxu0 0.0
    %980 = vmatpush2.xpose.msra.mxu0 0.0
    %981 = vmatprep.subr.mxu0 0.0
    %982 = vmatpush2.xpose.msra.mxu0 0.0
    %983 = vmatprep.subr.mxu0 0.0
    %984 = vmatpush2.xpose.msra.mxu0 0.0
    %985 = vmatprep.subr.mxu0 0.0
    %986 = vmatpush2.xpose.msra.mxu0 0.0
    %987 = vmatprep.subr.mxu0 0.0
    %988 = vmatpush2.xpose.msra.mxu0 0.0
    %989 = vmatprep.subr.mxu0 0.0
    %990 = vmatpush2.xpose.msra.mxu0 0.0
    %991 = vmatprep.subr.mxu0 0.0
    %992 = vmatpush2.xpose.msra.mxu0 0.0
    %993 = vmatprep.subr.mxu0 0.0
    %994 = vmatpush2.xpose.msra.mxu0 0.0
    %995 = vmatprep.subr.mxu0 0.0
    %996 = vmatpush2.xpose.msra.mxu0 0.0
    %997 = vmatprep.subr.mxu0 0.0
    %998 = vmatpush2.xpose.msra.mxu0 0.0
    %999 = vmatprep.mubr.f32.mxu0 0.0
    %1000 = vmatmul.mubr.f32.gmra.mxu0 %v931
    %v1001 = vpop.f32.mrf.mxu0
    %v1002 = vadd.f32 0.0, %v1001
    %v1003 = vpop.f32.mrf.mxu0
    %1004 = vdwg.mxu0
    %v1005 = vmul.f32 %v1002, 0.35355338
    %v1006 = vsel %vm432, %v1005, -inf
    %1007 = vmax.xlane.f32.xlu0 %v1006
    %v1008 = vpop.xlane.xlu0 %1007
    %v1009 = vsub.f32 %v1005, %v1008
    %v1010 = vmul.f32 %v1009, 1.442695
    %v1011 = vpow.pop %v1010
    %v1012 = vsel %vm432, %v1011, 0.0
    %1013 = vadd.xlane.f32.xlu0 %v1012
    %v1014 = vpop.xlane.xlu0 %1013
    %1015 = vrot.lane.b32.xlu0 %v430, 104
    %v1016 = vpop.permute.xlu0 %1015
    %v1019 = vsel %vm432, %v1011, 0
    %1021 = vmatprep.subr.mxu0 0.0
    %1022 = vmatpush1.msra.mxu0 0.0
    %1023 = vmatprep.subr.mxu0 0.0
    %1024 = vmatpush1.msra.mxu0 0.0
    %1025 = vmatprep.subr.mxu0 0.0
    %1026 = vmatpush1.msra.mxu0 0.0
    %1027 = vmatprep.subr.mxu0 0.0
    %1028 = vmatpush1.msra.mxu0 0.0
    %1029 = vmatprep.subr.mxu0 0.0
    %1030 = vmatpush1.msra.mxu0 0.0
    %1031 = vmatprep.subr.mxu0 0.0
    %1032 = vmatpush1.msra.mxu0 0.0
    %1033 = vmatprep.subr.mxu0 0.0
    %1034 = vmatpush1.msra.mxu0 0.0
    %1035 = vmatprep.subr.mxu0 0.0
    %1036 = vmatpush1.msra.mxu0 0.0
    %1037 = vmatprep.subr.mxu0 0.0
    %1038 = vmatpush1.msra.mxu0 0.0
    %1039 = vmatprep.subr.mxu0 0.0
    %1040 = vmatpush1.msra.mxu0 0.0
    %1041 = vmatprep.subr.mxu0 0.0
    %1042 = vmatpush1.msra.mxu0 0.0
    %1043 = vmatprep.subr.mxu0 0.0
    %1044 = vmatpush1.msra.mxu0 0.0
    %1045 = vmatprep.subr.mxu0 0.0
    %1046 = vmatpush1.msra.mxu0 0.0
    %1047 = vmatprep.subr.mxu0 0.0
    %1048 = vmatpush1.msra.mxu0 0.0
    %1049 = vmatprep.subr.mxu0 0.0
    %1050 = vmatpush1.msra.mxu0 0.0
    %1051 = vmatprep.subr.mxu0 0.0
    %1052 = vmatpush1.msra.mxu0 %v1016
    %1053 = vmatprep.subr.mxu0 0.0
    %1054 = vmatpush2.msra.mxu0 0.0
    %1055 = vmatprep.subr.mxu0 0.0
    %1056 = vmatpush2.msra.mxu0 0.0
    %1057 = vmatprep.subr.mxu0 0.0
    %1058 = vmatpush2.msra.mxu0 0.0
    %1059 = vmatprep.subr.mxu0 0.0
    %1060 = vmatpush2.msra.mxu0 0.0
    %1061 = vmatprep.subr.mxu0 0.0
    %1062 = vmatpush2.msra.mxu0 0.0
    %1063 = vmatprep.subr.mxu0 0.0
    %1064 = vmatpush2.msra.mxu0 0.0
    %1065 = vmatprep.subr.mxu0 0.0
    %1066 = vmatpush2.msra.mxu0 0.0
    %1067 = vmatprep.subr.mxu0 0.0
    %1068 = vmatpush2.msra.mxu0 0.0
    %1069 = vmatprep.subr.mxu0 0.0
    %1070 = vmatpush2.msra.mxu0 0.0
    %1071 = vmatprep.subr.mxu0 0.0
    %1072 = vmatpush2.msra.mxu0 0.0
    %1073 = vmatprep.subr.mxu0 0.0
    %1074 = vmatpush2.msra.mxu0 0.0
    %1075 = vmatprep.subr.mxu0 0.0
    %1076 = vmatpush2.msra.mxu0 0.0
    %1077 = vmatprep.subr.mxu0 0.0
    %1078 = vmatpush2.msra.mxu0 0.0
    %1079 = vmatprep.subr.mxu0 0.0
    %1080 = vmatpush2.msra.mxu0 0.0
    %1081 = vmatprep.subr.mxu0 0.0
    %1082 = vmatpush2.msra.mxu0 0.0
    %1083 = vmatprep.subr.mxu0 0.0
    %1084 = vmatpush2.msra.mxu0 0.0
    %1085 = vmatprep.mubr.f32.mxu0 0.0
    %1086 = vmatmul.mubr.f32.gmra.mxu0 %v1019
    %v1087 = vpop.f32.mrf.mxu0
    %v1088 = vadd.f32 0.0, %v1087
    %v1089 = vpop.f32.mrf.mxu0
    %1090 = vdwg.mxu0
    %v1091 = vrcp.pop %v1014
    %v1092 = vmul.f32 %v1088, %v1091
    %1094 = vrot.lane.b32.xlu0 %v760, 8
    %v1095 = vpop.permute.xlu0 %1094
    %1098 = vrot.lane.b32.xlu0 %v926, 16
    %v1099 = vpop.permute.xlu0 %1098
    %1102 = vrot.lane.b32.xlu0 %v1092, 24
    %v1103 = vpop.permute.xlu0 %1102
    %v1105 = vsel %vm432, %v593, %v1095
    %vm1106 = vcmask 130048
    %v1107 = vsel %vm1106, %v1105, %v1099
    %vm1108 = vcmask 195584
    %v1109 = vsel %vm1108, %v1107, %v1103
    %v1111 = vsel %vm432, %v425, 0
    %v1114 = vsel %vm432, %v429, 0
    %1116 = vmatprep.subr.mxu0 0.0
    %1117 = vmatpush1.xpose.msra.mxu0 0.0
    %1118 = vmatprep.subr.mxu0 0.0
    %1119 = vmatpush1.xpose.msra.mxu0 0.0
    %1120 = vmatprep.subr.mxu0 0.0
    %1121 = vmatpush1.xpose.msra.mxu0 0.0
    %1122 = vmatprep.subr.mxu0 0.0
    %1123 = vmatpush1.xpose.msra.mxu0 0.0
    %1124 = vmatprep.subr.mxu0 0.0
    %1125 = vmatpush1.xpose.msra.mxu0 0.0
    %1126 = vmatprep.subr.mxu0 0.0
    %1127 = vmatpush1.xpose.msra.mxu0 0.0
    %1128 = vmatprep.subr.mxu0 0.0
    %1129 = vmatpush1.xpose.msra.mxu0 0.0
    %1130 = vmatprep.subr.mxu0 0.0
    %1131 = vmatpush1.xpose.msra.mxu0 0.0
    %1132 = vmatprep.subr.mxu0 0.0
    %1133 = vmatpush1.xpose.msra.mxu0 0.0
    %1134 = vmatprep.subr.mxu0 0.0
    %1135 = vmatpush1.xpose.msra.mxu0 0.0
    %1136 = vmatprep.subr.mxu0 0.0
    %1137 = vmatpush1.xpose.msra.mxu0 0.0
    %1138 = vmatprep.subr.mxu0 0.0
    %1139 = vmatpush1.xpose.msra.mxu0 0.0
    %1140 = vmatprep.subr.mxu0 0.0
    %1141 = vmatpush1.xpose.msra.mxu0 0.0
    %1142 = vmatprep.subr.mxu0 0.0
    %1143 = vmatpush1.xpose.msra.mxu0 0.0
    %1144 = vmatprep.subr.mxu0 0.0
    %1145 = vmatpush1.xpose.msra.mxu0 0.0
    %1146 = vmatprep.subr.mxu0 0.0
    %1147 = vmatpush1.xpose.msra.mxu0 %v1114
    %1148 = vmatprep.subr.mxu0 0.0
    %1149 = vmatpush2.xpose.msra.mxu0 0.0
    %1150 = vmatprep.subr.mxu0 0.0
    %1151 = vmatpush2.xpose.msra.mxu0 0.0
    %1152 = vmatprep.subr.mxu0 0.0
    %1153 = vmatpush2.xpose.msra.mxu0 0.0
    %1154 = vmatprep.subr.mxu0 0.0
    %1155 = vmatpush2.xpose.msra.mxu0 0.0
    %1156 = vmatprep.subr.mxu0 0.0
    %1157 = vmatpush2.xpose.msra.mxu0 0.0
    %1158 = vmatprep.subr.mxu0 0.0
    %1159 = vmatpush2.xpose.msra.mxu0 0.0
    %1160 = vmatprep.subr.mxu0 0.0
    %1161 = vmatpush2.xpose.msra.mxu0 0.0
    %1162 = vmatprep.subr.mxu0 0.0
    %1163 = vmatpush2.xpose.msra.mxu0 0.0
    %1164 = vmatprep.subr.mxu0 0.0
    %1165 = vmatpush2.xpose.msra.mxu0 0.0
    %1166 = vmatprep.subr.mxu0 0.0
    %1167 = vmatpush2.xpose.msra.mxu0 0.0
    %1168 = vmatprep.subr.mxu0 0.0
    %1169 = vmatpush2.xpose.msra.mxu0 0.0
    %1170 = vmatprep.subr.mxu0 0.0
    %1171 = vmatpush2.xpose.msra.mxu0 0.0
    %1172 = vmatprep.subr.mxu0 0.0
    %1173 = vmatpush2.xpose.msra.mxu0 0.0
    %1174 = vmatprep.subr.mxu0 0.0
    %1175 = vmatpush2.xpose.msra.mxu0 0.0
    %1176 = vmatprep.subr.mxu0 0.0
    %1177 = vmatpush2.xpose.msra.mxu0 0.0
    %1178 = vmatprep.subr.mxu0 0.0
    %1179 = vmatpush2.xpose.msra.mxu0 0.0
    %1180 = vmatprep.mubr.f32.mxu0 0.0
    %1181 = vmatmul.mubr.f32.gmra.mxu0 %v1111
    %v1182 = vpop.f32.mrf.mxu0
    %v1183 = vadd.f32 0.0, %v1182
    %v1184 = vpop.f32.mrf.mxu0
    %1185 = vdwg.mxu0
    %v1186 = vmul.f32 %v1183, 0.35355338
    %v1187 = vsel %vm432, %v1186, -inf
    %1188 = vmax.xlane.f32.xlu0 %v1187
    %v1189 = vpop.xlane.xlu0 %1188
    %v1190 = vsub.f32 %v1186, %v1189
    %v1191 = vmul.f32 %v1190, 1.442695
    %v1192 = vpow.pop %v1191
    %v1193 = vsel %vm432, %v1192, 0.0
    %1194 = vadd.xlane.f32.xlu0 %v1193
    %v1195 = vpop.xlane.xlu0 %1194
    %v1197 = vsel %vm432, %v1192, 0
    %1199 = vmatprep.subr.mxu0 0.0
    %1200 = vmatpush1.msra.mxu0 0.0
    %1201 = vmatprep.subr.mxu0 0.0
    %1202 = vmatpush1.msra.mxu0 0.0
    %1203 = vmatprep.subr.mxu0 0.0
    %1204 = vmatpush1.msra.mxu0 0.0
    %1205 = vmatprep.subr.mxu0 0.0
    %1206 = vmatpush1.msra.mxu0 0.0
    %1207 = vmatprep.subr.mxu0 0.0
    %1208 = vmatpush1.msra.mxu0 0.0
    %1209 = vmatprep.subr.mxu0 0.0
    %1210 = vmatpush1.msra.mxu0 0.0
    %1211 = vmatprep.subr.mxu0 0.0
    %1212 = vmatpush1.msra.mxu0 0.0
    %1213 = vmatprep.subr.mxu0 0.0
    %1214 = vmatpush1.msra.mxu0 0.0
    %1215 = vmatprep.subr.mxu0 0.0
    %1216 = vmatpush1.msra.mxu0 0.0
    %1217 = vmatprep.subr.mxu0 0.0
    %1218 = vmatpush1.msra.mxu0 0.0
    %1219 = vmatprep.subr.mxu0 0.0
    %1220 = vmatpush1.msra.mxu0 0.0
    %1221 = vmatprep.subr.mxu0 0.0
    %1222 = vmatpush1.msra.mxu0 0.0
    %1223 = vmatprep.subr.mxu0 0.0
    %1224 = vmatpush1.msra.mxu0 0.0
    %1225 = vmatprep.subr.mxu0 0.0
    %1226 = vmatpush1.msra.mxu0 0.0
    %1227 = vmatprep.subr.mxu0 0.0
    %1228 = vmatpush1.msra.mxu0 0.0
    %1229 = vmatprep.subr.mxu0 0.0
    %1230 = vmatpush1.msra.mxu0 %v431
    %1231 = vmatprep.subr.mxu0 0.0
    %1232 = vmatpush2.msra.mxu0 0.0
    %1233 = vmatprep.subr.mxu0 0.0
    %1234 = vmatpush2.msra.mxu0 0.0
    %1235 = vmatprep.subr.mxu0 0.0
    %1236 = vmatpush2.msra.mxu0 0.0
    %1237 = vmatprep.subr.mxu0 0.0
    %1238 = vmatpush2.msra.mxu0 0.0
    %1239 = vmatprep.subr.mxu0 0.0
    %1240 = vmatpush2.msra.mxu0 0.0
    %1241 = vmatprep.subr.mxu0 0.0
    %1242 = vmatpush2.msra.mxu0 0.0
    %1243 = vmatprep.subr.mxu0 0.0
    %1244 = vmatpush2.msra.mxu0 0.0
    %1245 = vmatprep.subr.mxu0 0.0
    %1246 = vmatpush2.msra.mxu0 0.0
    %1247 = vmatprep.subr.mxu0 0.0
    %1248 = vmatpush2.msra.mxu0 0.0
    %1249 = vmatprep.subr.mxu0 0.0
    %1250 = vmatpush2.msra.mxu0 0.0
    %1251 = vmatprep.subr.mxu0 0.0
    %1252 = vmatpush2.msra.mxu0 0.0
    %1253 = vmatprep.subr.mxu0 0.0
    %1254 = vmatpush2.msra.mxu0 0.0
    %1255 = vmatprep.subr.mxu0 0.0
    %1256 = vmatpush2.msra.mxu0 0.0
    %1257 = vmatprep.subr.mxu0 0.0
    %1258 = vmatpush2.msra.mxu0 0.0
    %1259 = vmatprep.subr.mxu0 0.0
    %1260 = vmatpush2.msra.mxu0 0.0
    %1261 = vmatprep.subr.mxu0 0.0
    %1262 = vmatpush2.msra.mxu0 0.0
    %1263 = vmatprep.mubr.f32.mxu0 0.0
    %1264 = vmatmul.mubr.f32.gmra.mxu0 %v1197
    %v1265 = vpop.f32.mrf.mxu0
    %v1266 = vadd.f32 0.0, %v1265
    %v1267 = vpop.f32.mrf.mxu0
    %1268 = vdwg.mxu0
    %v1269 = vrcp.pop %v1195
    %v1270 = vmul.f32 %v1266, %v1269
    %1271 = vrot.lane.b32.xlu0 %v425, 120
    %v1272 = vpop.permute.xlu0 %1271
    %1273 = vrot.lane.b32.xlu0 %v429, 120
    %v1274 = vpop.permute.xlu0 %1273
    %v1275 = vsel %vm432, %v1272, 0
    %v1277 = vsel %vm432, %v1274, 0
    %1279 = vmatprep.subr.mxu0 0.0
    %1280 = vmatpush1.xpose.msra.mxu0 0.0
    %1281 = vmatprep.subr.mxu0 0.0
    %1282 = vmatpush1.xpose.msra.mxu0 0.0
    %1283 = vmatprep.subr.mxu0 0.0
    %1284 = vmatpush1.xpose.msra.mxu0 0.0
    %1285 = vmatprep.subr.mxu0 0.0
    %1286 = vmatpush1.xpose.msra.mxu0 0.0
    %1287 = vmatprep.subr.mxu0 0.0
    %1288 = vmatpush1.xpose.msra.mxu0 0.0
    %1289 = vmatprep.subr.mxu0 0.0
    %1290 = vmatpush1.xpose.msra.mxu0 0.0
    %1291 = vmatprep.subr.mxu0 0.0
    %1292 = vmatpush1.xpose.msra.mxu0 0.0
    %1293 = vmatprep.subr.mxu0 0.0
    %1294 = vmatpush1.xpose.msra.mxu0 0.0
    %1295 = vmatprep.subr.mxu0 0.0
    %1296 = vmatpush1.xpose.msra.mxu0 0.0
    %1297 = vmatprep.subr.mxu0 0.0
    %1298 = vmatpush1.xpose.msra.mxu0 0.0
    %1299 = vmatprep.subr.mxu0 0.0
    %1300 = vmatpush1.xpose.msra.mxu0 0.0
    %1301 = vmatprep.subr.mxu0 0.0
    %1302 = vmatpush1.xpose.msra.mxu0 0.0
    %1303 = vmatprep.subr.mxu0 0.0
    %1304 = vmatpush1.xpose.msra.mxu0 0.0
    %1305 = vmatprep.subr.mxu0 0.0
    %1306 = vmatpush1.xpose.msra.mxu0 0.0
    %1307 = vmatprep.subr.mxu0 0.0
    %1308 = vmatpush1.xpose.msra.mxu0 0.0
    %1309 = vmatprep.subr.mxu0 0.0
    %1310 = vmatpush1.xpose.msra.mxu0 %v1277
    %1311 = vmatprep.subr.mxu0 0.0
    %1312 = vmatpush2.xpose.msra.mxu0 0.0
    %1313 = vmatprep.subr.mxu0 0.0
    %1314 = vmatpush2.xpose.msra.mxu0 0.0
    %1315 = vmatprep.subr.mxu0 0.0
    %1316 = vmatpush2.xpose.msra.mxu0 0.0
    %1317 = vmatprep.subr.mxu0 0.0
    %1318 = vmatpush2.xpose.msra.mxu0 0.0
    %1319 = vmatprep.subr.mxu0 0.0
    %1320 = vmatpush2.xpose.msra.mxu0 0.0
    %1321 = vmatprep.subr.mxu0 0.0
    %1322 = vmatpush2.xpose.msra.mxu0 0.0
    %1323 = vmatprep.subr.mxu0 0.0
    %1324 = vmatpush2.xpose.msra.mxu0 0.0
    %1325 = vmatprep.subr.mxu0 0.0
    %1326 = vmatpush2.xpose.msra.mxu0 0.0
    %1327 = vmatprep.subr.mxu0 0.0
    %1328 = vmatpush2.xpose.msra.mxu0 0.0
    %1329 = vmatprep.subr.mxu0 0.0
    %1330 = vmatpush2.xpose.msra.mxu0 0.0
    %1331 = vmatprep.subr.mxu0 0.0
    %1332 = vmatpush2.xpose.msra.mxu0 0.0
    %1333 = vmatprep.subr.mxu0 0.0
    %1334 = vmatpush2.xpose.msra.mxu0 0.0
    %1335 = vmatprep.subr.mxu0 0.0
    %1336 = vmatpush2.xpose.msra.mxu0 0.0
    %1337 = vmatprep.subr.mxu0 0.0
    %1338 = vmatpush2.xpose.msra.mxu0 0.0
    %1339 = vmatprep.subr.mxu0 0.0
    %1340 = vmatpush2.xpose.msra.mxu0 0.0
    %1341 = vmatprep.subr.mxu0 0.0
    %1342 = vmatpush2.xpose.msra.mxu0 0.0
    %1343 = vmatprep.mubr.f32.mxu0 0.0
    %1344 = vmatmul.mubr.f32.gmra.mxu0 %v1275
    %v1345 = vpop.f32.mrf.mxu0
    %v1346 = vadd.f32 0.0, %v1345
    %v1347 = vpop.f32.mrf.mxu0
    %1348 = vdwg.mxu0
    %v1349 = vmul.f32 %v1346, 0.35355338
    %v1350 = vsel %vm432, %v1349, -inf
    %1351 = vmax.xlane.f32.xlu0 %v1350
    %v1352 = vpop.xlane.xlu0 %1351
    %v1353 = vsub.f32 %v1349, %v1352
    %v1354 = vmul.f32 %v1353, 1.442695
    %v1355 = vpow.pop %v1354
    %v1356 = vsel %vm432, %v1355, 0.0
    %1357 = vadd.xlane.f32.xlu0 %v1356
    %v1358 = vpop.xlane.xlu0 %1357
    %1360 = vrot.lane.b32.xlu0 %v431, 120
    %v1361 = vpop.permute.xlu0 %1360
    %v1364 = vsel %vm432, %v1355, 0
    %1366 = vmatprep.subr.mxu0 0.0
    %1367 = vmatpush1.msra.mxu0 0.0
    %1368 = vmatprep.subr.mxu0 0.0
    %1369 = vmatpush1.msra.mxu0 0.0
    %1370 = vmatprep.subr.mxu0 0.0
    %1371 = vmatpush1.msra.mxu0 0.0
    %1372 = vmatprep.subr.mxu0 0.0
    %1373 = vmatpush1.msra.mxu0 0.0
    %1374 = vmatprep.subr.mxu0 0.0
    %1375 = vmatpush1.msra.mxu0 0.0
    %1376 = vmatprep.subr.mxu0 0.0
    %1377 = vmatpush1.msra.mxu0 0.0
    %1378 = vmatprep.subr.mxu0 0.0
    %1379 = vmatpush1.msra.mxu0 0.0
    %1380 = vmatprep.subr.mxu0 0.0
    %1381 = vmatpush1.msra.mxu0 0.0
    %1382 = vmatprep.subr.mxu0 0.0
    %1383 = vmatpush1.msra.mxu0 0.0
    %1384 = vmatprep.subr.mxu0 0.0
    %1385 = vmatpush1.msra.mxu0 0.0
    %1386 = vmatprep.subr.mxu0 0.0
    %1387 = vmatpush1.msra.mxu0 0.0
    %1388 = vmatprep.subr.mxu0 0.0
    %1389 = vmatpush1.msra.mxu0 0.0
    %1390 = vmatprep.subr.mxu0 0.0
    %1391 = vmatpush1.msra.mxu0 0.0
    %1392 = vmatprep.subr.mxu0 0.0
    %1393 = vmatpush1.msra.mxu0 0.0
    %1394 = vmatprep.subr.mxu0 0.0
    %1395 = vmatpush1.msra.mxu0 0.0
    %1396 = vmatprep.subr.mxu0 0.0
    %1397 = vmatpush1.msra.mxu0 %v1361
    %1398 = vmatprep.subr.mxu0 0.0
    %1399 = vmatpush2.msra.mxu0 0.0
    %1400 = vmatprep.subr.mxu0 0.0
    %1401 = vmatpush2.msra.mxu0 0.0
    %1402 = vmatprep.subr.mxu0 0.0
    %1403 = vmatpush2.msra.mxu0 0.0
    %1404 = vmatprep.subr.mxu0 0.0
    %1405 = vmatpush2.msra.mxu0 0.0
    %1406 = vmatprep.subr.mxu0 0.0
    %1407 = vmatpush2.msra.mxu0 0.0
    %1408 = vmatprep.subr.mxu0 0.0
    %1409 = vmatpush2.msra.mxu0 0.0
    %1410 = vmatprep.subr.mxu0 0.0
    %1411 = vmatpush2.msra.mxu0 0.0
    %1412 = vmatprep.subr.mxu0 0.0
    %1413 = vmatpush2.msra.mxu0 0.0
    %1414 = vmatprep.subr.mxu0 0.0
    %1415 = vmatpush2.msra.mxu0 0.0
    %1416 = vmatprep.subr.mxu0 0.0
    %1417 = vmatpush2.msra.mxu0 0.0
    %1418 = vmatprep.subr.mxu0 0.0
    %1419 = vmatpush2.msra.mxu0 0.0
    %1420 = vmatprep.subr.mxu0 0.0
    %1421 = vmatpush2.msra.mxu0 0.0
    %1422 = vmatprep.subr.mxu0 0.0
    %1423 = vmatpush2.msra.mxu0 0.0
    %1424 = vmatprep.subr.mxu0 0.0
    %1425 = vmatpush2.msra.mxu0 0.0
    %1426 = vmatprep.subr.mxu0 0.0
    %1427 = vmatpush2.msra.mxu0 0.0
    %1428 = vmatprep.subr.mxu0 0.0
    %1429 = vmatpush2.msra.mxu0 0.0
    %1430 = vmatprep.mubr.f32.mxu0 0.0
    %1431 = vmatmul.mubr.f32.gmra.mxu0 %v1364
    %v1432 = vpop.f32.mrf.mxu0
    %v1433 = vadd.f32 0.0, %v1432
    %v1434 = vpop.f32.mrf.mxu0
    %1435 = vdwg.mxu0
    %v1436 = vrcp.pop %v1358
    %v1437 = vmul.f32 %v1433, %v1436
    %1438 = vrot.lane.b32.xlu0 %v425, 112
    %v1439 = vpop.permute.xlu0 %1438
    %1440 = vrot.lane.b32.xlu0 %v429, 112
    %v1441 = vpop.permute.xlu0 %1440
    %v1442 = vsel %vm432, %v1439, 0
    %v1444 = vsel %vm432, %v1441, 0
    %1446 = vmatprep.subr.mxu0 0.0
    %1447 = vmatpush1.xpose.msra.mxu0 0.0
    %1448 = vmatprep.subr.mxu0 0.0
    %1449 = vmatpush1.xpose.msra.mxu0 0.0
    %1450 = vmatprep.subr.mxu0 0.0
    %1451 = vmatpush1.xpose.msra.mxu0 0.0
    %1452 = vmatprep.subr.mxu0 0.0
    %1453 = vmatpush1.xpose.msra.mxu0 0.0
    %1454 = vmatprep.subr.mxu0 0.0
    %1455 = vmatpush1.xpose.msra.mxu0 0.0
    %1456 = vmatprep.subr.mxu0 0.0
    %1457 = vmatpush1.xpose.msra.mxu0 0.0
    %1458 = vmatprep.subr.mxu0 0.0
    %1459 = vmatpush1.xpose.msra.mxu0 0.0
    %1460 = vmatprep.subr.mxu0 0.0
    %1461 = vmatpush1.xpose.msra.mxu0 0.0
    %1462 = vmatprep.subr.mxu0 0.0
    %1463 = vmatpush1.xpose.msra.mxu0 0.0
    %1464 = vmatprep.subr.mxu0 0.0
    %1465 = vmatpush1.xpose.msra.mxu0 0.0
    %1466 = vmatprep.subr.mxu0 0.0
    %1467 = vmatpush1.xpose.msra.mxu0 0.0
    %1468 = vmatprep.subr.mxu0 0.0
    %1469 = vmatpush1.xpose.msra.mxu0 0.0
    %1470 = vmatprep.subr.mxu0 0.0
    %1471 = vmatpush1.xpose.msra.mxu0 0.0
    %1472 = vmatprep.subr.mxu0 0.0
    %1473 = vmatpush1.xpose.msra.mxu0 0.0
    %1474 = vmatprep.subr.mxu0 0.0
    %1475 = vmatpush1.xpose.msra.mxu0 0.0
    %1476 = vmatprep.subr.mxu0 0.0
    %1477 = vmatpush1.xpose.msra.mxu0 %v1444
    %1478 = vmatprep.subr.mxu0 0.0
    %1479 = vmatpush2.xpose.msra.mxu0 0.0
    %1480 = vmatprep.subr.mxu0 0.0
    %1481 = vmatpush2.xpose.msra.mxu0 0.0
    %1482 = vmatprep.subr.mxu0 0.0
    %1483 = vmatpush2.xpose.msra.mxu0 0.0
    %1484 = vmatprep.subr.mxu0 0.0
    %1485 = vmatpush2.xpose.msra.mxu0 0.0
    %1486 = vmatprep.subr.mxu0 0.0
    %1487 = vmatpush2.xpose.msra.mxu0 0.0
    %1488 = vmatprep.subr.mxu0 0.0
    %1489 = vmatpush2.xpose.msra.mxu0 0.0
    %1490 = vmatprep.subr.mxu0 0.0
    %1491 = vmatpush2.xpose.msra.mxu0 0.0
    %1492 = vmatprep.subr.mxu0 0.0
    %1493 = vmatpush2.xpose.msra.mxu0 0.0
    %1494 = vmatprep.subr.mxu0 0.0
    %1495 = vmatpush2.xpose.msra.mxu0 0.0
    %1496 = vmatprep.subr.mxu0 0.0
    %1497 = vmatpush2.xpose.msra.mxu0 0.0
    %1498 = vmatprep.subr.mxu0 0.0
    %1499 = vmatpush2.xpose.msra.mxu0 0.0
    %1500 = vmatprep.subr.mxu0 0.0
    %1501 = vmatpush2.xpose.msra.mxu0 0.0
    %1502 = vmatprep.subr.mxu0 0.0
    %1503 = vmatpush2.xpose.msra.mxu0 0.0
    %1504 = vmatprep.subr.mxu0 0.0
    %1505 = vmatpush2.xpose.msra.mxu0 0.0
    %1506 = vmatprep.subr.mxu0 0.0
    %1507 = vmatpush2.xpose.msra.mxu0 0.0
    %1508 = vmatprep.subr.mxu0 0.0
    %1509 = vmatpush2.xpose.msra.mxu0 0.0
    %1510 = vmatprep.mubr.f32.mxu0 0.0
    %1511 = vmatmul.mubr.f32.gmra.mxu0 %v1442
    %v1512 = vpop.f32.mrf.mxu0
    %v1513 = vadd.f32 0.0, %v1512
    %v1514 = vpop.f32.mrf.mxu0
    %1515 = vdwg.mxu0
    %v1516 = vmul.f32 %v1513, 0.35355338
    %v1517 = vsel %vm432, %v1516, -inf
    %1518 = vmax.xlane.f32.xlu0 %v1517
    %v1519 = vpop.xlane.xlu0 %1518
    %v1520 = vsub.f32 %v1516, %v1519
    %v1521 = vmul.f32 %v1520, 1.442695
    %v1522 = vpow.pop %v1521
    %v1523 = vsel %vm432, %v1522, 0.0
    %1524 = vadd.xlane.f32.xlu0 %v1523
    %v1525 = vpop.xlane.xlu0 %1524
    %1526 = vrot.lane.b32.xlu0 %v431, 112
    %v1527 = vpop.permute.xlu0 %1526
    %v1530 = vsel %vm432, %v1522, 0
    %1532 = vmatprep.subr.mxu0 0.0
    %1533 = vmatpush1.msra.mxu0 0.0
    %1534 = vmatprep.subr.mxu0 0.0
    %1535 = vmatpush1.msra.mxu0 0.0
    %1536 = vmatprep.subr.mxu0 0.0
    %1537 = vmatpush1.msra.mxu0 0.0
    %1538 = vmatprep.subr.mxu0 0.0
    %1539 = vmatpush1.msra.mxu0 0.0
    %1540 = vmatprep.subr.mxu0 0.0
    %1541 = vmatpush1.msra.mxu0 0.0
    %1542 = vmatprep.subr.mxu0 0.0
    %1543 = vmatpush1.msra.mxu0 0.0
    %1544 = vmatprep.subr.mxu0 0.0
    %1545 = vmatpush1.msra.mxu0 0.0
    %1546 = vmatprep.subr.mxu0 0.0
    %1547 = vmatpush1.msra.mxu0 0.0
    %1548 = vmatprep.subr.mxu0 0.0
    %1549 = vmatpush1.msra.mxu0 0.0
    %1550 = vmatprep.subr.mxu0 0.0
    %1551 = vmatpush1.msra.mxu0 0.0
    %1552 = vmatprep.subr.mxu0 0.0
    %1553 = vmatpush1.msra.mxu0 0.0
    %1554 = vmatprep.subr.mxu0 0.0
    %1555 = vmatpush1.msra.mxu0 0.0
    %1556 = vmatprep.subr.mxu0 0.0
    %1557 = vmatpush1.msra.mxu0 0.0
    %1558 = vmatprep.subr.mxu0 0.0
    %1559 = vmatpush1.msra.mxu0 0.0
    %1560 = vmatprep.subr.mxu0 0.0
    %1561 = vmatpush1.msra.mxu0 0.0
    %1562 = vmatprep.subr.mxu0 0.0
    %1563 = vmatpush1.msra.mxu0 %v1527
    %1564 = vmatprep.subr.mxu0 0.0
    %1565 = vmatpush2.msra.mxu0 0.0
    %1566 = vmatprep.subr.mxu0 0.0
    %1567 = vmatpush2.msra.mxu0 0.0
    %1568 = vmatprep.subr.mxu0 0.0
    %1569 = vmatpush2.msra.mxu0 0.0
    %1570 = vmatprep.subr.mxu0 0.0
    %1571 = vmatpush2.msra.mxu0 0.0
    %1572 = vmatprep.subr.mxu0 0.0
    %1573 = vmatpush2.msra.mxu0 0.0
    %1574 = vmatprep.subr.mxu0 0.0
    %1575 = vmatpush2.msra.mxu0 0.0
    %1576 = vmatprep.subr.mxu0 0.0
    %1577 = vmatpush2.msra.mxu0 0.0
    %1578 = vmatprep.subr.mxu0 0.0
    %1579 = vmatpush2.msra.mxu0 0.0
    %1580 = vmatprep.subr.mxu0 0.0
    %1581 = vmatpush2.msra.mxu0 0.0
    %1582 = vmatprep.subr.mxu0 0.0
    %1583 = vmatpush2.msra.mxu0 0.0
    %1584 = vmatprep.subr.mxu0 0.0
    %1585 = vmatpush2.msra.mxu0 0.0
    %1586 = vmatprep.subr.mxu0 0.0
    %1587 = vmatpush2.msra.mxu0 0.0
    %1588 = vmatprep.subr.mxu0 0.0
    %1589 = vmatpush2.msra.mxu0 0.0
    %1590 = vmatprep.subr.mxu0 0.0
    %1591 = vmatpush2.msra.mxu0 0.0
    %1592 = vmatprep.subr.mxu0 0.0
    %1593 = vmatpush2.msra.mxu0 0.0
    %1594 = vmatprep.subr.mxu0 0.0
    %1595 = vmatpush2.msra.mxu0 0.0
    %1596 = vmatprep.mubr.f32.mxu0 0.0
    %1597 = vmatmul.mubr.f32.gmra.mxu0 %v1530
    %v1598 = vpop.f32.mrf.mxu0
    %v1599 = vadd.f32 0.0, %v1598
    %v1600 = vpop.f32.mrf.mxu0
    %1601 = vdwg.mxu0
    %v1602 = vrcp.pop %v1525
    %v1603 = vmul.f32 %v1599, %v1602
    %1604 = vrot.lane.b32.xlu0 %v425, 104
    %v1605 = vpop.permute.xlu0 %1604
    %1606 = vrot.lane.b32.xlu0 %v429, 104
    %v1607 = vpop.permute.xlu0 %1606
    %v1608 = vsel %vm432, %v1605, 0
    %v1610 = vsel %vm432, %v1607, 0
    %1612 = vmatprep.subr.mxu0 0.0
    %1613 = vmatpush1.xpose.msra.mxu0 0.0
    %1614 = vmatprep.subr.mxu0 0.0
    %1615 = vmatpush1.xpose.msra.mxu0 0.0
    %1616 = vmatprep.subr.mxu0 0.0
    %1617 = vmatpush1.xpose.msra.mxu0 0.0
    %1618 = vmatprep.subr.mxu0 0.0
    %1619 = vmatpush1.xpose.msra.mxu0 0.0
    %1620 = vmatprep.subr.mxu0 0.0
    %1621 = vmatpush1.xpose.msra.mxu0 0.0
    %1622 = vmatprep.subr.mxu0 0.0
    %1623 = vmatpush1.xpose.msra.mxu0 0.0
    %1624 = vmatprep.subr.mxu0 0.0
    %1625 = vmatpush1.xpose.msra.mxu0 0.0
    %1626 = vmatprep.subr.mxu0 0.0
    %1627 = vmatpush1.xpose.msra.mxu0 0.0
    %1628 = vmatprep.subr.mxu0 0.0
    %1629 = vmatpush1.xpose.msra.mxu0 0.0
    %1630 = vmatprep.subr.mxu0 0.0
    %1631 = vmatpush1.xpose.msra.mxu0 0.0
    %1632 = vmatprep.subr.mxu0 0.0
    %1633 = vmatpush1.xpose.msra.mxu0 0.0
    %1634 = vmatprep.subr.mxu0 0.0
    %1635 = vmatpush1.xpose.msra.mxu0 0.0
    %1636 = vmatprep.subr.mxu0 0.0
    %1637 = vmatpush1.xpose.msra.mxu0 0.0
    %1638 = vmatprep.subr.mxu0 0.0
    %1639 = vmatpush1.xpose.msra.mxu0 0.0
    %1640 = vmatprep.subr.mxu0 0.0
    %1641 = vmatpush1.xpose.msra.mxu0 0.0
    %1642 = vmatprep.subr.mxu0 0.0
    %1643 = vmatpush1.xpose.msra.mxu0 %v1610
    %1644 = vmatprep.subr.mxu0 0.0
    %1645 = vmatpush2.xpose.msra.mxu0 0.0
    %1646 = vmatprep.subr.mxu0 0.0
    %1647 = vmatpush2.xpose.msra.mxu0 0.0
    %1648 = vmatprep.subr.mxu0 0.0
    %1649 = vmatpush2.xpose.msra.mxu0 0.0
    %1650 = vmatprep.subr.mxu0 0.0
    %1651 = vmatpush2.xpose.msra.mxu0 0.0
    %1652 = vmatprep.subr.mxu0 0.0
    %1653 = vmatpush2.xpose.msra.mxu0 0.0
    %1654 = vmatprep.subr.mxu0 0.0
    %1655 = vmatpush2.xpose.msra.mxu0 0.0
    %1656 = vmatprep.subr.mxu0 0.0
    %1657 = vmatpush2.xpose.msra.mxu0 0.0
    %1658 = vmatprep.subr.mxu0 0.0
    %1659 = vmatpush2.xpose.msra.mxu0 0.0
    %1660 = vmatprep.subr.mxu0 0.0
    %1661 = vmatpush2.xpose.msra.mxu0 0.0
    %1662 = vmatprep.subr.mxu0 0.0
    %1663 = vmatpush2.xpose.msra.mxu0 0.0
    %1664 = vmatprep.subr.mxu0 0.0
    %1665 = vmatpush2.xpose.msra.mxu0 0.0
    %1666 = vmatprep.subr.mxu0 0.0
    %1667 = vmatpush2.xpose.msra.mxu0 0.0
    %1668 = vmatprep.subr.mxu0 0.0
    %1669 = vmatpush2.xpose.msra.mxu0 0.0
    %1670 = vmatprep.subr.mxu0 0.0
    %1671 = vmatpush2.xpose.msra.mxu0 0.0
    %1672 = vmatprep.subr.mxu0 0.0
    %1673 = vmatpush2.xpose.msra.mxu0 0.0
    %1674 = vmatprep.subr.mxu0 0.0
    %1675 = vmatpush2.xpose.msra.mxu0 0.0
    %1676 = vmatprep.mubr.f32.mxu0 0.0
    %1677 = vmatmul.mubr.f32.gmra.mxu0 %v1608
    %v1678 = vpop.f32.mrf.mxu0
    %v1679 = vadd.f32 0.0, %v1678
    %v1680 = vpop.f32.mrf.mxu0
    %1681 = vdwg.mxu0
    %v1682 = vmul.f32 %v1679, 0.35355338
    %v1683 = vsel %vm432, %v1682, -inf
    %1684 = vmax.xlane.f32.xlu0 %v1683
    %v1685 = vpop.xlane.xlu0 %1684
    %v1686 = vsub.f32 %v1682, %v1685
    %v1687 = vmul.f32 %v1686, 1.442695
    %v1688 = vpow.pop %v1687
    %v1689 = vsel %vm432, %v1688, 0.0
    %1690 = vadd.xlane.f32.xlu0 %v1689
    %v1691 = vpop.xlane.xlu0 %1690
    %1692 = vrot.lane.b32.xlu0 %v431, 104
    %v1693 = vpop.permute.xlu0 %1692
    %v1696 = vsel %vm432, %v1688, 0
    %1698 = vmatprep.subr.mxu0 0.0
    %1699 = vmatpush1.msra.mxu0 0.0
    %1700 = vmatprep.subr.mxu0 0.0
    %1701 = vmatpush1.msra.mxu0 0.0
    %1702 = vmatprep.subr.mxu0 0.0
    %1703 = vmatpush1.msra.mxu0 0.0
    %1704 = vmatprep.subr.mxu0 0.0
    %1705 = vmatpush1.msra.mxu0 0.0
    %1706 = vmatprep.subr.mxu0 0.0
    %1707 = vmatpush1.msra.mxu0 0.0
    %1708 = vmatprep.subr.mxu0 0.0
    %1709 = vmatpush1.msra.mxu0 0.0
    %1710 = vmatprep.subr.mxu0 0.0
    %1711 = vmatpush1.msra.mxu0 0.0
    %1712 = vmatprep.subr.mxu0 0.0
    %1713 = vmatpush1.msra.mxu0 0.0
    %1714 = vmatprep.subr.mxu0 0.0
    %1715 = vmatpush1.msra.mxu0 0.0
    %1716 = vmatprep.subr.mxu0 0.0
    %1717 = vmatpush1.msra.mxu0 0.0
    %1718 = vmatprep.subr.mxu0 0.0
    %1719 = vmatpush1.msra.mxu0 0.0
    %1720 = vmatprep.subr.mxu0 0.0
    %1721 = vmatpush1.msra.mxu0 0.0
    %1722 = vmatprep.subr.mxu0 0.0
    %1723 = vmatpush1.msra.mxu0 0.0
    %1724 = vmatprep.subr.mxu0 0.0
    %1725 = vmatpush1.msra.mxu0 0.0
    %1726 = vmatprep.subr.mxu0 0.0
    %1727 = vmatpush1.msra.mxu0 0.0
    %1728 = vmatprep.subr.mxu0 0.0
    %1729 = vmatpush1.msra.mxu0 %v1693
    %1730 = vmatprep.subr.mxu0 0.0
    %1731 = vmatpush2.msra.mxu0 0.0
    %1732 = vmatprep.subr.mxu0 0.0
    %1733 = vmatpush2.msra.mxu0 0.0
    %1734 = vmatprep.subr.mxu0 0.0
    %1735 = vmatpush2.msra.mxu0 0.0
    %1736 = vmatprep.subr.mxu0 0.0
    %1737 = vmatpush2.msra.mxu0 0.0
    %1738 = vmatprep.subr.mxu0 0.0
    %1739 = vmatpush2.msra.mxu0 0.0
    %1740 = vmatprep.subr.mxu0 0.0
    %1741 = vmatpush2.msra.mxu0 0.0
    %1742 = vmatprep.subr.mxu0 0.0
    %1743 = vmatpush2.msra.mxu0 0.0
    %1744 = vmatprep.subr.mxu0 0.0
    %1745 = vmatpush2.msra.mxu0 0.0
    %1746 = vmatprep.subr.mxu0 0.0
    %1747 = vmatpush2.msra.mxu0 0.0
    %1748 = vmatprep.subr.mxu0 0.0
    %1749 = vmatpush2.msra.mxu0 0.0
    %1750 = vmatprep.subr.mxu0 0.0
    %1751 = vmatpush2.msra.mxu0 0.0
    %1752 = vmatprep.subr.mxu0 0.0
    %1753 = vmatpush2.msra.mxu0 0.0
    %1754 = vmatprep.subr.mxu0 0.0
    %1755 = vmatpush2.msra.mxu0 0.0
    %1756 = vmatprep.subr.mxu0 0.0
    %1757 = vmatpush2.msra.mxu0 0.0
    %1758 = vmatprep.subr.mxu0 0.0
    %1759 = vmatpush2.msra.mxu0 0.0
    %1760 = vmatprep.subr.mxu0 0.0
    %1761 = vmatpush2.msra.mxu0 0.0
    %1762 = vmatprep.mubr.f32.mxu0 0.0
    %1763 = vmatmul.mubr.f32.gmra.mxu0 %v1696
    %v1764 = vpop.f32.mrf.mxu0
    %v1765 = vadd.f32 0.0, %v1764
    %v1766 = vpop.f32.mrf.mxu0
    %1767 = vdwg.mxu0
    %v1768 = vrcp.pop %v1691
    %v1769 = vmul.f32 %v1765, %v1768
    %1771 = vrot.lane.b32.xlu0 %v1437, 8
    %v1772 = vpop.permute.xlu0 %1771
    %1775 = vrot.lane.b32.xlu0 %v1603, 16
    %v1776 = vpop.permute.xlu0 %1775
    %1779 = vrot.lane.b32.xlu0 %v1769, 24
    %v1780 = vpop.permute.xlu0 %1779
    %v1782 = vsel %vm432, %v1270, %v1772
    %v1783 = vsel %vm1106, %v1782, %v1776
    %v1784 = vsel %vm1108, %v1783, %v1780
    %v1786 = vsel %vm139, %v1109, 0
    %v1789 = vsel %vm139, %v1784, 0
    %1791 = vmatprep.subr.mxu0 0.0
    %1792 = vmatpush1.msra.mxu0 0.0
    %1793 = vmatprep.subr.mxu0 0.0
    %1794 = vmatpush1.msra.mxu0 0.0
    %1795 = vmatprep.subr.mxu0 0.0
    %1796 = vmatpush1.msra.mxu0 0.0
    %1797 = vmatprep.subr.mxu0 0.0
    %1798 = vmatpush1.msra.mxu0 0.0
    %1799 = vmatprep.subr.mxu0 0.0
    %1800 = vmatpush1.msra.mxu0 0.0
    %1801 = vmatprep.subr.mxu0 0.0
    %1802 = vmatpush1.msra.mxu0 0.0
    %1803 = vmatprep.subr.mxu0 0.0
    %1804 = vmatpush1.msra.mxu0 0.0
    %1805 = vmatprep.subr.mxu0 0.0
    %1806 = vmatpush1.msra.mxu0 0.0
    %1807 = vmatprep.subr.mxu0 0.0
    %1808 = vmatpush1.msra.mxu0 0.0
    %1809 = vmatprep.subr.mxu0 0.0
    %1810 = vmatpush1.msra.mxu0 0.0
    %1811 = vmatprep.subr.mxu0 0.0
    %1812 = vmatpush1.msra.mxu0 0.0
    %1813 = vmatprep.subr.mxu0 0.0
    %1814 = vmatpush1.msra.mxu0 0.0
    %1815 = vmatprep.subr.mxu0 0.0
    %1816 = vmatpush1.msra.mxu0 %v318
    %1817 = vmatprep.subr.mxu0 0.0
    %1818 = vmatpush1.msra.mxu0 %v317
    %1819 = vmatprep.subr.mxu0 0.0
    %1820 = vmatpush1.msra.mxu0 %v316
    %1821 = vmatprep.subr.mxu0 0.0
    %1822 = vmatpush1.msra.mxu0 %v315
    %1823 = vmatprep.subr.mxu0 0.0
    %1824 = vmatpush2.msra.mxu0 0.0
    %1825 = vmatprep.subr.mxu0 0.0
    %1826 = vmatpush2.msra.mxu0 0.0
    %1827 = vmatprep.subr.mxu0 0.0
    %1828 = vmatpush2.msra.mxu0 0.0
    %1829 = vmatprep.subr.mxu0 0.0
    %1830 = vmatpush2.msra.mxu0 0.0
    %1831 = vmatprep.subr.mxu0 0.0
    %1832 = vmatpush2.msra.mxu0 0.0
    %1833 = vmatprep.subr.mxu0 0.0
    %1834 = vmatpush2.msra.mxu0 0.0
    %1835 = vmatprep.subr.mxu0 0.0
    %1836 = vmatpush2.msra.mxu0 0.0
    %1837 = vmatprep.subr.mxu0 0.0
    %1838 = vmatpush2.msra.mxu0 0.0
    %1839 = vmatprep.subr.mxu0 0.0
    %1840 = vmatpush2.msra.mxu0 0.0
    %1841 = vmatprep.subr.mxu0 0.0
    %1842 = vmatpush2.msra.mxu0 0.0
    %1843 = vmatprep.subr.mxu0 0.0
    %1844 = vmatpush2.msra.mxu0 0.0
    %1845 = vmatprep.subr.mxu0 0.0
    %1846 = vmatpush2.msra.mxu0 0.0
    %1847 = vmatprep.subr.mxu0 0.0
    %1848 = vmatpush2.msra.mxu0 0.0
    %1849 = vmatprep.subr.mxu0 0.0
    %1850 = vmatpush2.msra.mxu0 0.0
    %1851 = vmatprep.subr.mxu0 0.0
    %1852 = vmatpush2.msra.mxu0 0.0
    %1853 = vmatprep.subr.mxu0 0.0
    %1854 = vmatpush2.msra.mxu0 0.0
    %1855 = vmatprep.mubr.f32.mxu0 0.0
    %1856 = vmatmul.mubr.f32.gmra.mxu0 %v1786
    %v1857 = vpop.f32.mrf.mxu0
    %v1858 = vadd.f32 %v325, %v1857
    %v1859 = vpop.f32.mrf.mxu0
    %1860 = vmatprep.mubr.f32.mxu0 0.0
    %1861 = vmatmul.mubr.f32.gmra.mxu0 %v1789
    %v1862 = vpop.f32.mrf.mxu0
    %v1863 = vadd.f32 %v325, %v1862
    %v1864 = vpop.f32.mrf.mxu0
    %1865 = vdwg.mxu0
    %v1866 = vadd.f32 %v124, %v1858
    %v1867 = vadd.f32 %v125, %v1863
    %v1868 = vsel %vm139, %v1866, 0.0
    %1869 = vadd.xlane.f32.xlu0 %v1868
    %v1870 = vpop.xlane.xlu0 %1869
    %v1871 = vsel %vm139, %v1867, 0.0
    %1872 = vadd.xlane.f32.xlu0 %v1871
    %v1873 = vpop.xlane.xlu0 %1872
    %v1874 = vrcp.pop 32.0
    %v1875 = vmul.f32 %v1870, %v1874
    %v1876 = vmul.f32 %v1873, %v1874
    %v1877 = vsub.f32 %v1866, %v1875
    %v1878 = vsub.f32 %v1867, %v1876
    %v1879 = vmul.f32 %v1877, %v1877
    %v1880 = vmul.f32 %v1878, %v1878
    %v1881 = vsel %vm139, %v1879, 0.0
    %1882 = vadd.xlane.f32.xlu0 %v1881
    %v1883 = vpop.xlane.xlu0 %1882
    %v1884 = vsel %vm139, %v1880, 0.0
    %1885 = vadd.xlane.f32.xlu0 %v1884
    %v1886 = vpop.xlane.xlu0 %1885
    %v1887 = vmul.f32 %v1883, %v1874
    %v1888 = vmul.f32 %v1886, %v1874
    %v1889 = vadd.f32 %v1887, 1e-05
    %v1890 = vadd.f32 %v1888, 1e-05
    %v1891 = vrsqrt.pop %v1889
    %v1892 = vrsqrt.pop %v1890
    %v1893 = vmul.f32 %v1877, %v1891
    %v1894 = vmul.f32 %v1878, %v1892
    %v1895 = vmul.f32 %v1893, %v332
    %v1896 = vmul.f32 %v1894, %v332
    %v1897 = vadd.f32 %v1895, %v339
    %v1898 = vadd.f32 %v1896, %v339
    %v1900 = vsel %vm139, %v1897, 0
    %v1903 = vsel %vm139, %v1898, 0
    %1905 = vmatprep.subr.mxu0 0.0
    %1906 = vmatpush1.msra.mxu0 0.0
    %1907 = vmatprep.subr.mxu0 0.0
    %1908 = vmatpush1.msra.mxu0 0.0
    %1909 = vmatprep.subr.mxu0 0.0
    %1910 = vmatpush1.msra.mxu0 0.0
    %1911 = vmatprep.subr.mxu0 0.0
    %1912 = vmatpush1.msra.mxu0 0.0
    %1913 = vmatprep.subr.mxu0 0.0
    %1914 = vmatpush1.msra.mxu0 0.0
    %1915 = vmatprep.subr.mxu0 0.0
    %1916 = vmatpush1.msra.mxu0 0.0
    %1917 = vmatprep.subr.mxu0 0.0
    %1918 = vmatpush1.msra.mxu0 0.0
    %1919 = vmatprep.subr.mxu0 0.0
    %1920 = vmatpush1.msra.mxu0 0.0
    %1921 = vmatprep.subr.mxu0 0.0
    %1922 = vmatpush1.msra.mxu0 0.0
    %1923 = vmatprep.subr.mxu0 0.0
    %1924 = vmatpush1.msra.mxu0 0.0
    %1925 = vmatprep.subr.mxu0 0.0
    %1926 = vmatpush1.msra.mxu0 0.0
    %1927 = vmatprep.subr.mxu0 0.0
    %1928 = vmatpush1.msra.mxu0 0.0
    %1929 = vmatprep.subr.mxu0 0.0
    %1930 = vmatpush1.msra.mxu0 %v314
    %1931 = vmatprep.subr.mxu0 0.0
    %1932 = vmatpush1.msra.mxu0 %v313
    %1933 = vmatprep.subr.mxu0 0.0
    %1934 = vmatpush1.msra.mxu0 %v312
    %1935 = vmatprep.subr.mxu0 0.0
    %1936 = vmatpush1.msra.mxu0 %v311
    %1937 = vmatprep.subr.mxu0 0.0
    %1938 = vmatpush2.msra.mxu0 0.0
    %1939 = vmatprep.subr.mxu0 0.0
    %1940 = vmatpush2.msra.mxu0 0.0
    %1941 = vmatprep.subr.mxu0 0.0
    %1942 = vmatpush2.msra.mxu0 0.0
    %1943 = vmatprep.subr.mxu0 0.0
    %1944 = vmatpush2.msra.mxu0 0.0
    %1945 = vmatprep.subr.mxu0 0.0
    %1946 = vmatpush2.msra.mxu0 0.0
    %1947 = vmatprep.subr.mxu0 0.0
    %1948 = vmatpush2.msra.mxu0 0.0
    %1949 = vmatprep.subr.mxu0 0.0
    %1950 = vmatpush2.msra.mxu0 0.0
    %1951 = vmatprep.subr.mxu0 0.0
    %1952 = vmatpush2.msra.mxu0 0.0
    %1953 = vmatprep.subr.mxu0 0.0
    %1954 = vmatpush2.msra.mxu0 0.0
    %1955 = vmatprep.subr.mxu0 0.0
    %1956 = vmatpush2.msra.mxu0 0.0
    %1957 = vmatprep.subr.mxu0 0.0
    %1958 = vmatpush2.msra.mxu0 0.0
    %1959 = vmatprep.subr.mxu0 0.0
    %1960 = vmatpush2.msra.mxu0 0.0
    %1961 = vmatprep.subr.mxu0 0.0
    %1962 = vmatpush2.msra.mxu0 0.0
    %1963 = vmatprep.subr.mxu0 0.0
    %1964 = vmatpush2.msra.mxu0 0.0
    %1965 = vmatprep.subr.mxu0 0.0
    %1966 = vmatpush2.msra.mxu0 0.0
    %1967 = vmatprep.subr.mxu0 0.0
    %1968 = vmatpush2.msra.mxu0 0.0
    %1969 = vmatprep.mubr.f32.mxu0 0.0
    %1970 = vmatmul.mubr.f32.gmra.mxu0 %v1900
    %v1971 = vpop.f32.mrf.mxu0
    %v1972 = vadd.f32 %v345, %v1971
    %v1973 = vpop.f32.mrf.mxu0
    %1974 = vmatprep.mubr.f32.mxu0 0.0
    %1975 = vmatmul.mubr.f32.gmra.mxu0 %v1903
    %v1976 = vpop.f32.mrf.mxu0
    %v1977 = vadd.f32 %v345, %v1976
    %v1978 = vpop.f32.mrf.mxu0
    %1979 = vdwg.mxu0
    %v1981 = vsel %vm432, %v1972, 0
    %1983 = vmatprep.subr.mxu0 0.0
    %1984 = vmatpush1.xpose.msra.mxu0 0.0
    %1985 = vmatprep.subr.mxu0 0.0
    %1986 = vmatpush1.xpose.msra.mxu0 0.0
    %1987 = vmatprep.subr.mxu0 0.0
    %1988 = vmatpush1.xpose.msra.mxu0 0.0
    %1989 = vmatprep.subr.mxu0 0.0
    %1990 = vmatpush1.xpose.msra.mxu0 0.0
    %1991 = vmatprep.subr.mxu0 0.0
    %1992 = vmatpush1.xpose.msra.mxu0 0.0
    %1993 = vmatprep.subr.mxu0 0.0
    %1994 = vmatpush1.xpose.msra.mxu0 0.0
    %1995 = vmatprep.subr.mxu0 0.0
    %1996 = vmatpush1.xpose.msra.mxu0 0.0
    %1997 = vmatprep.subr.mxu0 0.0
    %1998 = vmatpush1.xpose.msra.mxu0 0.0
    %1999 = vmatprep.subr.mxu0 0.0
    %2000 = vmatpush1.xpose.msra.mxu0 0.0
    %2001 = vmatprep.subr.mxu0 0.0
    %2002 = vmatpush1.xpose.msra.mxu0 0.0
    %2003 = vmatprep.subr.mxu0 0.0
    %2004 = vmatpush1.xpose.msra.mxu0 0.0
    %2005 = vmatprep.subr.mxu0 0.0
    %2006 = vmatpush1.xpose.msra.mxu0 0.0
    %2007 = vmatprep.subr.mxu0 0.0
    %2008 = vmatpush1.xpose.msra.mxu0 0.0
    %2009 = vmatprep.subr.mxu0 0.0
    %2010 = vmatpush1.xpose.msra.mxu0 0.0
    %2011 = vmatprep.subr.mxu0 0.0
    %2012 = vmatpush1.xpose.msra.mxu0 0.0
    %2013 = vmatprep.subr.mxu0 0.0
    %2014 = vmatpush1.xpose.msra.mxu0 %v437
    %2015 = vmatprep.subr.mxu0 0.0
    %2016 = vmatpush2.xpose.msra.mxu0 0.0
    %2017 = vmatprep.subr.mxu0 0.0
    %2018 = vmatpush2.xpose.msra.mxu0 0.0
    %2019 = vmatprep.subr.mxu0 0.0
    %2020 = vmatpush2.xpose.msra.mxu0 0.0
    %2021 = vmatprep.subr.mxu0 0.0
    %2022 = vmatpush2.xpose.msra.mxu0 0.0
    %2023 = vmatprep.subr.mxu0 0.0
    %2024 = vmatpush2.xpose.msra.mxu0 0.0
    %2025 = vmatprep.subr.mxu0 0.0
    %2026 = vmatpush2.xpose.msra.mxu0 0.0
    %2027 = vmatprep.subr.mxu0 0.0
    %2028 = vmatpush2.xpose.msra.mxu0 0.0
    %2029 = vmatprep.subr.mxu0 0.0
    %2030 = vmatpush2.xpose.msra.mxu0 0.0
    %2031 = vmatprep.subr.mxu0 0.0
    %2032 = vmatpush2.xpose.msra.mxu0 0.0
    %2033 = vmatprep.subr.mxu0 0.0
    %2034 = vmatpush2.xpose.msra.mxu0 0.0
    %2035 = vmatprep.subr.mxu0 0.0
    %2036 = vmatpush2.xpose.msra.mxu0 0.0
    %2037 = vmatprep.subr.mxu0 0.0
    %2038 = vmatpush2.xpose.msra.mxu0 0.0
    %2039 = vmatprep.subr.mxu0 0.0
    %2040 = vmatpush2.xpose.msra.mxu0 0.0
    %2041 = vmatprep.subr.mxu0 0.0
    %2042 = vmatpush2.xpose.msra.mxu0 0.0
    %2043 = vmatprep.subr.mxu0 0.0
    %2044 = vmatpush2.xpose.msra.mxu0 0.0
    %2045 = vmatprep.subr.mxu0 0.0
    %2046 = vmatpush2.xpose.msra.mxu0 0.0
    %2047 = vmatprep.mubr.f32.mxu0 0.0
    %2048 = vmatmul.mubr.f32.gmra.mxu0 %v1981
    %v2049 = vpop.f32.mrf.mxu0
    %v2050 = vadd.f32 0.0, %v2049
    %v2051 = vpop.f32.mrf.mxu0
    %2052 = vdwg.mxu0
    %v2053 = vmul.f32 %v2050, 0.35355338
    %v2054 = vsel %vm432, %v2053, -inf
    %2055 = vmax.xlane.f32.xlu0 %v2054
    %v2056 = vpop.xlane.xlu0 %2055
    %v2057 = vsub.f32 %v2053, %v2056
    %v2058 = vmul.f32 %v2057, 1.442695
    %v2059 = vpow.pop %v2058
    %v2060 = vsel %vm432, %v2059, 0.0
    %2061 = vadd.xlane.f32.xlu0 %v2060
    %v2062 = vpop.xlane.xlu0 %2061
    %v2064 = vsel %vm432, %v2059, 0
    %2066 = vmatprep.subr.mxu0 0.0
    %2067 = vmatpush1.msra.mxu0 0.0
    %2068 = vmatprep.subr.mxu0 0.0
    %2069 = vmatpush1.msra.mxu0 0.0
    %2070 = vmatprep.subr.mxu0 0.0
    %2071 = vmatpush1.msra.mxu0 0.0
    %2072 = vmatprep.subr.mxu0 0.0
    %2073 = vmatpush1.msra.mxu0 0.0
    %2074 = vmatprep.subr.mxu0 0.0
    %2075 = vmatpush1.msra.mxu0 0.0
    %2076 = vmatprep.subr.mxu0 0.0
    %2077 = vmatpush1.msra.mxu0 0.0
    %2078 = vmatprep.subr.mxu0 0.0
    %2079 = vmatpush1.msra.mxu0 0.0
    %2080 = vmatprep.subr.mxu0 0.0
    %2081 = vmatpush1.msra.mxu0 0.0
    %2082 = vmatprep.subr.mxu0 0.0
    %2083 = vmatpush1.msra.mxu0 0.0
    %2084 = vmatprep.subr.mxu0 0.0
    %2085 = vmatpush1.msra.mxu0 0.0
    %2086 = vmatprep.subr.mxu0 0.0
    %2087 = vmatpush1.msra.mxu0 0.0
    %2088 = vmatprep.subr.mxu0 0.0
    %2089 = vmatpush1.msra.mxu0 0.0
    %2090 = vmatprep.subr.mxu0 0.0
    %2091 = vmatpush1.msra.mxu0 0.0
    %2092 = vmatprep.subr.mxu0 0.0
    %2093 = vmatpush1.msra.mxu0 0.0
    %2094 = vmatprep.subr.mxu0 0.0
    %2095 = vmatpush1.msra.mxu0 0.0
    %2096 = vmatprep.subr.mxu0 0.0
    %2097 = vmatpush1.msra.mxu0 %v430
    %2098 = vmatprep.subr.mxu0 0.0
    %2099 = vmatpush2.msra.mxu0 0.0
    %2100 = vmatprep.subr.mxu0 0.0
    %2101 = vmatpush2.msra.mxu0 0.0
    %2102 = vmatprep.subr.mxu0 0.0
    %2103 = vmatpush2.msra.mxu0 0.0
    %2104 = vmatprep.subr.mxu0 0.0
    %2105 = vmatpush2.msra.mxu0 0.0
    %2106 = vmatprep.subr.mxu0 0.0
    %2107 = vmatpush2.msra.mxu0 0.0
    %2108 = vmatprep.subr.mxu0 0.0
    %2109 = vmatpush2.msra.mxu0 0.0
    %2110 = vmatprep.subr.mxu0 0.0
    %2111 = vmatpush2.msra.mxu0 0.0
    %2112 = vmatprep.subr.mxu0 0.0
    %2113 = vmatpush2.msra.mxu0 0.0
    %2114 = vmatprep.subr.mxu0 0.0
    %2115 = vmatpush2.msra.mxu0 0.0
    %2116 = vmatprep.subr.mxu0 0.0
    %2117 = vmatpush2.msra.mxu0 0.0
    %2118 = vmatprep.subr.mxu0 0.0
    %2119 = vmatpush2.msra.mxu0 0.0
    %2120 = vmatprep.subr.mxu0 0.0
    %2121 = vmatpush2.msra.mxu0 0.0
    %2122 = vmatprep.subr.mxu0 0.0
    %2123 = vmatpush2.msra.mxu0 0.0
    %2124 = vmatprep.subr.mxu0 0.0
    %2125 = vmatpush2.msra.mxu0 0.0
    %2126 = vmatprep.subr.mxu0 0.0
    %2127 = vmatpush2.msra.mxu0 0.0
    %2128 = vmatprep.subr.mxu0 0.0
    %2129 = vmatpush2.msra.mxu0 0.0
    %2130 = vmatprep.mubr.f32.mxu0 0.0
    %2131 = vmatmul.mubr.f32.gmra.mxu0 %v2064
    %v2132 = vpop.f32.mrf.mxu0
    %v2133 = vadd.f32 0.0, %v2132
    %v2134 = vpop.f32.mrf.mxu0
    %2135 = vdwg.mxu0
    %v2136 = vrcp.pop %v2062
    %v2137 = vmul.f32 %v2133, %v2136
    %2138 = vrot.lane.b32.xlu0 %v1972, 120
    %v2139 = vpop.permute.xlu0 %2138
    %v2140 = vsel %vm432, %v2139, 0
    %2142 = vmatprep.subr.mxu0 0.0
    %2143 = vmatpush1.xpose.msra.mxu0 0.0
    %2144 = vmatprep.subr.mxu0 0.0
    %2145 = vmatpush1.xpose.msra.mxu0 0.0
    %2146 = vmatprep.subr.mxu0 0.0
    %2147 = vmatpush1.xpose.msra.mxu0 0.0
    %2148 = vmatprep.subr.mxu0 0.0
    %2149 = vmatpush1.xpose.msra.mxu0 0.0
    %2150 = vmatprep.subr.mxu0 0.0
    %2151 = vmatpush1.xpose.msra.mxu0 0.0
    %2152 = vmatprep.subr.mxu0 0.0
    %2153 = vmatpush1.xpose.msra.mxu0 0.0
    %2154 = vmatprep.subr.mxu0 0.0
    %2155 = vmatpush1.xpose.msra.mxu0 0.0
    %2156 = vmatprep.subr.mxu0 0.0
    %2157 = vmatpush1.xpose.msra.mxu0 0.0
    %2158 = vmatprep.subr.mxu0 0.0
    %2159 = vmatpush1.xpose.msra.mxu0 0.0
    %2160 = vmatprep.subr.mxu0 0.0
    %2161 = vmatpush1.xpose.msra.mxu0 0.0
    %2162 = vmatprep.subr.mxu0 0.0
    %2163 = vmatpush1.xpose.msra.mxu0 0.0
    %2164 = vmatprep.subr.mxu0 0.0
    %2165 = vmatpush1.xpose.msra.mxu0 0.0
    %2166 = vmatprep.subr.mxu0 0.0
    %2167 = vmatpush1.xpose.msra.mxu0 0.0
    %2168 = vmatprep.subr.mxu0 0.0
    %2169 = vmatpush1.xpose.msra.mxu0 0.0
    %2170 = vmatprep.subr.mxu0 0.0
    %2171 = vmatpush1.xpose.msra.mxu0 0.0
    %2172 = vmatprep.subr.mxu0 0.0
    %2173 = vmatpush1.xpose.msra.mxu0 %v600
    %2174 = vmatprep.subr.mxu0 0.0
    %2175 = vmatpush2.xpose.msra.mxu0 0.0
    %2176 = vmatprep.subr.mxu0 0.0
    %2177 = vmatpush2.xpose.msra.mxu0 0.0
    %2178 = vmatprep.subr.mxu0 0.0
    %2179 = vmatpush2.xpose.msra.mxu0 0.0
    %2180 = vmatprep.subr.mxu0 0.0
    %2181 = vmatpush2.xpose.msra.mxu0 0.0
    %2182 = vmatprep.subr.mxu0 0.0
    %2183 = vmatpush2.xpose.msra.mxu0 0.0
    %2184 = vmatprep.subr.mxu0 0.0
    %2185 = vmatpush2.xpose.msra.mxu0 0.0
    %2186 = vmatprep.subr.mxu0 0.0
    %2187 = vmatpush2.xpose.msra.mxu0 0.0
    %2188 = vmatprep.subr.mxu0 0.0
    %2189 = vmatpush2.xpose.msra.mxu0 0.0
    %2190 = vmatprep.subr.mxu0 0.0
    %2191 = vmatpush2.xpose.msra.mxu0 0.0
    %2192 = vmatprep.subr.mxu0 0.0
    %2193 = vmatpush2.xpose.msra.mxu0 0.0
    %2194 = vmatprep.subr.mxu0 0.0
    %2195 = vmatpush2.xpose.msra.mxu0 0.0
    %2196 = vmatprep.subr.mxu0 0.0
    %2197 = vmatpush2.xpose.msra.mxu0 0.0
    %2198 = vmatprep.subr.mxu0 0.0
    %2199 = vmatpush2.xpose.msra.mxu0 0.0
    %2200 = vmatprep.subr.mxu0 0.0
    %2201 = vmatpush2.xpose.msra.mxu0 0.0
    %2202 = vmatprep.subr.mxu0 0.0
    %2203 = vmatpush2.xpose.msra.mxu0 0.0
    %2204 = vmatprep.subr.mxu0 0.0
    %2205 = vmatpush2.xpose.msra.mxu0 0.0
    %2206 = vmatprep.mubr.f32.mxu0 0.0
    %2207 = vmatmul.mubr.f32.gmra.mxu0 %v2140
    %v2208 = vpop.f32.mrf.mxu0
    %v2209 = vadd.f32 0.0, %v2208
    %v2210 = vpop.f32.mrf.mxu0
    %2211 = vdwg.mxu0
    %v2212 = vmul.f32 %v2209, 0.35355338
    %v2213 = vsel %vm432, %v2212, -inf
    %2214 = vmax.xlane.f32.xlu0 %v2213
    %v2215 = vpop.xlane.xlu0 %2214
    %v2216 = vsub.f32 %v2212, %v2215
    %v2217 = vmul.f32 %v2216, 1.442695
    %v2218 = vpow.pop %v2217
    %v2219 = vsel %vm432, %v2218, 0.0
    %2220 = vadd.xlane.f32.xlu0 %v2219
    %v2221 = vpop.xlane.xlu0 %2220
    %v2223 = vsel %vm432, %v2218, 0
    %2225 = vmatprep.subr.mxu0 0.0
    %2226 = vmatpush1.msra.mxu0 0.0
    %2227 = vmatprep.subr.mxu0 0.0
    %2228 = vmatpush1.msra.mxu0 0.0
    %2229 = vmatprep.subr.mxu0 0.0
    %2230 = vmatpush1.msra.mxu0 0.0
    %2231 = vmatprep.subr.mxu0 0.0
    %2232 = vmatpush1.msra.mxu0 0.0
    %2233 = vmatprep.subr.mxu0 0.0
    %2234 = vmatpush1.msra.mxu0 0.0
    %2235 = vmatprep.subr.mxu0 0.0
    %2236 = vmatpush1.msra.mxu0 0.0
    %2237 = vmatprep.subr.mxu0 0.0
    %2238 = vmatpush1.msra.mxu0 0.0
    %2239 = vmatprep.subr.mxu0 0.0
    %2240 = vmatpush1.msra.mxu0 0.0
    %2241 = vmatprep.subr.mxu0 0.0
    %2242 = vmatpush1.msra.mxu0 0.0
    %2243 = vmatprep.subr.mxu0 0.0
    %2244 = vmatpush1.msra.mxu0 0.0
    %2245 = vmatprep.subr.mxu0 0.0
    %2246 = vmatpush1.msra.mxu0 0.0
    %2247 = vmatprep.subr.mxu0 0.0
    %2248 = vmatpush1.msra.mxu0 0.0
    %2249 = vmatprep.subr.mxu0 0.0
    %2250 = vmatpush1.msra.mxu0 0.0
    %2251 = vmatprep.subr.mxu0 0.0
    %2252 = vmatpush1.msra.mxu0 0.0
    %2253 = vmatprep.subr.mxu0 0.0
    %2254 = vmatpush1.msra.mxu0 0.0
    %2255 = vmatprep.subr.mxu0 0.0
    %2256 = vmatpush1.msra.mxu0 %v684
    %2257 = vmatprep.subr.mxu0 0.0
    %2258 = vmatpush2.msra.mxu0 0.0
    %2259 = vmatprep.subr.mxu0 0.0
    %2260 = vmatpush2.msra.mxu0 0.0
    %2261 = vmatprep.subr.mxu0 0.0
    %2262 = vmatpush2.msra.mxu0 0.0
    %2263 = vmatprep.subr.mxu0 0.0
    %2264 = vmatpush2.msra.mxu0 0.0
    %2265 = vmatprep.subr.mxu0 0.0
    %2266 = vmatpush2.msra.mxu0 0.0
    %2267 = vmatprep.subr.mxu0 0.0
    %2268 = vmatpush2.msra.mxu0 0.0
    %2269 = vmatprep.subr.mxu0 0.0
    %2270 = vmatpush2.msra.mxu0 0.0
    %2271 = vmatprep.subr.mxu0 0.0
    %2272 = vmatpush2.msra.mxu0 0.0
    %2273 = vmatprep.subr.mxu0 0.0
    %2274 = vmatpush2.msra.mxu0 0.0
    %2275 = vmatprep.subr.mxu0 0.0
    %2276 = vmatpush2.msra.mxu0 0.0
    %2277 = vmatprep.subr.mxu0 0.0
    %2278 = vmatpush2.msra.mxu0 0.0
    %2279 = vmatprep.subr.mxu0 0.0
    %2280 = vmatpush2.msra.mxu0 0.0
    %2281 = vmatprep.subr.mxu0 0.0
    %2282 = vmatpush2.msra.mxu0 0.0
    %2283 = vmatprep.subr.mxu0 0.0
    %2284 = vmatpush2.msra.mxu0 0.0
    %2285 = vmatprep.subr.mxu0 0.0
    %2286 = vmatpush2.msra.mxu0 0.0
    %2287 = vmatprep.subr.mxu0 0.0
    %2288 = vmatpush2.msra.mxu0 0.0
    %2289 = vmatprep.mubr.f32.mxu0 0.0
    %2290 = vmatmul.mubr.f32.gmra.mxu0 %v2223
    %v2291 = vpop.f32.mrf.mxu0
    %v2292 = vadd.f32 0.0, %v2291
    %v2293 = vpop.f32.mrf.mxu0
    %2294 = vdwg.mxu0
    %v2295 = vrcp.pop %v2221
    %v2296 = vmul.f32 %v2292, %v2295
    %2297 = vrot.lane.b32.xlu0 %v1972, 112
    %v2298 = vpop.permute.xlu0 %2297
    %v2299 = vsel %vm432, %v2298, 0
    %2301 = vmatprep.subr.mxu0 0.0
    %2302 = vmatpush1.xpose.msra.mxu0 0.0
    %2303 = vmatprep.subr.mxu0 0.0
    %2304 = vmatpush1.xpose.msra.mxu0 0.0
    %2305 = vmatprep.subr.mxu0 0.0
    %2306 = vmatpush1.xpose.msra.mxu0 0.0
    %2307 = vmatprep.subr.mxu0 0.0
    %2308 = vmatpush1.xpose.msra.mxu0 0.0
    %2309 = vmatprep.subr.mxu0 0.0
    %2310 = vmatpush1.xpose.msra.mxu0 0.0
    %2311 = vmatprep.subr.mxu0 0.0
    %2312 = vmatpush1.xpose.msra.mxu0 0.0
    %2313 = vmatprep.subr.mxu0 0.0
    %2314 = vmatpush1.xpose.msra.mxu0 0.0
    %2315 = vmatprep.subr.mxu0 0.0
    %2316 = vmatpush1.xpose.msra.mxu0 0.0
    %2317 = vmatprep.subr.mxu0 0.0
    %2318 = vmatpush1.xpose.msra.mxu0 0.0
    %2319 = vmatprep.subr.mxu0 0.0
    %2320 = vmatpush1.xpose.msra.mxu0 0.0
    %2321 = vmatprep.subr.mxu0 0.0
    %2322 = vmatpush1.xpose.msra.mxu0 0.0
    %2323 = vmatprep.subr.mxu0 0.0
    %2324 = vmatpush1.xpose.msra.mxu0 0.0
    %2325 = vmatprep.subr.mxu0 0.0
    %2326 = vmatpush1.xpose.msra.mxu0 0.0
    %2327 = vmatprep.subr.mxu0 0.0
    %2328 = vmatpush1.xpose.msra.mxu0 0.0
    %2329 = vmatprep.subr.mxu0 0.0
    %2330 = vmatpush1.xpose.msra.mxu0 0.0
    %2331 = vmatprep.subr.mxu0 0.0
    %2332 = vmatpush1.xpose.msra.mxu0 %v767
    %2333 = vmatprep.subr.mxu0 0.0
    %2334 = vmatpush2.xpose.msra.mxu0 0.0
    %2335 = vmatprep.subr.mxu0 0.0
    %2336 = vmatpush2.xpose.msra.mxu0 0.0
    %2337 = vmatprep.subr.mxu0 0.0
    %2338 = vmatpush2.xpose.msra.mxu0 0.0
    %2339 = vmatprep.subr.mxu0 0.0
    %2340 = vmatpush2.xpose.msra.mxu0 0.0
    %2341 = vmatprep.subr.mxu0 0.0
    %2342 = vmatpush2.xpose.msra.mxu0 0.0
    %2343 = vmatprep.subr.mxu0 0.0
    %2344 = vmatpush2.xpose.msra.mxu0 0.0
    %2345 = vmatprep.subr.mxu0 0.0
    %2346 = vmatpush2.xpose.msra.mxu0 0.0
    %2347 = vmatprep.subr.mxu0 0.0
    %2348 = vmatpush2.xpose.msra.mxu0 0.0
    %2349 = vmatprep.subr.mxu0 0.0
    %2350 = vmatpush2.xpose.msra.mxu0 0.0
    %2351 = vmatprep.subr.mxu0 0.0
    %2352 = vmatpush2.xpose.msra.mxu0 0.0
    %2353 = vmatprep.subr.mxu0 0.0
    %2354 = vmatpush2.xpose.msra.mxu0 0.0
    %2355 = vmatprep.subr.mxu0 0.0
    %2356 = vmatpush2.xpose.msra.mxu0 0.0
    %2357 = vmatprep.subr.mxu0 0.0
    %2358 = vmatpush2.xpose.msra.mxu0 0.0
    %2359 = vmatprep.subr.mxu0 0.0
    %2360 = vmatpush2.xpose.msra.mxu0 0.0
    %2361 = vmatprep.subr.mxu0 0.0
    %2362 = vmatpush2.xpose.msra.mxu0 0.0
    %2363 = vmatprep.subr.mxu0 0.0
    %2364 = vmatpush2.xpose.msra.mxu0 0.0
    %2365 = vmatprep.mubr.f32.mxu0 0.0
    %2366 = vmatmul.mubr.f32.gmra.mxu0 %v2299
    %v2367 = vpop.f32.mrf.mxu0
    %v2368 = vadd.f32 0.0, %v2367
    %v2369 = vpop.f32.mrf.mxu0
    %2370 = vdwg.mxu0
    %v2371 = vmul.f32 %v2368, 0.35355338
    %v2372 = vsel %vm432, %v2371, -inf
    %2373 = vmax.xlane.f32.xlu0 %v2372
    %v2374 = vpop.xlane.xlu0 %2373
    %v2375 = vsub.f32 %v2371, %v2374
    %v2376 = vmul.f32 %v2375, 1.442695
    %v2377 = vpow.pop %v2376
    %v2378 = vsel %vm432, %v2377, 0.0
    %2379 = vadd.xlane.f32.xlu0 %v2378
    %v2380 = vpop.xlane.xlu0 %2379
    %v2382 = vsel %vm432, %v2377, 0
    %2384 = vmatprep.subr.mxu0 0.0
    %2385 = vmatpush1.msra.mxu0 0.0
    %2386 = vmatprep.subr.mxu0 0.0
    %2387 = vmatpush1.msra.mxu0 0.0
    %2388 = vmatprep.subr.mxu0 0.0
    %2389 = vmatpush1.msra.mxu0 0.0
    %2390 = vmatprep.subr.mxu0 0.0
    %2391 = vmatpush1.msra.mxu0 0.0
    %2392 = vmatprep.subr.mxu0 0.0
    %2393 = vmatpush1.msra.mxu0 0.0
    %2394 = vmatprep.subr.mxu0 0.0
    %2395 = vmatpush1.msra.mxu0 0.0
    %2396 = vmatprep.subr.mxu0 0.0
    %2397 = vmatpush1.msra.mxu0 0.0
    %2398 = vmatprep.subr.mxu0 0.0
    %2399 = vmatpush1.msra.mxu0 0.0
    %2400 = vmatprep.subr.mxu0 0.0
    %2401 = vmatpush1.msra.mxu0 0.0
    %2402 = vmatprep.subr.mxu0 0.0
    %2403 = vmatpush1.msra.mxu0 0.0
    %2404 = vmatprep.subr.mxu0 0.0
    %2405 = vmatpush1.msra.mxu0 0.0
    %2406 = vmatprep.subr.mxu0 0.0
    %2407 = vmatpush1.msra.mxu0 0.0
    %2408 = vmatprep.subr.mxu0 0.0
    %2409 = vmatpush1.msra.mxu0 0.0
    %2410 = vmatprep.subr.mxu0 0.0
    %2411 = vmatpush1.msra.mxu0 0.0
    %2412 = vmatprep.subr.mxu0 0.0
    %2413 = vmatpush1.msra.mxu0 0.0
    %2414 = vmatprep.subr.mxu0 0.0
    %2415 = vmatpush1.msra.mxu0 %v850
    %2416 = vmatprep.subr.mxu0 0.0
    %2417 = vmatpush2.msra.mxu0 0.0
    %2418 = vmatprep.subr.mxu0 0.0
    %2419 = vmatpush2.msra.mxu0 0.0
    %2420 = vmatprep.subr.mxu0 0.0
    %2421 = vmatpush2.msra.mxu0 0.0
    %2422 = vmatprep.subr.mxu0 0.0
    %2423 = vmatpush2.msra.mxu0 0.0
    %2424 = vmatprep.subr.mxu0 0.0
    %2425 = vmatpush2.msra.mxu0 0.0
    %2426 = vmatprep.subr.mxu0 0.0
    %2427 = vmatpush2.msra.mxu0 0.0
    %2428 = vmatprep.subr.mxu0 0.0
    %2429 = vmatpush2.msra.mxu0 0.0
    %2430 = vmatprep.subr.mxu0 0.0
    %2431 = vmatpush2.msra.mxu0 0.0
    %2432 = vmatprep.subr.mxu0 0.0
    %2433 = vmatpush2.msra.mxu0 0.0
    %2434 = vmatprep.subr.mxu0 0.0
    %2435 = vmatpush2.msra.mxu0 0.0
    %2436 = vmatprep.subr.mxu0 0.0
    %2437 = vmatpush2.msra.mxu0 0.0
    %2438 = vmatprep.subr.mxu0 0.0
    %2439 = vmatpush2.msra.mxu0 0.0
    %2440 = vmatprep.subr.mxu0 0.0
    %2441 = vmatpush2.msra.mxu0 0.0
    %2442 = vmatprep.subr.mxu0 0.0
    %2443 = vmatpush2.msra.mxu0 0.0
    %2444 = vmatprep.subr.mxu0 0.0
    %2445 = vmatpush2.msra.mxu0 0.0
    %2446 = vmatprep.subr.mxu0 0.0
    %2447 = vmatpush2.msra.mxu0 0.0
    %2448 = vmatprep.mubr.f32.mxu0 0.0
    %2449 = vmatmul.mubr.f32.gmra.mxu0 %v2382
    %v2450 = vpop.f32.mrf.mxu0
    %v2451 = vadd.f32 0.0, %v2450
    %v2452 = vpop.f32.mrf.mxu0
    %2453 = vdwg.mxu0
    %v2454 = vrcp.pop %v2380
    %v2455 = vmul.f32 %v2451, %v2454
    %2456 = vrot.lane.b32.xlu0 %v1972, 104
    %v2457 = vpop.permute.xlu0 %2456
    %v2458 = vsel %vm432, %v2457, 0
    %2460 = vmatprep.subr.mxu0 0.0
    %2461 = vmatpush1.xpose.msra.mxu0 0.0
    %2462 = vmatprep.subr.mxu0 0.0
    %2463 = vmatpush1.xpose.msra.mxu0 0.0
    %2464 = vmatprep.subr.mxu0 0.0
    %2465 = vmatpush1.xpose.msra.mxu0 0.0
    %2466 = vmatprep.subr.mxu0 0.0
    %2467 = vmatpush1.xpose.msra.mxu0 0.0
    %2468 = vmatprep.subr.mxu0 0.0
    %2469 = vmatpush1.xpose.msra.mxu0 0.0
    %2470 = vmatprep.subr.mxu0 0.0
    %2471 = vmatpush1.xpose.msra.mxu0 0.0
    %2472 = vmatprep.subr.mxu0 0.0
    %2473 = vmatpush1.xpose.msra.mxu0 0.0
    %2474 = vmatprep.subr.mxu0 0.0
    %2475 = vmatpush1.xpose.msra.mxu0 0.0
    %2476 = vmatprep.subr.mxu0 0.0
    %2477 = vmatpush1.xpose.msra.mxu0 0.0
    %2478 = vmatprep.subr.mxu0 0.0
    %2479 = vmatpush1.xpose.msra.mxu0 0.0
    %2480 = vmatprep.subr.mxu0 0.0
    %2481 = vmatpush1.xpose.msra.mxu0 0.0
    %2482 = vmatprep.subr.mxu0 0.0
    %2483 = vmatpush1.xpose.msra.mxu0 0.0
    %2484 = vmatprep.subr.mxu0 0.0
    %2485 = vmatpush1.xpose.msra.mxu0 0.0
    %2486 = vmatprep.subr.mxu0 0.0
    %2487 = vmatpush1.xpose.msra.mxu0 0.0
    %2488 = vmatprep.subr.mxu0 0.0
    %2489 = vmatpush1.xpose.msra.mxu0 0.0
    %2490 = vmatprep.subr.mxu0 0.0
    %2491 = vmatpush1.xpose.msra.mxu0 %v933
    %2492 = vmatprep.subr.mxu0 0.0
    %2493 = vmatpush2.xpose.msra.mxu0 0.0
    %2494 = vmatprep.subr.mxu0 0.0
    %2495 = vmatpush2.xpose.msra.mxu0 0.0
    %2496 = vmatprep.subr.mxu0 0.0
    %2497 = vmatpush2.xpose.msra.mxu0 0.0
    %2498 = vmatprep.subr.mxu0 0.0
    %2499 = vmatpush2.xpose.msra.mxu0 0.0
    %2500 = vmatprep.subr.mxu0 0.0
    %2501 = vmatpush2.xpose.msra.mxu0 0.0
    %2502 = vmatprep.subr.mxu0 0.0
    %2503 = vmatpush2.xpose.msra.mxu0 0.0
    %2504 = vmatprep.subr.mxu0 0.0
    %2505 = vmatpush2.xpose.msra.mxu0 0.0
    %2506 = vmatprep.subr.mxu0 0.0
    %2507 = vmatpush2.xpose.msra.mxu0 0.0
    %2508 = vmatprep.subr.mxu0 0.0
    %2509 = vmatpush2.xpose.msra.mxu0 0.0
    %2510 = vmatprep.subr.mxu0 0.0
    %2511 = vmatpush2.xpose.msra.mxu0 0.0
    %2512 = vmatprep.subr.mxu0 0.0
    %2513 = vmatpush2.xpose.msra.mxu0 0.0
    %2514 = vmatprep.subr.mxu0 0.0
    %2515 = vmatpush2.xpose.msra.mxu0 0.0
    %2516 = vmatprep.subr.mxu0 0.0
    %2517 = vmatpush2.xpose.msra.mxu0 0.0
    %2518 = vmatprep.subr.mxu0 0.0
    %2519 = vmatpush2.xpose.msra.mxu0 0.0
    %2520 = vmatprep.subr.mxu0 0.0
    %2521 = vmatpush2.xpose.msra.mxu0 0.0
    %2522 = vmatprep.subr.mxu0 0.0
    %2523 = vmatpush2.xpose.msra.mxu0 0.0
    %2524 = vmatprep.mubr.f32.mxu0 0.0
    %2525 = vmatmul.mubr.f32.gmra.mxu0 %v2458
    %v2526 = vpop.f32.mrf.mxu0
    %v2527 = vadd.f32 0.0, %v2526
    %v2528 = vpop.f32.mrf.mxu0
    %2529 = vdwg.mxu0
    %v2530 = vmul.f32 %v2527, 0.35355338
    %v2531 = vsel %vm432, %v2530, -inf
    %2532 = vmax.xlane.f32.xlu0 %v2531
    %v2533 = vpop.xlane.xlu0 %2532
    %v2534 = vsub.f32 %v2530, %v2533
    %v2535 = vmul.f32 %v2534, 1.442695
    %v2536 = vpow.pop %v2535
    %v2537 = vsel %vm432, %v2536, 0.0
    %2538 = vadd.xlane.f32.xlu0 %v2537
    %v2539 = vpop.xlane.xlu0 %2538
    %v2541 = vsel %vm432, %v2536, 0
    %2543 = vmatprep.subr.mxu0 0.0
    %2544 = vmatpush1.msra.mxu0 0.0
    %2545 = vmatprep.subr.mxu0 0.0
    %2546 = vmatpush1.msra.mxu0 0.0
    %2547 = vmatprep.subr.mxu0 0.0
    %2548 = vmatpush1.msra.mxu0 0.0
    %2549 = vmatprep.subr.mxu0 0.0
    %2550 = vmatpush1.msra.mxu0 0.0
    %2551 = vmatprep.subr.mxu0 0.0
    %2552 = vmatpush1.msra.mxu0 0.0
    %2553 = vmatprep.subr.mxu0 0.0
    %2554 = vmatpush1.msra.mxu0 0.0
    %2555 = vmatprep.subr.mxu0 0.0
    %2556 = vmatpush1.msra.mxu0 0.0
    %2557 = vmatprep.subr.mxu0 0.0
    %2558 = vmatpush1.msra.mxu0 0.0
    %2559 = vmatprep.subr.mxu0 0.0
    %2560 = vmatpush1.msra.mxu0 0.0
    %2561 = vmatprep.subr.mxu0 0.0
    %2562 = vmatpush1.msra.mxu0 0.0
    %2563 = vmatprep.subr.mxu0 0.0
    %2564 = vmatpush1.msra.mxu0 0.0
    %2565 = vmatprep.subr.mxu0 0.0
    %2566 = vmatpush1.msra.mxu0 0.0
    %2567 = vmatprep.subr.mxu0 0.0
    %2568 = vmatpush1.msra.mxu0 0.0
    %2569 = vmatprep.subr.mxu0 0.0
    %2570 = vmatpush1.msra.mxu0 0.0
    %2571 = vmatprep.subr.mxu0 0.0
    %2572 = vmatpush1.msra.mxu0 0.0
    %2573 = vmatprep.subr.mxu0 0.0
    %2574 = vmatpush1.msra.mxu0 %v1016
    %2575 = vmatprep.subr.mxu0 0.0
    %2576 = vmatpush2.msra.mxu0 0.0
    %2577 = vmatprep.subr.mxu0 0.0
    %2578 = vmatpush2.msra.mxu0 0.0
    %2579 = vmatprep.subr.mxu0 0.0
    %2580 = vmatpush2.msra.mxu0 0.0
    %2581 = vmatprep.subr.mxu0 0.0
    %2582 = vmatpush2.msra.mxu0 0.0
    %2583 = vmatprep.subr.mxu0 0.0
    %2584 = vmatpush2.msra.mxu0 0.0
    %2585 = vmatprep.subr.mxu0 0.0
    %2586 = vmatpush2.msra.mxu0 0.0
    %2587 = vmatprep.subr.mxu0 0.0
    %2588 = vmatpush2.msra.mxu0 0.0
    %2589 = vmatprep.subr.mxu0 0.0
    %2590 = vmatpush2.msra.mxu0 0.0
    %2591 = vmatprep.subr.mxu0 0.0
    %2592 = vmatpush2.msra.mxu0 0.0
    %2593 = vmatprep.subr.mxu0 0.0
    %2594 = vmatpush2.msra.mxu0 0.0
    %2595 = vmatprep.subr.mxu0 0.0
    %2596 = vmatpush2.msra.mxu0 0.0
    %2597 = vmatprep.subr.mxu0 0.0
    %2598 = vmatpush2.msra.mxu0 0.0
    %2599 = vmatprep.subr.mxu0 0.0
    %2600 = vmatpush2.msra.mxu0 0.0
    %2601 = vmatprep.subr.mxu0 0.0
    %2602 = vmatpush2.msra.mxu0 0.0
    %2603 = vmatprep.subr.mxu0 0.0
    %2604 = vmatpush2.msra.mxu0 0.0
    %2605 = vmatprep.subr.mxu0 0.0
    %2606 = vmatpush2.msra.mxu0 0.0
    %2607 = vmatprep.mubr.f32.mxu0 0.0
    %2608 = vmatmul.mubr.f32.gmra.mxu0 %v2541
    %v2609 = vpop.f32.mrf.mxu0
    %v2610 = vadd.f32 0.0, %v2609
    %v2611 = vpop.f32.mrf.mxu0
    %2612 = vdwg.mxu0
    %v2613 = vrcp.pop %v2539
    %v2614 = vmul.f32 %v2610, %v2613
    %2616 = vrot.lane.b32.xlu0 %v2296, 8
    %v2617 = vpop.permute.xlu0 %2616
    %2620 = vrot.lane.b32.xlu0 %v2455, 16
    %v2621 = vpop.permute.xlu0 %2620
    %2624 = vrot.lane.b32.xlu0 %v2614, 24
    %v2625 = vpop.permute.xlu0 %2624
    %v2627 = vsel %vm432, %v2137, %v2617
    %v2628 = vsel %vm1106, %v2627, %v2621
    %v2629 = vsel %vm1108, %v2628, %v2625
    %v2631 = vsel %vm432, %v1977, 0
    %2633 = vmatprep.subr.mxu0 0.0
    %2634 = vmatpush1.xpose.msra.mxu0 0.0
    %2635 = vmatprep.subr.mxu0 0.0
    %2636 = vmatpush1.xpose.msra.mxu0 0.0
    %2637 = vmatprep.subr.mxu0 0.0
    %2638 = vmatpush1.xpose.msra.mxu0 0.0
    %2639 = vmatprep.subr.mxu0 0.0
    %2640 = vmatpush1.xpose.msra.mxu0 0.0
    %2641 = vmatprep.subr.mxu0 0.0
    %2642 = vmatpush1.xpose.msra.mxu0 0.0
    %2643 = vmatprep.subr.mxu0 0.0
    %2644 = vmatpush1.xpose.msra.mxu0 0.0
    %2645 = vmatprep.subr.mxu0 0.0
    %2646 = vmatpush1.xpose.msra.mxu0 0.0
    %2647 = vmatprep.subr.mxu0 0.0
    %2648 = vmatpush1.xpose.msra.mxu0 0.0
    %2649 = vmatprep.subr.mxu0 0.0
    %2650 = vmatpush1.xpose.msra.mxu0 0.0
    %2651 = vmatprep.subr.mxu0 0.0
    %2652 = vmatpush1.xpose.msra.mxu0 0.0
    %2653 = vmatprep.subr.mxu0 0.0
    %2654 = vmatpush1.xpose.msra.mxu0 0.0
    %2655 = vmatprep.subr.mxu0 0.0
    %2656 = vmatpush1.xpose.msra.mxu0 0.0
    %2657 = vmatprep.subr.mxu0 0.0
    %2658 = vmatpush1.xpose.msra.mxu0 0.0
    %2659 = vmatprep.subr.mxu0 0.0
    %2660 = vmatpush1.xpose.msra.mxu0 0.0
    %2661 = vmatprep.subr.mxu0 0.0
    %2662 = vmatpush1.xpose.msra.mxu0 0.0
    %2663 = vmatprep.subr.mxu0 0.0
    %2664 = vmatpush1.xpose.msra.mxu0 %v1114
    %2665 = vmatprep.subr.mxu0 0.0
    %2666 = vmatpush2.xpose.msra.mxu0 0.0
    %2667 = vmatprep.subr.mxu0 0.0
    %2668 = vmatpush2.xpose.msra.mxu0 0.0
    %2669 = vmatprep.subr.mxu0 0.0
    %2670 = vmatpush2.xpose.msra.mxu0 0.0
    %2671 = vmatprep.subr.mxu0 0.0
    %2672 = vmatpush2.xpose.msra.mxu0 0.0
    %2673 = vmatprep.subr.mxu0 0.0
    %2674 = vmatpush2.xpose.msra.mxu0 0.0
    %2675 = vmatprep.subr.mxu0 0.0
    %2676 = vmatpush2.xpose.msra.mxu0 0.0
    %2677 = vmatprep.subr.mxu0 0.0
    %2678 = vmatpush2.xpose.msra.mxu0 0.0
    %2679 = vmatprep.subr.mxu0 0.0
    %2680 = vmatpush2.xpose.msra.mxu0 0.0
    %2681 = vmatprep.subr.mxu0 0.0
    %2682 = vmatpush2.xpose.msra.mxu0 0.0
    %2683 = vmatprep.subr.mxu0 0.0
    %2684 = vmatpush2.xpose.msra.mxu0 0.0
    %2685 = vmatprep.subr.mxu0 0.0
    %2686 = vmatpush2.xpose.msra.mxu0 0.0
    %2687 = vmatprep.subr.mxu0 0.0
    %2688 = vmatpush2.xpose.msra.mxu0 0.0
    %2689 = vmatprep.subr.mxu0 0.0
    %2690 = vmatpush2.xpose.msra.mxu0 0.0
    %2691 = vmatprep.subr.mxu0 0.0
    %2692 = vmatpush2.xpose.msra.mxu0 0.0
    %2693 = vmatprep.subr.mxu0 0.0
    %2694 = vmatpush2.xpose.msra.mxu0 0.0
    %2695 = vmatprep.subr.mxu0 0.0
    %2696 = vmatpush2.xpose.msra.mxu0 0.0
    %2697 = vmatprep.mubr.f32.mxu0 0.0
    %2698 = vmatmul.mubr.f32.gmra.mxu0 %v2631
    %v2699 = vpop.f32.mrf.mxu0
    %v2700 = vadd.f32 0.0, %v2699
    %v2701 = vpop.f32.mrf.mxu0
    %2702 = vdwg.mxu0
    %v2703 = vmul.f32 %v2700, 0.35355338
    %v2704 = vsel %vm432, %v2703, -inf
    %2705 = vmax.xlane.f32.xlu0 %v2704
    %v2706 = vpop.xlane.xlu0 %2705
    %v2707 = vsub.f32 %v2703, %v2706
    %v2708 = vmul.f32 %v2707, 1.442695
    %v2709 = vpow.pop %v2708
    %v2710 = vsel %vm432, %v2709, 0.0
    %2711 = vadd.xlane.f32.xlu0 %v2710
    %v2712 = vpop.xlane.xlu0 %2711
    %v2714 = vsel %vm432, %v2709, 0
    %2716 = vmatprep.subr.mxu0 0.0
    %2717 = vmatpush1.msra.mxu0 0.0
    %2718 = vmatprep.subr.mxu0 0.0
    %2719 = vmatpush1.msra.mxu0 0.0
    %2720 = vmatprep.subr.mxu0 0.0
    %2721 = vmatpush1.msra.mxu0 0.0
    %2722 = vmatprep.subr.mxu0 0.0
    %2723 = vmatpush1.msra.mxu0 0.0
    %2724 = vmatprep.subr.mxu0 0.0
    %2725 = vmatpush1.msra.mxu0 0.0
    %2726 = vmatprep.subr.mxu0 0.0
    %2727 = vmatpush1.msra.mxu0 0.0
    %2728 = vmatprep.subr.mxu0 0.0
    %2729 = vmatpush1.msra.mxu0 0.0
    %2730 = vmatprep.subr.mxu0 0.0
    %2731 = vmatpush1.msra.mxu0 0.0
    %2732 = vmatprep.subr.mxu0 0.0
    %2733 = vmatpush1.msra.mxu0 0.0
    %2734 = vmatprep.subr.mxu0 0.0
    %2735 = vmatpush1.msra.mxu0 0.0
    %2736 = vmatprep.subr.mxu0 0.0
    %2737 = vmatpush1.msra.mxu0 0.0
    %2738 = vmatprep.subr.mxu0 0.0
    %2739 = vmatpush1.msra.mxu0 0.0
    %2740 = vmatprep.subr.mxu0 0.0
    %2741 = vmatpush1.msra.mxu0 0.0
    %2742 = vmatprep.subr.mxu0 0.0
    %2743 = vmatpush1.msra.mxu0 0.0
    %2744 = vmatprep.subr.mxu0 0.0
    %2745 = vmatpush1.msra.mxu0 0.0
    %2746 = vmatprep.subr.mxu0 0.0
    %2747 = vmatpush1.msra.mxu0 %v431
    %2748 = vmatprep.subr.mxu0 0.0
    %2749 = vmatpush2.msra.mxu0 0.0
    %2750 = vmatprep.subr.mxu0 0.0
    %2751 = vmatpush2.msra.mxu0 0.0
    %2752 = vmatprep.subr.mxu0 0.0
    %2753 = vmatpush2.msra.mxu0 0.0
    %2754 = vmatprep.subr.mxu0 0.0
    %2755 = vmatpush2.msra.mxu0 0.0
    %2756 = vmatprep.subr.mxu0 0.0
    %2757 = vmatpush2.msra.mxu0 0.0
    %2758 = vmatprep.subr.mxu0 0.0
    %2759 = vmatpush2.msra.mxu0 0.0
    %2760 = vmatprep.subr.mxu0 0.0
    %2761 = vmatpush2.msra.mxu0 0.0
    %2762 = vmatprep.subr.mxu0 0.0
    %2763 = vmatpush2.msra.mxu0 0.0
    %2764 = vmatprep.subr.mxu0 0.0
    %2765 = vmatpush2.msra.mxu0 0.0
    %2766 = vmatprep.subr.mxu0 0.0
    %2767 = vmatpush2.msra.mxu0 0.0
    %2768 = vmatprep.subr.mxu0 0.0
    %2769 = vmatpush2.msra.mxu0 0.0
    %2770 = vmatprep.subr.mxu0 0.0
    %2771 = vmatpush2.msra.mxu0 0.0
    %2772 = vmatprep.subr.mxu0 0.0
    %2773 = vmatpush2.msra.mxu0 0.0
    %2774 = vmatprep.subr.mxu0 0.0
    %2775 = vmatpush2.msra.mxu0 0.0
    %2776 = vmatprep.subr.mxu0 0.0
    %2777 = vmatpush2.msra.mxu0 0.0
    %2778 = vmatprep.subr.mxu0 0.0
    %2779 = vmatpush2.msra.mxu0 0.0
    %2780 = vmatprep.mubr.f32.mxu0 0.0
    %2781 = vmatmul.mubr.f32.gmra.mxu0 %v2714
    %v2782 = vpop.f32.mrf.mxu0
    %v2783 = vadd.f32 0.0, %v2782
    %v2784 = vpop.f32.mrf.mxu0
    %2785 = vdwg.mxu0
    %v2786 = vrcp.pop %v2712
    %v2787 = vmul.f32 %v2783, %v2786
    %2788 = vrot.lane.b32.xlu0 %v1977, 120
    %v2789 = vpop.permute.xlu0 %2788
    %v2790 = vsel %vm432, %v2789, 0
    %2792 = vmatprep.subr.mxu0 0.0
    %2793 = vmatpush1.xpose.msra.mxu0 0.0
    %2794 = vmatprep.subr.mxu0 0.0
    %2795 = vmatpush1.xpose.msra.mxu0 0.0
    %2796 = vmatprep.subr.mxu0 0.0
    %2797 = vmatpush1.xpose.msra.mxu0 0.0
    %2798 = vmatprep.subr.mxu0 0.0
    %2799 = vmatpush1.xpose.msra.mxu0 0.0
    %2800 = vmatprep.subr.mxu0 0.0
    %2801 = vmatpush1.xpose.msra.mxu0 0.0
    %2802 = vmatprep.subr.mxu0 0.0
    %2803 = vmatpush1.xpose.msra.mxu0 0.0
    %2804 = vmatprep.subr.mxu0 0.0
    %2805 = vmatpush1.xpose.msra.mxu0 0.0
    %2806 = vmatprep.subr.mxu0 0.0
    %2807 = vmatpush1.xpose.msra.mxu0 0.0
    %2808 = vmatprep.subr.mxu0 0.0
    %2809 = vmatpush1.xpose.msra.mxu0 0.0
    %2810 = vmatprep.subr.mxu0 0.0
    %2811 = vmatpush1.xpose.msra.mxu0 0.0
    %2812 = vmatprep.subr.mxu0 0.0
    %2813 = vmatpush1.xpose.msra.mxu0 0.0
    %2814 = vmatprep.subr.mxu0 0.0
    %2815 = vmatpush1.xpose.msra.mxu0 0.0
    %2816 = vmatprep.subr.mxu0 0.0
    %2817 = vmatpush1.xpose.msra.mxu0 0.0
    %2818 = vmatprep.subr.mxu0 0.0
    %2819 = vmatpush1.xpose.msra.mxu0 0.0
    %2820 = vmatprep.subr.mxu0 0.0
    %2821 = vmatpush1.xpose.msra.mxu0 0.0
    %2822 = vmatprep.subr.mxu0 0.0
    %2823 = vmatpush1.xpose.msra.mxu0 %v1277
    %2824 = vmatprep.subr.mxu0 0.0
    %2825 = vmatpush2.xpose.msra.mxu0 0.0
    %2826 = vmatprep.subr.mxu0 0.0
    %2827 = vmatpush2.xpose.msra.mxu0 0.0
    %2828 = vmatprep.subr.mxu0 0.0
    %2829 = vmatpush2.xpose.msra.mxu0 0.0
    %2830 = vmatprep.subr.mxu0 0.0
    %2831 = vmatpush2.xpose.msra.mxu0 0.0
    %2832 = vmatprep.subr.mxu0 0.0
    %2833 = vmatpush2.xpose.msra.mxu0 0.0
    %2834 = vmatprep.subr.mxu0 0.0
    %2835 = vmatpush2.xpose.msra.mxu0 0.0
    %2836 = vmatprep.subr.mxu0 0.0
    %2837 = vmatpush2.xpose.msra.mxu0 0.0
    %2838 = vmatprep.subr.mxu0 0.0
    %2839 = vmatpush2.xpose.msra.mxu0 0.0
    %2840 = vmatprep.subr.mxu0 0.0
    %2841 = vmatpush2.xpose.msra.mxu0 0.0
    %2842 = vmatprep.subr.mxu0 0.0
    %2843 = vmatpush2.xpose.msra.mxu0 0.0
    %2844 = vmatprep.subr.mxu0 0.0
    %2845 = vmatpush2.xpose.msra.mxu0 0.0
    %2846 = vmatprep.subr.mxu0 0.0
    %2847 = vmatpush2.xpose.msra.mxu0 0.0
    %2848 = vmatprep.subr.mxu0 0.0
    %2849 = vmatpush2.xpose.msra.mxu0 0.0
    %2850 = vmatprep.subr.mxu0 0.0
    %2851 = vmatpush2.xpose.msra.mxu0 0.0
    %2852 = vmatprep.subr.mxu0 0.0
    %2853 = vmatpush2.xpose.msra.mxu0 0.0
    %2854 = vmatprep.subr.mxu0 0.0
    %2855 = vmatpush2.xpose.msra.mxu0 0.0
    %2856 = vmatprep.mubr.f32.mxu0 0.0
    %2857 = vmatmul.mubr.f32.gmra.mxu0 %v2790
    %v2858 = vpop.f32.mrf.mxu0
    %v2859 = vadd.f32 0.0, %v2858
    %v2860 = vpop.f32.mrf.mxu0
    %2861 = vdwg.mxu0
    %v2862 = vmul.f32 %v2859, 0.35355338
    %v2863 = vsel %vm432, %v2862, -inf
    %2864 = vmax.xlane.f32.xlu0 %v2863
    %v2865 = vpop.xlane.xlu0 %2864
    %v2866 = vsub.f32 %v2862, %v2865
    %v2867 = vmul.f32 %v2866, 1.442695
    %v2868 = vpow.pop %v2867
    %v2869 = vsel %vm432, %v2868, 0.0
    %2870 = vadd.xlane.f32.xlu0 %v2869
    %v2871 = vpop.xlane.xlu0 %2870
    %v2873 = vsel %vm432, %v2868, 0
    %2875 = vmatprep.subr.mxu0 0.0
    %2876 = vmatpush1.msra.mxu0 0.0
    %2877 = vmatprep.subr.mxu0 0.0
    %2878 = vmatpush1.msra.mxu0 0.0
    %2879 = vmatprep.subr.mxu0 0.0
    %2880 = vmatpush1.msra.mxu0 0.0
    %2881 = vmatprep.subr.mxu0 0.0
    %2882 = vmatpush1.msra.mxu0 0.0
    %2883 = vmatprep.subr.mxu0 0.0
    %2884 = vmatpush1.msra.mxu0 0.0
    %2885 = vmatprep.subr.mxu0 0.0
    %2886 = vmatpush1.msra.mxu0 0.0
    %2887 = vmatprep.subr.mxu0 0.0
    %2888 = vmatpush1.msra.mxu0 0.0
    %2889 = vmatprep.subr.mxu0 0.0
    %2890 = vmatpush1.msra.mxu0 0.0
    %2891 = vmatprep.subr.mxu0 0.0
    %2892 = vmatpush1.msra.mxu0 0.0
    %2893 = vmatprep.subr.mxu0 0.0
    %2894 = vmatpush1.msra.mxu0 0.0
    %2895 = vmatprep.subr.mxu0 0.0
    %2896 = vmatpush1.msra.mxu0 0.0
    %2897 = vmatprep.subr.mxu0 0.0
    %2898 = vmatpush1.msra.mxu0 0.0
    %2899 = vmatprep.subr.mxu0 0.0
    %2900 = vmatpush1.msra.mxu0 0.0
    %2901 = vmatprep.subr.mxu0 0.0
    %2902 = vmatpush1.msra.mxu0 0.0
    %2903 = vmatprep.subr.mxu0 0.0
    %2904 = vmatpush1.msra.mxu0 0.0
    %2905 = vmatprep.subr.mxu0 0.0
    %2906 = vmatpush1.msra.mxu0 %v1361
    %2907 = vmatprep.subr.mxu0 0.0
    %2908 = vmatpush2.msra.mxu0 0.0
    %2909 = vmatprep.subr.mxu0 0.0
    %2910 = vmatpush2.msra.mxu0 0.0
    %2911 = vmatprep.subr.mxu0 0.0
    %2912 = vmatpush2.msra.mxu0 0.0
    %2913 = vmatprep.subr.mxu0 0.0
    %2914 = vmatpush2.msra.mxu0 0.0
    %2915 = vmatprep.subr.mxu0 0.0
    %2916 = vmatpush2.msra.mxu0 0.0
    %2917 = vmatprep.subr.mxu0 0.0
    %2918 = vmatpush2.msra.mxu0 0.0
    %2919 = vmatprep.subr.mxu0 0.0
    %2920 = vmatpush2.msra.mxu0 0.0
    %2921 = vmatprep.subr.mxu0 0.0
    %2922 = vmatpush2.msra.mxu0 0.0
    %2923 = vmatprep.subr.mxu0 0.0
    %2924 = vmatpush2.msra.mxu0 0.0
    %2925 = vmatprep.subr.mxu0 0.0
    %2926 = vmatpush2.msra.mxu0 0.0
    %2927 = vmatprep.subr.mxu0 0.0
    %2928 = vmatpush2.msra.mxu0 0.0
    %2929 = vmatprep.subr.mxu0 0.0
    %2930 = vmatpush2.msra.mxu0 0.0
    %2931 = vmatprep.subr.mxu0 0.0
    %2932 = vmatpush2.msra.mxu0 0.0
    %2933 = vmatprep.subr.mxu0 0.0
    %2934 = vmatpush2.msra.mxu0 0.0
    %2935 = vmatprep.subr.mxu0 0.0
    %2936 = vmatpush2.msra.mxu0 0.0
    %2937 = vmatprep.subr.mxu0 0.0
    %2938 = vmatpush2.msra.mxu0 0.0
    %2939 = vmatprep.mubr.f32.mxu0 0.0
    %2940 = vmatmul.mubr.f32.gmra.mxu0 %v2873
    %v2941 = vpop.f32.mrf.mxu0
    %v2942 = vadd.f32 0.0, %v2941
    %v2943 = vpop.f32.mrf.mxu0
    %2944 = vdwg.mxu0
    %v2945 = vrcp.pop %v2871
    %v2946 = vmul.f32 %v2942, %v2945
    %2947 = vrot.lane.b32.xlu0 %v1977, 112
    %v2948 = vpop.permute.xlu0 %2947
    %v2949 = vsel %vm432, %v2948, 0
    %2951 = vmatprep.subr.mxu0 0.0
    %2952 = vmatpush1.xpose.msra.mxu0 0.0
    %2953 = vmatprep.subr.mxu0 0.0
    %2954 = vmatpush1.xpose.msra.mxu0 0.0
    %2955 = vmatprep.subr.mxu0 0.0
    %2956 = vmatpush1.xpose.msra.mxu0 0.0
    %2957 = vmatprep.subr.mxu0 0.0
    %2958 = vmatpush1.xpose.msra.mxu0 0.0
    %2959 = vmatprep.subr.mxu0 0.0
    %2960 = vmatpush1.xpose.msra.mxu0 0.0
    %2961 = vmatprep.subr.mxu0 0.0
    %2962 = vmatpush1.xpose.msra.mxu0 0.0
    %2963 = vmatprep.subr.mxu0 0.0
    %2964 = vmatpush1.xpose.msra.mxu0 0.0
    %2965 = vmatprep.subr.mxu0 0.0
    %2966 = vmatpush1.xpose.msra.mxu0 0.0
    %2967 = vmatprep.subr.mxu0 0.0
    %2968 = vmatpush1.xpose.msra.mxu0 0.0
    %2969 = vmatprep.subr.mxu0 0.0
    %2970 = vmatpush1.xpose.msra.mxu0 0.0
    %2971 = vmatprep.subr.mxu0 0.0
    %2972 = vmatpush1.xpose.msra.mxu0 0.0
    %2973 = vmatprep.subr.mxu0 0.0
    %2974 = vmatpush1.xpose.msra.mxu0 0.0
    %2975 = vmatprep.subr.mxu0 0.0
    %2976 = vmatpush1.xpose.msra.mxu0 0.0
    %2977 = vmatprep.subr.mxu0 0.0
    %2978 = vmatpush1.xpose.msra.mxu0 0.0
    %2979 = vmatprep.subr.mxu0 0.0
    %2980 = vmatpush1.xpose.msra.mxu0 0.0
    %2981 = vmatprep.subr.mxu0 0.0
    %2982 = vmatpush1.xpose.msra.mxu0 %v1444
    %2983 = vmatprep.subr.mxu0 0.0
    %2984 = vmatpush2.xpose.msra.mxu0 0.0
    %2985 = vmatprep.subr.mxu0 0.0
    %2986 = vmatpush2.xpose.msra.mxu0 0.0
    %2987 = vmatprep.subr.mxu0 0.0
    %2988 = vmatpush2.xpose.msra.mxu0 0.0
    %2989 = vmatprep.subr.mxu0 0.0
    %2990 = vmatpush2.xpose.msra.mxu0 0.0
    %2991 = vmatprep.subr.mxu0 0.0
    %2992 = vmatpush2.xpose.msra.mxu0 0.0
    %2993 = vmatprep.subr.mxu0 0.0
    %2994 = vmatpush2.xpose.msra.mxu0 0.0
    %2995 = vmatprep.subr.mxu0 0.0
    %2996 = vmatpush2.xpose.msra.mxu0 0.0
    %2997 = vmatprep.subr.mxu0 0.0
    %2998 = vmatpush2.xpose.msra.mxu0 0.0
    %2999 = vmatprep.subr.mxu0 0.0
    %3000 = vmatpush2.xpose.msra.mxu0 0.0
    %3001 = vmatprep.subr.mxu0 0.0
    %3002 = vmatpush2.xpose.msra.mxu0 0.0
    %3003 = vmatprep.subr.mxu0 0.0
    %3004 = vmatpush2.xpose.msra.mxu0 0.0
    %3005 = vmatprep.subr.mxu0 0.0
    %3006 = vmatpush2.xpose.msra.mxu0 0.0
    %3007 = vmatprep.subr.mxu0 0.0
    %3008 = vmatpush2.xpose.msra.mxu0 0.0
    %3009 = vmatprep.subr.mxu0 0.0
    %3010 = vmatpush2.xpose.msra.mxu0 0.0
    %3011 = vmatprep.subr.mxu0 0.0
    %3012 = vmatpush2.xpose.msra.mxu0 0.0
    %3013 = vmatprep.subr.mxu0 0.0
    %3014 = vmatpush2.xpose.msra.mxu0 0.0
    %3015 = vmatprep.mubr.f32.mxu0 0.0
    %3016 = vmatmul.mubr.f32.gmra.mxu0 %v2949
    %v3017 = vpop.f32.mrf.mxu0
    %v3018 = vadd.f32 0.0, %v3017
    %v3019 = vpop.f32.mrf.mxu0
    %3020 = vdwg.mxu0
    %v3021 = vmul.f32 %v3018, 0.35355338
    %v3022 = vsel %vm432, %v3021, -inf
    %3023 = vmax.xlane.f32.xlu0 %v3022
    %v3024 = vpop.xlane.xlu0 %3023
    %v3025 = vsub.f32 %v3021, %v3024
    %v3026 = vmul.f32 %v3025, 1.442695
    %v3027 = vpow.pop %v3026
    %v3028 = vsel %vm432, %v3027, 0.0
    %3029 = vadd.xlane.f32.xlu0 %v3028
    %v3030 = vpop.xlane.xlu0 %3029
    %v3032 = vsel %vm432, %v3027, 0
    %3034 = vmatprep.subr.mxu0 0.0
    %3035 = vmatpush1.msra.mxu0 0.0
    %3036 = vmatprep.subr.mxu0 0.0
    %3037 = vmatpush1.msra.mxu0 0.0
    %3038 = vmatprep.subr.mxu0 0.0
    %3039 = vmatpush1.msra.mxu0 0.0
    %3040 = vmatprep.subr.mxu0 0.0
    %3041 = vmatpush1.msra.mxu0 0.0
    %3042 = vmatprep.subr.mxu0 0.0
    %3043 = vmatpush1.msra.mxu0 0.0
    %3044 = vmatprep.subr.mxu0 0.0
    %3045 = vmatpush1.msra.mxu0 0.0
    %3046 = vmatprep.subr.mxu0 0.0
    %3047 = vmatpush1.msra.mxu0 0.0
    %3048 = vmatprep.subr.mxu0 0.0
    %3049 = vmatpush1.msra.mxu0 0.0
    %3050 = vmatprep.subr.mxu0 0.0
    %3051 = vmatpush1.msra.mxu0 0.0
    %3052 = vmatprep.subr.mxu0 0.0
    %3053 = vmatpush1.msra.mxu0 0.0
    %3054 = vmatprep.subr.mxu0 0.0
    %3055 = vmatpush1.msra.mxu0 0.0
    %3056 = vmatprep.subr.mxu0 0.0
    %3057 = vmatpush1.msra.mxu0 0.0
    %3058 = vmatprep.subr.mxu0 0.0
    %3059 = vmatpush1.msra.mxu0 0.0
    %3060 = vmatprep.subr.mxu0 0.0
    %3061 = vmatpush1.msra.mxu0 0.0
    %3062 = vmatprep.subr.mxu0 0.0
    %3063 = vmatpush1.msra.mxu0 0.0
    %3064 = vmatprep.subr.mxu0 0.0
    %3065 = vmatpush1.msra.mxu0 %v1527
    %3066 = vmatprep.subr.mxu0 0.0
    %3067 = vmatpush2.msra.mxu0 0.0
    %3068 = vmatprep.subr.mxu0 0.0
    %3069 = vmatpush2.msra.mxu0 0.0
    %3070 = vmatprep.subr.mxu0 0.0
    %3071 = vmatpush2.msra.mxu0 0.0
    %3072 = vmatprep.subr.mxu0 0.0
    %3073 = vmatpush2.msra.mxu0 0.0
    %3074 = vmatprep.subr.mxu0 0.0
    %3075 = vmatpush2.msra.mxu0 0.0
    %3076 = vmatprep.subr.mxu0 0.0
    %3077 = vmatpush2.msra.mxu0 0.0
    %3078 = vmatprep.subr.mxu0 0.0
    %3079 = vmatpush2.msra.mxu0 0.0
    %3080 = vmatprep.subr.mxu0 0.0
    %3081 = vmatpush2.msra.mxu0 0.0
    %3082 = vmatprep.subr.mxu0 0.0
    %3083 = vmatpush2.msra.mxu0 0.0
    %3084 = vmatprep.subr.mxu0 0.0
    %3085 = vmatpush2.msra.mxu0 0.0
    %3086 = vmatprep.subr.mxu0 0.0
    %3087 = vmatpush2.msra.mxu0 0.0
    %3088 = vmatprep.subr.mxu0 0.0
    %3089 = vmatpush2.msra.mxu0 0.0
    %3090 = vmatprep.subr.mxu0 0.0
    %3091 = vmatpush2.msra.mxu0 0.0
    %3092 = vmatprep.subr.mxu0 0.0
    %3093 = vmatpush2.msra.mxu0 0.0
    %3094 = vmatprep.subr.mxu0 0.0
    %3095 = vmatpush2.msra.mxu0 0.0
    %3096 = vmatprep.subr.mxu0 0.0
    %3097 = vmatpush2.msra.mxu0 0.0
    %3098 = vmatprep.mubr.f32.mxu0 0.0
    %3099 = vmatmul.mubr.f32.gmra.mxu0 %v3032
    %v3100 = vpop.f32.mrf.mxu0
    %v3101 = vadd.f32 0.0, %v3100
    %v3102 = vpop.f32.mrf.mxu0
    %3103 = vdwg.mxu0
    %v3104 = vrcp.pop %v3030
    %v3105 = vmul.f32 %v3101, %v3104
    %3106 = vrot.lane.b32.xlu0 %v1977, 104
    %v3107 = vpop.permute.xlu0 %3106
    %v3108 = vsel %vm432, %v3107, 0
    %3110 = vmatprep.subr.mxu0 0.0
    %3111 = vmatpush1.xpose.msra.mxu0 0.0
    %3112 = vmatprep.subr.mxu0 0.0
    %3113 = vmatpush1.xpose.msra.mxu0 0.0
    %3114 = vmatprep.subr.mxu0 0.0
    %3115 = vmatpush1.xpose.msra.mxu0 0.0
    %3116 = vmatprep.subr.mxu0 0.0
    %3117 = vmatpush1.xpose.msra.mxu0 0.0
    %3118 = vmatprep.subr.mxu0 0.0
    %3119 = vmatpush1.xpose.msra.mxu0 0.0
    %3120 = vmatprep.subr.mxu0 0.0
    %3121 = vmatpush1.xpose.msra.mxu0 0.0
    %3122 = vmatprep.subr.mxu0 0.0
    %3123 = vmatpush1.xpose.msra.mxu0 0.0
    %3124 = vmatprep.subr.mxu0 0.0
    %3125 = vmatpush1.xpose.msra.mxu0 0.0
    %3126 = vmatprep.subr.mxu0 0.0
    %3127 = vmatpush1.xpose.msra.mxu0 0.0
    %3128 = vmatprep.subr.mxu0 0.0
    %3129 = vmatpush1.xpose.msra.mxu0 0.0
    %3130 = vmatprep.subr.mxu0 0.0
    %3131 = vmatpush1.xpose.msra.mxu0 0.0
    %3132 = vmatprep.subr.mxu0 0.0
    %3133 = vmatpush1.xpose.msra.mxu0 0.0
    %3134 = vmatprep.subr.mxu0 0.0
    %3135 = vmatpush1.xpose.msra.mxu0 0.0
    %3136 = vmatprep.subr.mxu0 0.0
    %3137 = vmatpush1.xpose.msra.mxu0 0.0
    %3138 = vmatprep.subr.mxu0 0.0
    %3139 = vmatpush1.xpose.msra.mxu0 0.0
    %3140 = vmatprep.subr.mxu0 0.0
    %3141 = vmatpush1.xpose.msra.mxu0 %v1610
    %3142 = vmatprep.subr.mxu0 0.0
    %3143 = vmatpush2.xpose.msra.mxu0 0.0
    %3144 = vmatprep.subr.mxu0 0.0
    %3145 = vmatpush2.xpose.msra.mxu0 0.0
    %3146 = vmatprep.subr.mxu0 0.0
    %3147 = vmatpush2.xpose.msra.mxu0 0.0
    %3148 = vmatprep.subr.mxu0 0.0
    %3149 = vmatpush2.xpose.msra.mxu0 0.0
    %3150 = vmatprep.subr.mxu0 0.0
    %3151 = vmatpush2.xpose.msra.mxu0 0.0
    %3152 = vmatprep.subr.mxu0 0.0
    %3153 = vmatpush2.xpose.msra.mxu0 0.0
    %3154 = vmatprep.subr.mxu0 0.0
    %3155 = vmatpush2.xpose.msra.mxu0 0.0
    %3156 = vmatprep.subr.mxu0 0.0
    %3157 = vmatpush2.xpose.msra.mxu0 0.0
    %3158 = vmatprep.subr.mxu0 0.0
    %3159 = vmatpush2.xpose.msra.mxu0 0.0
    %3160 = vmatprep.subr.mxu0 0.0
    %3161 = vmatpush2.xpose.msra.mxu0 0.0
    %3162 = vmatprep.subr.mxu0 0.0
    %3163 = vmatpush2.xpose.msra.mxu0 0.0
    %3164 = vmatprep.subr.mxu0 0.0
    %3165 = vmatpush2.xpose.msra.mxu0 0.0
    %3166 = vmatprep.subr.mxu0 0.0
    %3167 = vmatpush2.xpose.msra.mxu0 0.0
    %3168 = vmatprep.subr.mxu0 0.0
    %3169 = vmatpush2.xpose.msra.mxu0 0.0
    %3170 = vmatprep.subr.mxu0 0.0
    %3171 = vmatpush2.xpose.msra.mxu0 0.0
    %3172 = vmatprep.subr.mxu0 0.0
    %3173 = vmatpush2.xpose.msra.mxu0 0.0
    %3174 = vmatprep.mubr.f32.mxu0 0.0
    %3175 = vmatmul.mubr.f32.gmra.mxu0 %v3108
    %v3176 = vpop.f32.mrf.mxu0
    %v3177 = vadd.f32 0.0, %v3176
    %v3178 = vpop.f32.mrf.mxu0
    %3179 = vdwg.mxu0
    %v3180 = vmul.f32 %v3177, 0.35355338
    %v3181 = vsel %vm432, %v3180, -inf
    %3182 = vmax.xlane.f32.xlu0 %v3181
    %v3183 = vpop.xlane.xlu0 %3182
    %v3184 = vsub.f32 %v3180, %v3183
    %v3185 = vmul.f32 %v3184, 1.442695
    %v3186 = vpow.pop %v3185
    %v3187 = vsel %vm432, %v3186, 0.0
    %3188 = vadd.xlane.f32.xlu0 %v3187
    %v3189 = vpop.xlane.xlu0 %3188
    %v3191 = vsel %vm432, %v3186, 0
    %3193 = vmatprep.subr.mxu0 0.0
    %3194 = vmatpush1.msra.mxu0 0.0
    %3195 = vmatprep.subr.mxu0 0.0
    %3196 = vmatpush1.msra.mxu0 0.0
    %3197 = vmatprep.subr.mxu0 0.0
    %3198 = vmatpush1.msra.mxu0 0.0
    %3199 = vmatprep.subr.mxu0 0.0
    %3200 = vmatpush1.msra.mxu0 0.0
    %3201 = vmatprep.subr.mxu0 0.0
    %3202 = vmatpush1.msra.mxu0 0.0
    %3203 = vmatprep.subr.mxu0 0.0
    %3204 = vmatpush1.msra.mxu0 0.0
    %3205 = vmatprep.subr.mxu0 0.0
    %3206 = vmatpush1.msra.mxu0 0.0
    %3207 = vmatprep.subr.mxu0 0.0
    %3208 = vmatpush1.msra.mxu0 0.0
    %3209 = vmatprep.subr.mxu0 0.0
    %3210 = vmatpush1.msra.mxu0 0.0
    %3211 = vmatprep.subr.mxu0 0.0
    %3212 = vmatpush1.msra.mxu0 0.0
    %3213 = vmatprep.subr.mxu0 0.0
    %3214 = vmatpush1.msra.mxu0 0.0
    %3215 = vmatprep.subr.mxu0 0.0
    %3216 = vmatpush1.msra.mxu0 0.0
    %3217 = vmatprep.subr.mxu0 0.0
    %3218 = vmatpush1.msra.mxu0 0.0
    %3219 = vmatprep.subr.mxu0 0.0
    %3220 = vmatpush1.msra.mxu0 0.0
    %3221 = vmatprep.subr.mxu0 0.0
    %3222 = vmatpush1.msra.mxu0 0.0
    %3223 = vmatprep.subr.mxu0 0.0
    %3224 = vmatpush1.msra.mxu0 %v1693
    %3225 = vmatprep.subr.mxu0 0.0
    %3226 = vmatpush2.msra.mxu0 0.0
    %3227 = vmatprep.subr.mxu0 0.0
    %3228 = vmatpush2.msra.mxu0 0.0
    %3229 = vmatprep.subr.mxu0 0.0
    %3230 = vmatpush2.msra.mxu0 0.0
    %3231 = vmatprep.subr.mxu0 0.0
    %3232 = vmatpush2.msra.mxu0 0.0
    %3233 = vmatprep.subr.mxu0 0.0
    %3234 = vmatpush2.msra.mxu0 0.0
    %3235 = vmatprep.subr.mxu0 0.0
    %3236 = vmatpush2.msra.mxu0 0.0
    %3237 = vmatprep.subr.mxu0 0.0
    %3238 = vmatpush2.msra.mxu0 0.0
    %3239 = vmatprep.subr.mxu0 0.0
    %3240 = vmatpush2.msra.mxu0 0.0
    %3241 = vmatprep.subr.mxu0 0.0
    %3242 = vmatpush2.msra.mxu0 0.0
    %3243 = vmatprep.subr.mxu0 0.0
    %3244 = vmatpush2.msra.mxu0 0.0
    %3245 = vmatprep.subr.mxu0 0.0
    %3246 = vmatpush2.msra.mxu0 0.0
    %3247 = vmatprep.subr.mxu0 0.0
    %3248 = vmatpush2.msra.mxu0 0.0
    %3249 = vmatprep.subr.mxu0 0.0
    %3250 = vmatpush2.msra.mxu0 0.0
    %3251 = vmatprep.subr.mxu0 0.0
    %3252 = vmatpush2.msra.mxu0 0.0
    %3253 = vmatprep.subr.mxu0 0.0
    %3254 = vmatpush2.msra.mxu0 0.0
    %3255 = vmatprep.subr.mxu0 0.0
    %3256 = vmatpush2.msra.mxu0 0.0
    %3257 = vmatprep.mubr.f32.mxu0 0.0
    %3258 = vmatmul.mubr.f32.gmra.mxu0 %v3191
    %v3259 = vpop.f32.mrf.mxu0
    %v3260 = vadd.f32 0.0, %v3259
    %v3261 = vpop.f32.mrf.mxu0
    %3262 = vdwg.mxu0
    %v3263 = vrcp.pop %v3189
    %v3264 = vmul.f32 %v3260, %v3263
    %3266 = vrot.lane.b32.xlu0 %v2946, 8
    %v3267 = vpop.permute.xlu0 %3266
    %3270 = vrot.lane.b32.xlu0 %v3105, 16
    %v3271 = vpop.permute.xlu0 %3270
    %3274 = vrot.lane.b32.xlu0 %v3264, 24
    %v3275 = vpop.permute.xlu0 %3274
    %v3277 = vsel %vm432, %v2787, %v3267
    %v3278 = vsel %vm1106, %v3277, %v3271
    %v3279 = vsel %vm1108, %v3278, %v3275
    %v3281 = vsel %vm139, %v2629, 0
    %v3284 = vsel %vm139, %v3279, 0
    %3286 = vmatprep.subr.mxu0 0.0
    %3287 = vmatpush1.msra.mxu0 0.0
    %3288 = vmatprep.subr.mxu0 0.0
    %3289 = vmatpush1.msra.mxu0 0.0
    %3290 = vmatprep.subr.mxu0 0.0
    %3291 = vmatpush1.msra.mxu0 0.0
    %3292 = vmatprep.subr.mxu0 0.0
    %3293 = vmatpush1.msra.mxu0 0.0
    %3294 = vmatprep.subr.mxu0 0.0
    %3295 = vmatpush1.msra.mxu0 0.0
    %3296 = vmatprep.subr.mxu0 0.0
    %3297 = vmatpush1.msra.mxu0 0.0
    %3298 = vmatprep.subr.mxu0 0.0
    %3299 = vmatpush1.msra.mxu0 0.0
    %3300 = vmatprep.subr.mxu0 0.0
    %3301 = vmatpush1.msra.mxu0 0.0
    %3302 = vmatprep.subr.mxu0 0.0
    %3303 = vmatpush1.msra.mxu0 0.0
    %3304 = vmatprep.subr.mxu0 0.0
    %3305 = vmatpush1.msra.mxu0 0.0
    %3306 = vmatprep.subr.mxu0 0.0
    %3307 = vmatpush1.msra.mxu0 0.0
    %3308 = vmatprep.subr.mxu0 0.0
    %3309 = vmatpush1.msra.mxu0 0.0
    %3310 = vmatprep.subr.mxu0 0.0
    %3311 = vmatpush1.msra.mxu0 %v318
    %3312 = vmatprep.subr.mxu0 0.0
    %3313 = vmatpush1.msra.mxu0 %v317
    %3314 = vmatprep.subr.mxu0 0.0
    %3315 = vmatpush1.msra.mxu0 %v316
    %3316 = vmatprep.subr.mxu0 0.0
    %3317 = vmatpush1.msra.mxu0 %v315
    %3318 = vmatprep.subr.mxu0 0.0
    %3319 = vmatpush2.msra.mxu0 0.0
    %3320 = vmatprep.subr.mxu0 0.0
    %3321 = vmatpush2.msra.mxu0 0.0
    %3322 = vmatprep.subr.mxu0 0.0
    %3323 = vmatpush2.msra.mxu0 0.0
    %3324 = vmatprep.subr.mxu0 0.0
    %3325 = vmatpush2.msra.mxu0 0.0
    %3326 = vmatprep.subr.mxu0 0.0
    %3327 = vmatpush2.msra.mxu0 0.0
    %3328 = vmatprep.subr.mxu0 0.0
    %3329 = vmatpush2.msra.mxu0 0.0
    %3330 = vmatprep.subr.mxu0 0.0
    %3331 = vmatpush2.msra.mxu0 0.0
    %3332 = vmatprep.subr.mxu0 0.0
    %3333 = vmatpush2.msra.mxu0 0.0
    %3334 = vmatprep.subr.mxu0 0.0
    %3335 = vmatpush2.msra.mxu0 0.0
    %3336 = vmatprep.subr.mxu0 0.0
    %3337 = vmatpush2.msra.mxu0 0.0
    %3338 = vmatprep.subr.mxu0 0.0
    %3339 = vmatpush2.msra.mxu0 0.0
    %3340 = vmatprep.subr.mxu0 0.0
    %3341 = vmatpush2.msra.mxu0 0.0
    %3342 = vmatprep.subr.mxu0 0.0
    %3343 = vmatpush2.msra.mxu0 0.0
    %3344 = vmatprep.subr.mxu0 0.0
    %3345 = vmatpush2.msra.mxu0 0.0
    %3346 = vmatprep.subr.mxu0 0.0
    %3347 = vmatpush2.msra.mxu0 0.0
    %3348 = vmatprep.subr.mxu0 0.0
    %3349 = vmatpush2.msra.mxu0 0.0
    %3350 = vmatprep.mubr.f32.mxu0 0.0
    %3351 = vmatmul.mubr.f32.gmra.mxu0 %v3281
    %v3352 = vpop.f32.mrf.mxu0
    %v3353 = vadd.f32 %v325, %v3352
    %v3354 = vpop.f32.mrf.mxu0
    %3355 = vmatprep.mubr.f32.mxu0 0.0
    %3356 = vmatmul.mubr.f32.gmra.mxu0 %v3284
    %v3357 = vpop.f32.mrf.mxu0
    %v3358 = vadd.f32 %v325, %v3357
    %v3359 = vpop.f32.mrf.mxu0
    %3360 = vdwg.mxu0
    %v3361 = vadd.f32 %v1897, %v3353
    %v3362 = vadd.f32 %v1898, %v3358
    %v3363 = vsel %vm139, %v3361, 0.0
    %3364 = vadd.xlane.f32.xlu0 %v3363
    %v3365 = vpop.xlane.xlu0 %3364
    %v3366 = vsel %vm139, %v3362, 0.0
    %3367 = vadd.xlane.f32.xlu0 %v3366
    %v3368 = vpop.xlane.xlu0 %3367
    %v3369 = vmul.f32 %v3365, %v1874
    %v3370 = vmul.f32 %v3368, %v1874
    %v3371 = vsub.f32 %v3361, %v3369
    %v3372 = vsub.f32 %v3362, %v3370
    %v3373 = vmul.f32 %v3371, %v3371
    %v3374 = vmul.f32 %v3372, %v3372
    %v3375 = vsel %vm139, %v3373, 0.0
    %3376 = vadd.xlane.f32.xlu0 %v3375
    %v3377 = vpop.xlane.xlu0 %3376
    %v3378 = vsel %vm139, %v3374, 0.0
    %3379 = vadd.xlane.f32.xlu0 %v3378
    %v3380 = vpop.xlane.xlu0 %3379
    %v3381 = vmul.f32 %v3377, %v1874
    %v3382 = vmul.f32 %v3380, %v1874
    %v3383 = vadd.f32 %v3381, 1e-05
    %v3384 = vadd.f32 %v3382, 1e-05
    %v3385 = vrsqrt.pop %v3383
    %v3386 = vrsqrt.pop %v3384
    %v3387 = vmul.f32 %v3371, %v3385
    %v3388 = vmul.f32 %v3372, %v3386
    %v3389 = vmul.f32 %v3387, %v332
    %v3390 = vmul.f32 %v3388, %v332
    %v3391 = vadd.f32 %v3389, %v339
    %v3392 = vadd.f32 %v3390, %v339
    %v3394 = vsel %vm139, %v3391, 0
    %v3397 = vsel %vm139, %v3392, 0
    %3399 = vmatprep.subr.mxu0 0.0
    %3400 = vmatpush1.msra.mxu0 0.0
    %3401 = vmatprep.subr.mxu0 0.0
    %3402 = vmatpush1.msra.mxu0 0.0
    %3403 = vmatprep.subr.mxu0 0.0
    %3404 = vmatpush1.msra.mxu0 0.0
    %3405 = vmatprep.subr.mxu0 0.0
    %3406 = vmatpush1.msra.mxu0 0.0
    %3407 = vmatprep.subr.mxu0 0.0
    %3408 = vmatpush1.msra.mxu0 0.0
    %3409 = vmatprep.subr.mxu0 0.0
    %3410 = vmatpush1.msra.mxu0 0.0
    %3411 = vmatprep.subr.mxu0 0.0
    %3412 = vmatpush1.msra.mxu0 0.0
    %3413 = vmatprep.subr.mxu0 0.0
    %3414 = vmatpush1.msra.mxu0 0.0
    %3415 = vmatprep.subr.mxu0 0.0
    %3416 = vmatpush1.msra.mxu0 0.0
    %3417 = vmatprep.subr.mxu0 0.0
    %3418 = vmatpush1.msra.mxu0 0.0
    %3419 = vmatprep.subr.mxu0 0.0
    %3420 = vmatpush1.msra.mxu0 0.0
    %3421 = vmatprep.subr.mxu0 0.0
    %3422 = vmatpush1.msra.mxu0 0.0
    %3423 = vmatprep.subr.mxu0 0.0
    %3424 = vmatpush1.msra.mxu0 %v314
    %3425 = vmatprep.subr.mxu0 0.0
    %3426 = vmatpush1.msra.mxu0 %v313
    %3427 = vmatprep.subr.mxu0 0.0
    %3428 = vmatpush1.msra.mxu0 %v312
    %3429 = vmatprep.subr.mxu0 0.0
    %3430 = vmatpush1.msra.mxu0 %v311
    %3431 = vmatprep.subr.mxu0 0.0
    %3432 = vmatpush2.msra.mxu0 0.0
    %3433 = vmatprep.subr.mxu0 0.0
    %3434 = vmatpush2.msra.mxu0 0.0
    %3435 = vmatprep.subr.mxu0 0.0
    %3436 = vmatpush2.msra.mxu0 0.0
    %3437 = vmatprep.subr.mxu0 0.0
    %3438 = vmatpush2.msra.mxu0 0.0
    %3439 = vmatprep.subr.mxu0 0.0
    %3440 = vmatpush2.msra.mxu0 0.0
    %3441 = vmatprep.subr.mxu0 0.0
    %3442 = vmatpush2.msra.mxu0 0.0
    %3443 = vmatprep.subr.mxu0 0.0
    %3444 = vmatpush2.msra.mxu0 0.0
    %3445 = vmatprep.subr.mxu0 0.0
    %3446 = vmatpush2.msra.mxu0 0.0
    %3447 = vmatprep.subr.mxu0 0.0
    %3448 = vmatpush2.msra.mxu0 0.0
    %3449 = vmatprep.subr.mxu0 0.0
    %3450 = vmatpush2.msra.mxu0 0.0
    %3451 = vmatprep.subr.mxu0 0.0
    %3452 = vmatpush2.msra.mxu0 0.0
    %3453 = vmatprep.subr.mxu0 0.0
    %3454 = vmatpush2.msra.mxu0 0.0
    %3455 = vmatprep.subr.mxu0 0.0
    %3456 = vmatpush2.msra.mxu0 0.0
    %3457 = vmatprep.subr.mxu0 0.0
    %3458 = vmatpush2.msra.mxu0 0.0
    %3459 = vmatprep.subr.mxu0 0.0
    %3460 = vmatpush2.msra.mxu0 0.0
    %3461 = vmatprep.subr.mxu0 0.0
    %3462 = vmatpush2.msra.mxu0 0.0
    %3463 = vmatprep.mubr.f32.mxu0 0.0
    %3464 = vmatmul.mubr.f32.gmra.mxu0 %v3394
    %v3465 = vpop.f32.mrf.mxu0
    %v3466 = vadd.f32 %v345, %v3465
    %v3467 = vpop.f32.mrf.mxu0
    %3468 = vmatprep.mubr.f32.mxu0 0.0
    %3469 = vmatmul.mubr.f32.gmra.mxu0 %v3397
    %v3470 = vpop.f32.mrf.mxu0
    %v3471 = vadd.f32 %v345, %v3470
    %v3472 = vpop.f32.mrf.mxu0
    %3473 = vdwg.mxu0
    %v3475 = vsel %vm432, %v3466, 0
    %3477 = vmatprep.subr.mxu0 0.0
    %3478 = vmatpush1.xpose.msra.mxu0 0.0
    %3479 = vmatprep.subr.mxu0 0.0
    %3480 = vmatpush1.xpose.msra.mxu0 0.0
    %3481 = vmatprep.subr.mxu0 0.0
    %3482 = vmatpush1.xpose.msra.mxu0 0.0
    %3483 = vmatprep.subr.mxu0 0.0
    %3484 = vmatpush1.xpose.msra.mxu0 0.0
    %3485 = vmatprep.subr.mxu0 0.0
    %3486 = vmatpush1.xpose.msra.mxu0 0.0
    %3487 = vmatprep.subr.mxu0 0.0
    %3488 = vmatpush1.xpose.msra.mxu0 0.0
    %3489 = vmatprep.subr.mxu0 0.0
    %3490 = vmatpush1.xpose.msra.mxu0 0.0
    %3491 = vmatprep.subr.mxu0 0.0
    %3492 = vmatpush1.xpose.msra.mxu0 0.0
    %3493 = vmatprep.subr.mxu0 0.0
    %3494 = vmatpush1.xpose.msra.mxu0 0.0
    %3495 = vmatprep.subr.mxu0 0.0
    %3496 = vmatpush1.xpose.msra.mxu0 0.0
    %3497 = vmatprep.subr.mxu0 0.0
    %3498 = vmatpush1.xpose.msra.mxu0 0.0
    %3499 = vmatprep.subr.mxu0 0.0
    %3500 = vmatpush1.xpose.msra.mxu0 0.0
    %3501 = vmatprep.subr.mxu0 0.0
    %3502 = vmatpush1.xpose.msra.mxu0 0.0
    %3503 = vmatprep.subr.mxu0 0.0
    %3504 = vmatpush1.xpose.msra.mxu0 0.0
    %3505 = vmatprep.subr.mxu0 0.0
    %3506 = vmatpush1.xpose.msra.mxu0 0.0
    %3507 = vmatprep.subr.mxu0 0.0
    %3508 = vmatpush1.xpose.msra.mxu0 %v437
    %3509 = vmatprep.subr.mxu0 0.0
    %3510 = vmatpush2.xpose.msra.mxu0 0.0
    %3511 = vmatprep.subr.mxu0 0.0
    %3512 = vmatpush2.xpose.msra.mxu0 0.0
    %3513 = vmatprep.subr.mxu0 0.0
    %3514 = vmatpush2.xpose.msra.mxu0 0.0
    %3515 = vmatprep.subr.mxu0 0.0
    %3516 = vmatpush2.xpose.msra.mxu0 0.0
    %3517 = vmatprep.subr.mxu0 0.0
    %3518 = vmatpush2.xpose.msra.mxu0 0.0
    %3519 = vmatprep.subr.mxu0 0.0
    %3520 = vmatpush2.xpose.msra.mxu0 0.0
    %3521 = vmatprep.subr.mxu0 0.0
    %3522 = vmatpush2.xpose.msra.mxu0 0.0
    %3523 = vmatprep.subr.mxu0 0.0
    %3524 = vmatpush2.xpose.msra.mxu0 0.0
    %3525 = vmatprep.subr.mxu0 0.0
    %3526 = vmatpush2.xpose.msra.mxu0 0.0
    %3527 = vmatprep.subr.mxu0 0.0
    %3528 = vmatpush2.xpose.msra.mxu0 0.0
    %3529 = vmatprep.subr.mxu0 0.0
    %3530 = vmatpush2.xpose.msra.mxu0 0.0
    %3531 = vmatprep.subr.mxu0 0.0
    %3532 = vmatpush2.xpose.msra.mxu0 0.0
    %3533 = vmatprep.subr.mxu0 0.0
    %3534 = vmatpush2.xpose.msra.mxu0 0.0
    %3535 = vmatprep.subr.mxu0 0.0
    %3536 = vmatpush2.xpose.msra.mxu0 0.0
    %3537 = vmatprep.subr.mxu0 0.0
    %3538 = vmatpush2.xpose.msra.mxu0 0.0
    %3539 = vmatprep.subr.mxu0 0.0
    %3540 = vmatpush2.xpose.msra.mxu0 0.0
    %3541 = vmatprep.mubr.f32.mxu0 0.0
    %3542 = vmatmul.mubr.f32.gmra.mxu0 %v3475
    %v3543 = vpop.f32.mrf.mxu0
    %v3544 = vadd.f32 0.0, %v3543
    %v3545 = vpop.f32.mrf.mxu0
    %3546 = vdwg.mxu0
    %v3547 = vmul.f32 %v3544, 0.35355338
    %v3548 = vsel %vm432, %v3547, -inf
    %3549 = vmax.xlane.f32.xlu0 %v3548
    %v3550 = vpop.xlane.xlu0 %3549
    %v3551 = vsub.f32 %v3547, %v3550
    %v3552 = vmul.f32 %v3551, 1.442695
    %v3553 = vpow.pop %v3552
    %v3554 = vsel %vm432, %v3553, 0.0
    %3555 = vadd.xlane.f32.xlu0 %v3554
    %v3556 = vpop.xlane.xlu0 %3555
    %v3558 = vsel %vm432, %v3553, 0
    %3560 = vmatprep.subr.mxu0 0.0
    %3561 = vmatpush1.msra.mxu0 0.0
    %3562 = vmatprep.subr.mxu0 0.0
    %3563 = vmatpush1.msra.mxu0 0.0
    %3564 = vmatprep.subr.mxu0 0.0
    %3565 = vmatpush1.msra.mxu0 0.0
    %3566 = vmatprep.subr.mxu0 0.0
    %3567 = vmatpush1.msra.mxu0 0.0
    %3568 = vmatprep.subr.mxu0 0.0
    %3569 = vmatpush1.msra.mxu0 0.0
    %3570 = vmatprep.subr.mxu0 0.0
    %3571 = vmatpush1.msra.mxu0 0.0
    %3572 = vmatprep.subr.mxu0 0.0
    %3573 = vmatpush1.msra.mxu0 0.0
    %3574 = vmatprep.subr.mxu0 0.0
    %3575 = vmatpush1.msra.mxu0 0.0
    %3576 = vmatprep.subr.mxu0 0.0
    %3577 = vmatpush1.msra.mxu0 0.0
    %3578 = vmatprep.subr.mxu0 0.0
    %3579 = vmatpush1.msra.mxu0 0.0
    %3580 = vmatprep.subr.mxu0 0.0
    %3581 = vmatpush1.msra.mxu0 0.0
    %3582 = vmatprep.subr.mxu0 0.0
    %3583 = vmatpush1.msra.mxu0 0.0
    %3584 = vmatprep.subr.mxu0 0.0
    %3585 = vmatpush1.msra.mxu0 0.0
    %3586 = vmatprep.subr.mxu0 0.0
    %3587 = vmatpush1.msra.mxu0 0.0
    %3588 = vmatprep.subr.mxu0 0.0
    %3589 = vmatpush1.msra.mxu0 0.0
    %3590 = vmatprep.subr.mxu0 0.0
    %3591 = vmatpush1.msra.mxu0 %v430
    %3592 = vmatprep.subr.mxu0 0.0
    %3593 = vmatpush2.msra.mxu0 0.0
    %3594 = vmatprep.subr.mxu0 0.0
    %3595 = vmatpush2.msra.mxu0 0.0
    %3596 = vmatprep.subr.mxu0 0.0
    %3597 = vmatpush2.msra.mxu0 0.0
    %3598 = vmatprep.subr.mxu0 0.0
    %3599 = vmatpush2.msra.mxu0 0.0
    %3600 = vmatprep.subr.mxu0 0.0
    %3601 = vmatpush2.msra.mxu0 0.0
    %3602 = vmatprep.subr.mxu0 0.0
    %3603 = vmatpush2.msra.mxu0 0.0
    %3604 = vmatprep.subr.mxu0 0.0
    %3605 = vmatpush2.msra.mxu0 0.0
    %3606 = vmatprep.subr.mxu0 0.0
    %3607 = vmatpush2.msra.mxu0 0.0
    %3608 = vmatprep.subr.mxu0 0.0
    %3609 = vmatpush2.msra.mxu0 0.0
    %3610 = vmatprep.subr.mxu0 0.0
    %3611 = vmatpush2.msra.mxu0 0.0
    %3612 = vmatprep.subr.mxu0 0.0
    %3613 = vmatpush2.msra.mxu0 0.0
    %3614 = vmatprep.subr.mxu0 0.0
    %3615 = vmatpush2.msra.mxu0 0.0
    %3616 = vmatprep.subr.mxu0 0.0
    %3617 = vmatpush2.msra.mxu0 0.0
    %3618 = vmatprep.subr.mxu0 0.0
    %3619 = vmatpush2.msra.mxu0 0.0
    %3620 = vmatprep.subr.mxu0 0.0
    %3621 = vmatpush2.msra.mxu0 0.0
    %3622 = vmatprep.subr.mxu0 0.0
    %3623 = vmatpush2.msra.mxu0 0.0
    %3624 = vmatprep.mubr.f32.mxu0 0.0
    %3625 = vmatmul.mubr.f32.gmra.mxu0 %v3558
    %v3626 = vpop.f32.mrf.mxu0
    %v3627 = vadd.f32 0.0, %v3626
    %v3628 = vpop.f32.mrf.mxu0
    %3629 = vdwg.mxu0
    %v3630 = vrcp.pop %v3556
    %v3631 = vmul.f32 %v3627, %v3630
    %3632 = vrot.lane.b32.xlu0 %v3466, 120
    %v3633 = vpop.permute.xlu0 %3632
    %v3634 = vsel %vm432, %v3633, 0
    %3636 = vmatprep.subr.mxu0 0.0
    %3637 = vmatpush1.xpose.msra.mxu0 0.0
    %3638 = vmatprep.subr.mxu0 0.0
    %3639 = vmatpush1.xpose.msra.mxu0 0.0
    %3640 = vmatprep.subr.mxu0 0.0
    %3641 = vmatpush1.xpose.msra.mxu0 0.0
    %3642 = vmatprep.subr.mxu0 0.0
    %3643 = vmatpush1.xpose.msra.mxu0 0.0
    %3644 = vmatprep.subr.mxu0 0.0
    %3645 = vmatpush1.xpose.msra.mxu0 0.0
    %3646 = vmatprep.subr.mxu0 0.0
    %3647 = vmatpush1.xpose.msra.mxu0 0.0
    %3648 = vmatprep.subr.mxu0 0.0
    %3649 = vmatpush1.xpose.msra.mxu0 0.0
    %3650 = vmatprep.subr.mxu0 0.0
    %3651 = vmatpush1.xpose.msra.mxu0 0.0
    %3652 = vmatprep.subr.mxu0 0.0
    %3653 = vmatpush1.xpose.msra.mxu0 0.0
    %3654 = vmatprep.subr.mxu0 0.0
    %3655 = vmatpush1.xpose.msra.mxu0 0.0
    %3656 = vmatprep.subr.mxu0 0.0
    %3657 = vmatpush1.xpose.msra.mxu0 0.0
    %3658 = vmatprep.subr.mxu0 0.0
    %3659 = vmatpush1.xpose.msra.mxu0 0.0
    %3660 = vmatprep.subr.mxu0 0.0
    %3661 = vmatpush1.xpose.msra.mxu0 0.0
    %3662 = vmatprep.subr.mxu0 0.0
    %3663 = vmatpush1.xpose.msra.mxu0 0.0
    %3664 = vmatprep.subr.mxu0 0.0
    %3665 = vmatpush1.xpose.msra.mxu0 0.0
    %3666 = vmatprep.subr.mxu0 0.0
    %3667 = vmatpush1.xpose.msra.mxu0 %v600
    %3668 = vmatprep.subr.mxu0 0.0
    %3669 = vmatpush2.xpose.msra.mxu0 0.0
    %3670 = vmatprep.subr.mxu0 0.0
    %3671 = vmatpush2.xpose.msra.mxu0 0.0
    %3672 = vmatprep.subr.mxu0 0.0
    %3673 = vmatpush2.xpose.msra.mxu0 0.0
    %3674 = vmatprep.subr.mxu0 0.0
    %3675 = vmatpush2.xpose.msra.mxu0 0.0
    %3676 = vmatprep.subr.mxu0 0.0
    %3677 = vmatpush2.xpose.msra.mxu0 0.0
    %3678 = vmatprep.subr.mxu0 0.0
    %3679 = vmatpush2.xpose.msra.mxu0 0.0
    %3680 = vmatprep.subr.mxu0 0.0
    %3681 = vmatpush2.xpose.msra.mxu0 0.0
    %3682 = vmatprep.subr.mxu0 0.0
    %3683 = vmatpush2.xpose.msra.mxu0 0.0
    %3684 = vmatprep.subr.mxu0 0.0
    %3685 = vmatpush2.xpose.msra.mxu0 0.0
    %3686 = vmatprep.subr.mxu0 0.0
    %3687 = vmatpush2.xpose.msra.mxu0 0.0
    %3688 = vmatprep.subr.mxu0 0.0
    %3689 = vmatpush2.xpose.msra.mxu0 0.0
    %3690 = vmatprep.subr.mxu0 0.0
    %3691 = vmatpush2.xpose.msra.mxu0 0.0
    %3692 = vmatprep.subr.mxu0 0.0
    %3693 = vmatpush2.xpose.msra.mxu0 0.0
    %3694 = vmatprep.subr.mxu0 0.0
    %3695 = vmatpush2.xpose.msra.mxu0 0.0
    %3696 = vmatprep.subr.mxu0 0.0
    %3697 = vmatpush2.xpose.msra.mxu0 0.0
    %3698 = vmatprep.subr.mxu0 0.0
    %3699 = vmatpush2.xpose.msra.mxu0 0.0
    %3700 = vmatprep.mubr.f32.mxu0 0.0
    %3701 = vmatmul.mubr.f32.gmra.mxu0 %v3634
    %v3702 = vpop.f32.mrf.mxu0
    %v3703 = vadd.f32 0.0, %v3702
    %v3704 = vpop.f32.mrf.mxu0
    %3705 = vdwg.mxu0
    %v3706 = vmul.f32 %v3703, 0.35355338
    %v3707 = vsel %vm432, %v3706, -inf
    %3708 = vmax.xlane.f32.xlu0 %v3707
    %v3709 = vpop.xlane.xlu0 %3708
    %v3710 = vsub.f32 %v3706, %v3709
    %v3711 = vmul.f32 %v3710, 1.442695
    %v3712 = vpow.pop %v3711
    %v3713 = vsel %vm432, %v3712, 0.0
    %3714 = vadd.xlane.f32.xlu0 %v3713
    %v3715 = vpop.xlane.xlu0 %3714
    %v3717 = vsel %vm432, %v3712, 0
    %3719 = vmatprep.subr.mxu0 0.0
    %3720 = vmatpush1.msra.mxu0 0.0
    %3721 = vmatprep.subr.mxu0 0.0
    %3722 = vmatpush1.msra.mxu0 0.0
    %3723 = vmatprep.subr.mxu0 0.0
    %3724 = vmatpush1.msra.mxu0 0.0
    %3725 = vmatprep.subr.mxu0 0.0
    %3726 = vmatpush1.msra.mxu0 0.0
    %3727 = vmatprep.subr.mxu0 0.0
    %3728 = vmatpush1.msra.mxu0 0.0
    %3729 = vmatprep.subr.mxu0 0.0
    %3730 = vmatpush1.msra.mxu0 0.0
    %3731 = vmatprep.subr.mxu0 0.0
    %3732 = vmatpush1.msra.mxu0 0.0
    %3733 = vmatprep.subr.mxu0 0.0
    %3734 = vmatpush1.msra.mxu0 0.0
    %3735 = vmatprep.subr.mxu0 0.0
    %3736 = vmatpush1.msra.mxu0 0.0
    %3737 = vmatprep.subr.mxu0 0.0
    %3738 = vmatpush1.msra.mxu0 0.0
    %3739 = vmatprep.subr.mxu0 0.0
    %3740 = vmatpush1.msra.mxu0 0.0
    %3741 = vmatprep.subr.mxu0 0.0
    %3742 = vmatpush1.msra.mxu0 0.0
    %3743 = vmatprep.subr.mxu0 0.0
    %3744 = vmatpush1.msra.mxu0 0.0
    %3745 = vmatprep.subr.mxu0 0.0
    %3746 = vmatpush1.msra.mxu0 0.0
    %3747 = vmatprep.subr.mxu0 0.0
    %3748 = vmatpush1.msra.mxu0 0.0
    %3749 = vmatprep.subr.mxu0 0.0
    %3750 = vmatpush1.msra.mxu0 %v684
    %3751 = vmatprep.subr.mxu0 0.0
    %3752 = vmatpush2.msra.mxu0 0.0
    %3753 = vmatprep.subr.mxu0 0.0
    %3754 = vmatpush2.msra.mxu0 0.0
    %3755 = vmatprep.subr.mxu0 0.0
    %3756 = vmatpush2.msra.mxu0 0.0
    %3757 = vmatprep.subr.mxu0 0.0
    %3758 = vmatpush2.msra.mxu0 0.0
    %3759 = vmatprep.subr.mxu0 0.0
    %3760 = vmatpush2.msra.mxu0 0.0
    %3761 = vmatprep.subr.mxu0 0.0
    %3762 = vmatpush2.msra.mxu0 0.0
    %3763 = vmatprep.subr.mxu0 0.0
    %3764 = vmatpush2.msra.mxu0 0.0
    %3765 = vmatprep.subr.mxu0 0.0
    %3766 = vmatpush2.msra.mxu0 0.0
    %3767 = vmatprep.subr.mxu0 0.0
    %3768 = vmatpush2.msra.mxu0 0.0
    %3769 = vmatprep.subr.mxu0 0.0
    %3770 = vmatpush2.msra.mxu0 0.0
    %3771 = vmatprep.subr.mxu0 0.0
    %3772 = vmatpush2.msra.mxu0 0.0
    %3773 = vmatprep.subr.mxu0 0.0
    %3774 = vmatpush2.msra.mxu0 0.0
    %3775 = vmatprep.subr.mxu0 0.0
    %3776 = vmatpush2.msra.mxu0 0.0
    %3777 = vmatprep.subr.mxu0 0.0
    %3778 = vmatpush2.msra.mxu0 0.0
    %3779 = vmatprep.subr.mxu0 0.0
    %3780 = vmatpush2.msra.mxu0 0.0
    %3781 = vmatprep.subr.mxu0 0.0
    %3782 = vmatpush2.msra.mxu0 0.0
    %3783 = vmatprep.mubr.f32.mxu0 0.0
    %3784 = vmatmul.mubr.f32.gmra.mxu0 %v3717
    %v3785 = vpop.f32.mrf.mxu0
    %v3786 = vadd.f32 0.0, %v3785
    %v3787 = vpop.f32.mrf.mxu0
    %3788 = vdwg.mxu0
    %v3789 = vrcp.pop %v3715
    %v3790 = vmul.f32 %v3786, %v3789
    %3791 = vrot.lane.b32.xlu0 %v3466, 112
    %v3792 = vpop.permute.xlu0 %3791
    %v3793 = vsel %vm432, %v3792, 0
    %3795 = vmatprep.subr.mxu0 0.0
    %3796 = vmatpush1.xpose.msra.mxu0 0.0
    %3797 = vmatprep.subr.mxu0 0.0
    %3798 = vmatpush1.xpose.msra.mxu0 0.0
    %3799 = vmatprep.subr.mxu0 0.0
    %3800 = vmatpush1.xpose.msra.mxu0 0.0
    %3801 = vmatprep.subr.mxu0 0.0
    %3802 = vmatpush1.xpose.msra.mxu0 0.0
    %3803 = vmatprep.subr.mxu0 0.0
    %3804 = vmatpush1.xpose.msra.mxu0 0.0
    %3805 = vmatprep.subr.mxu0 0.0
    %3806 = vmatpush1.xpose.msra.mxu0 0.0
    %3807 = vmatprep.subr.mxu0 0.0
    %3808 = vmatpush1.xpose.msra.mxu0 0.0
    %3809 = vmatprep.subr.mxu0 0.0
    %3810 = vmatpush1.xpose.msra.mxu0 0.0
    %3811 = vmatprep.subr.mxu0 0.0
    %3812 = vmatpush1.xpose.msra.mxu0 0.0
    %3813 = vmatprep.subr.mxu0 0.0
    %3814 = vmatpush1.xpose.msra.mxu0 0.0
    %3815 = vmatprep.subr.mxu0 0.0
    %3816 = vmatpush1.xpose.msra.mxu0 0.0
    %3817 = vmatprep.subr.mxu0 0.0
    %3818 = vmatpush1.xpose.msra.mxu0 0.0
    %3819 = vmatprep.subr.mxu0 0.0
    %3820 = vmatpush1.xpose.msra.mxu0 0.0
    %3821 = vmatprep.subr.mxu0 0.0
    %3822 = vmatpush1.xpose.msra.mxu0 0.0
    %3823 = vmatprep.subr.mxu0 0.0
    %3824 = vmatpush1.xpose.msra.mxu0 0.0
    %3825 = vmatprep.subr.mxu0 0.0
    %3826 = vmatpush1.xpose.msra.mxu0 %v767
    %3827 = vmatprep.subr.mxu0 0.0
    %3828 = vmatpush2.xpose.msra.mxu0 0.0
    %3829 = vmatprep.subr.mxu0 0.0
    %3830 = vmatpush2.xpose.msra.mxu0 0.0
    %3831 = vmatprep.subr.mxu0 0.0
    %3832 = vmatpush2.xpose.msra.mxu0 0.0
    %3833 = vmatprep.subr.mxu0 0.0
    %3834 = vmatpush2.xpose.msra.mxu0 0.0
    %3835 = vmatprep.subr.mxu0 0.0
    %3836 = vmatpush2.xpose.msra.mxu0 0.0
    %3837 = vmatprep.subr.mxu0 0.0
    %3838 = vmatpush2.xpose.msra.mxu0 0.0
    %3839 = vmatprep.subr.mxu0 0.0
    %3840 = vmatpush2.xpose.msra.mxu0 0.0
    %3841 = vmatprep.subr.mxu0 0.0
    %3842 = vmatpush2.xpose.msra.mxu0 0.0
    %3843 = vmatprep.subr.mxu0 0.0
    %3844 = vmatpush2.xpose.msra.mxu0 0.0
    %3845 = vmatprep.subr.mxu0 0.0
    %3846 = vmatpush2.xpose.msra.mxu0 0.0
    %3847 = vmatprep.subr.mxu0 0.0
    %3848 = vmatpush2.xpose.msra.mxu0 0.0
    %3849 = vmatprep.subr.mxu0 0.0
    %3850 = vmatpush2.xpose.msra.mxu0 0.0
    %3851 = vmatprep.subr.mxu0 0.0
    %3852 = vmatpush2.xpose.msra.mxu0 0.0
    %3853 = vmatprep.subr.mxu0 0.0
    %3854 = vmatpush2.xpose.msra.mxu0 0.0
    %3855 = vmatprep.subr.mxu0 0.0
    %3856 = vmatpush2.xpose.msra.mxu0 0.0
    %3857 = vmatprep.subr.mxu0 0.0
    %3858 = vmatpush2.xpose.msra.mxu0 0.0
    %3859 = vmatprep.mubr.f32.mxu0 0.0
    %3860 = vmatmul.mubr.f32.gmra.mxu0 %v3793
    %v3861 = vpop.f32.mrf.mxu0
    %v3862 = vadd.f32 0.0, %v3861
    %v3863 = vpop.f32.mrf.mxu0
    %3864 = vdwg.mxu0
    %v3865 = vmul.f32 %v3862, 0.35355338
    %v3866 = vsel %vm432, %v3865, -inf
    %3867 = vmax.xlane.f32.xlu0 %v3866
    %v3868 = vpop.xlane.xlu0 %3867
    %v3869 = vsub.f32 %v3865, %v3868
    %v3870 = vmul.f32 %v3869, 1.442695
    %v3871 = vpow.pop %v3870
    %v3872 = vsel %vm432, %v3871, 0.0
    %3873 = vadd.xlane.f32.xlu0 %v3872
    %v3874 = vpop.xlane.xlu0 %3873
    %v3876 = vsel %vm432, %v3871, 0
    %3878 = vmatprep.subr.mxu0 0.0
    %3879 = vmatpush1.msra.mxu0 0.0
    %3880 = vmatprep.subr.mxu0 0.0
    %3881 = vmatpush1.msra.mxu0 0.0
    %3882 = vmatprep.subr.mxu0 0.0
    %3883 = vmatpush1.msra.mxu0 0.0
    %3884 = vmatprep.subr.mxu0 0.0
    %3885 = vmatpush1.msra.mxu0 0.0
    %3886 = vmatprep.subr.mxu0 0.0
    %3887 = vmatpush1.msra.mxu0 0.0
    %3888 = vmatprep.subr.mxu0 0.0
    %3889 = vmatpush1.msra.mxu0 0.0
    %3890 = vmatprep.subr.mxu0 0.0
    %3891 = vmatpush1.msra.mxu0 0.0
    %3892 = vmatprep.subr.mxu0 0.0
    %3893 = vmatpush1.msra.mxu0 0.0
    %3894 = vmatprep.subr.mxu0 0.0
    %3895 = vmatpush1.msra.mxu0 0.0
    %3896 = vmatprep.subr.mxu0 0.0
    %3897 = vmatpush1.msra.mxu0 0.0
    %3898 = vmatprep.subr.mxu0 0.0
    %3899 = vmatpush1.msra.mxu0 0.0
    %3900 = vmatprep.subr.mxu0 0.0
    %3901 = vmatpush1.msra.mxu0 0.0
    %3902 = vmatprep.subr.mxu0 0.0
    %3903 = vmatpush1.msra.mxu0 0.0
    %3904 = vmatprep.subr.mxu0 0.0
    %3905 = vmatpush1.msra.mxu0 0.0
    %3906 = vmatprep.subr.mxu0 0.0
    %3907 = vmatpush1.msra.mxu0 0.0
    %3908 = vmatprep.subr.mxu0 0.0
    %3909 = vmatpush1.msra.mxu0 %v850
    %3910 = vmatprep.subr.mxu0 0.0
    %3911 = vmatpush2.msra.mxu0 0.0
    %3912 = vmatprep.subr.mxu0 0.0
    %3913 = vmatpush2.msra.mxu0 0.0
    %3914 = vmatprep.subr.mxu0 0.0
    %3915 = vmatpush2.msra.mxu0 0.0
    %3916 = vmatprep.subr.mxu0 0.0
    %3917 = vmatpush2.msra.mxu0 0.0
    %3918 = vmatprep.subr.mxu0 0.0
    %3919 = vmatpush2.msra.mxu0 0.0
    %3920 = vmatprep.subr.mxu0 0.0
    %3921 = vmatpush2.msra.mxu0 0.0
    %3922 = vmatprep.subr.mxu0 0.0
    %3923 = vmatpush2.msra.mxu0 0.0
    %3924 = vmatprep.subr.mxu0 0.0
    %3925 = vmatpush2.msra.mxu0 0.0
    %3926 = vmatprep.subr.mxu0 0.0
    %3927 = vmatpush2.msra.mxu0 0.0
    %3928 = vmatprep.subr.mxu0 0.0
    %3929 = vmatpush2.msra.mxu0 0.0
    %3930 = vmatprep.subr.mxu0 0.0
    %3931 = vmatpush2.msra.mxu0 0.0
    %3932 = vmatprep.subr.mxu0 0.0
    %3933 = vmatpush2.msra.mxu0 0.0
    %3934 = vmatprep.subr.mxu0 0.0
    %3935 = vmatpush2.msra.mxu0 0.0
    %3936 = vmatprep.subr.mxu0 0.0
    %3937 = vmatpush2.msra.mxu0 0.0
    %3938 = vmatprep.subr.mxu0 0.0
    %3939 = vmatpush2.msra.mxu0 0.0
    %3940 = vmatprep.subr.mxu0 0.0
    %3941 = vmatpush2.msra.mxu0 0.0
    %3942 = vmatprep.mubr.f32.mxu0 0.0
    %3943 = vmatmul.mubr.f32.gmra.mxu0 %v3876
    %v3944 = vpop.f32.mrf.mxu0
    %v3945 = vadd.f32 0.0, %v3944
    %v3946 = vpop.f32.mrf.mxu0
    %3947 = vdwg.mxu0
    %v3948 = vrcp.pop %v3874
    %v3949 = vmul.f32 %v3945, %v3948
    %3950 = vrot.lane.b32.xlu0 %v3466, 104
    %v3951 = vpop.permute.xlu0 %3950
    %v3952 = vsel %vm432, %v3951, 0
    %3954 = vmatprep.subr.mxu0 0.0
    %3955 = vmatpush1.xpose.msra.mxu0 0.0
    %3956 = vmatprep.subr.mxu0 0.0
    %3957 = vmatpush1.xpose.msra.mxu0 0.0
    %3958 = vmatprep.subr.mxu0 0.0
    %3959 = vmatpush1.xpose.msra.mxu0 0.0
    %3960 = vmatprep.subr.mxu0 0.0
    %3961 = vmatpush1.xpose.msra.mxu0 0.0
    %3962 = vmatprep.subr.mxu0 0.0
    %3963 = vmatpush1.xpose.msra.mxu0 0.0
    %3964 = vmatprep.subr.mxu0 0.0
    %3965 = vmatpush1.xpose.msra.mxu0 0.0
    %3966 = vmatprep.subr.mxu0 0.0
    %3967 = vmatpush1.xpose.msra.mxu0 0.0
    %3968 = vmatprep.subr.mxu0 0.0
    %3969 = vmatpush1.xpose.msra.mxu0 0.0
    %3970 = vmatprep.subr.mxu0 0.0
    %3971 = vmatpush1.xpose.msra.mxu0 0.0
    %3972 = vmatprep.subr.mxu0 0.0
    %3973 = vmatpush1.xpose.msra.mxu0 0.0
    %3974 = vmatprep.subr.mxu0 0.0
    %3975 = vmatpush1.xpose.msra.mxu0 0.0
    %3976 = vmatprep.subr.mxu0 0.0
    %3977 = vmatpush1.xpose.msra.mxu0 0.0
    %3978 = vmatprep.subr.mxu0 0.0
    %3979 = vmatpush1.xpose.msra.mxu0 0.0
    %3980 = vmatprep.subr.mxu0 0.0
    %3981 = vmatpush1.xpose.msra.mxu0 0.0
    %3982 = vmatprep.subr.mxu0 0.0
    %3983 = vmatpush1.xpose.msra.mxu0 0.0
    %3984 = vmatprep.subr.mxu0 0.0
    %3985 = vmatpush1.xpose.msra.mxu0 %v933
    %3986 = vmatprep.subr.mxu0 0.0
    %3987 = vmatpush2.xpose.msra.mxu0 0.0
    %3988 = vmatprep.subr.mxu0 0.0
    %3989 = vmatpush2.xpose.msra.mxu0 0.0
    %3990 = vmatprep.subr.mxu0 0.0
    %3991 = vmatpush2.xpose.msra.mxu0 0.0
    %3992 = vmatprep.subr.mxu0 0.0
    %3993 = vmatpush2.xpose.msra.mxu0 0.0
    %3994 = vmatprep.subr.mxu0 0.0
    %3995 = vmatpush2.xpose.msra.mxu0 0.0
    %3996 = vmatprep.subr.mxu0 0.0
    %3997 = vmatpush2.xpose.msra.mxu0 0.0
    %3998 = vmatprep.subr.mxu0 0.0
    %3999 = vmatpush2.xpose.msra.mxu0 0.0
    %4000 = vmatprep.subr.mxu0 0.0
    %4001 = vmatpush2.xpose.msra.mxu0 0.0
    %4002 = vmatprep.subr.mxu0 0.0
    %4003 = vmatpush2.xpose.msra.mxu0 0.0
    %4004 = vmatprep.subr.mxu0 0.0
    %4005 = vmatpush2.xpose.msra.mxu0 0.0
    %4006 = vmatprep.subr.mxu0 0.0
    %4007 = vmatpush2.xpose.msra.mxu0 0.0
    %4008 = vmatprep.subr.mxu0 0.0
    %4009 = vmatpush2.xpose.msra.mxu0 0.0
    %4010 = vmatprep.subr.mxu0 0.0
    %4011 = vmatpush2.xpose.msra.mxu0 0.0
    %4012 = vmatprep.subr.mxu0 0.0
    %4013 = vmatpush2.xpose.msra.mxu0 0.0
    %4014 = vmatprep.subr.mxu0 0.0
    %4015 = vmatpush2.xpose.msra.mxu0 0.0
    %4016 = vmatprep.subr.mxu0 0.0
    %4017 = vmatpush2.xpose.msra.mxu0 0.0
    %4018 = vmatprep.mubr.f32.mxu0 0.0
    %4019 = vmatmul.mubr.f32.gmra.mxu0 %v3952
    %v4020 = vpop.f32.mrf.mxu0
    %v4021 = vadd.f32 0.0, %v4020
    %v4022 = vpop.f32.mrf.mxu0
    %4023 = vdwg.mxu0
    %v4024 = vmul.f32 %v4021, 0.35355338
    %v4025 = vsel %vm432, %v4024, -inf
    %4026 = vmax.xlane.f32.xlu0 %v4025
    %v4027 = vpop.xlane.xlu0 %4026
    %v4028 = vsub.f32 %v4024, %v4027
    %v4029 = vmul.f32 %v4028, 1.442695
    %v4030 = vpow.pop %v4029
    %v4031 = vsel %vm432, %v4030, 0.0
    %4032 = vadd.xlane.f32.xlu0 %v4031
    %v4033 = vpop.xlane.xlu0 %4032
    %v4035 = vsel %vm432, %v4030, 0
    %4037 = vmatprep.subr.mxu0 0.0
    %4038 = vmatpush1.msra.mxu0 0.0
    %4039 = vmatprep.subr.mxu0 0.0
    %4040 = vmatpush1.msra.mxu0 0.0
    %4041 = vmatprep.subr.mxu0 0.0
    %4042 = vmatpush1.msra.mxu0 0.0
    %4043 = vmatprep.subr.mxu0 0.0
    %4044 = vmatpush1.msra.mxu0 0.0
    %4045 = vmatprep.subr.mxu0 0.0
    %4046 = vmatpush1.msra.mxu0 0.0
    %4047 = vmatprep.subr.mxu0 0.0
    %4048 = vmatpush1.msra.mxu0 0.0
    %4049 = vmatprep.subr.mxu0 0.0
    %4050 = vmatpush1.msra.mxu0 0.0
    %4051 = vmatprep.subr.mxu0 0.0
    %4052 = vmatpush1.msra.mxu0 0.0
    %4053 = vmatprep.subr.mxu0 0.0
    %4054 = vmatpush1.msra.mxu0 0.0
    %4055 = vmatprep.subr.mxu0 0.0
    %4056 = vmatpush1.msra.mxu0 0.0
    %4057 = vmatprep.subr.mxu0 0.0
    %4058 = vmatpush1.msra.mxu0 0.0
    %4059 = vmatprep.subr.mxu0 0.0
    %4060 = vmatpush1.msra.mxu0 0.0
    %4061 = vmatprep.subr.mxu0 0.0
    %4062 = vmatpush1.msra.mxu0 0.0
    %4063 = vmatprep.subr.mxu0 0.0
    %4064 = vmatpush1.msra.mxu0 0.0
    %4065 = vmatprep.subr.mxu0 0.0
    %4066 = vmatpush1.msra.mxu0 0.0
    %4067 = vmatprep.subr.mxu0 0.0
    %4068 = vmatpush1.msra.mxu0 %v1016
    %4069 = vmatprep.subr.mxu0 0.0
    %4070 = vmatpush2.msra.mxu0 0.0
    %4071 = vmatprep.subr.mxu0 0.0
    %4072 = vmatpush2.msra.mxu0 0.0
    %4073 = vmatprep.subr.mxu0 0.0
    %4074 = vmatpush2.msra.mxu0 0.0
    %4075 = vmatprep.subr.mxu0 0.0
    %4076 = vmatpush2.msra.mxu0 0.0
    %4077 = vmatprep.subr.mxu0 0.0
    %4078 = vmatpush2.msra.mxu0 0.0
    %4079 = vmatprep.subr.mxu0 0.0
    %4080 = vmatpush2.msra.mxu0 0.0
    %4081 = vmatprep.subr.mxu0 0.0
    %4082 = vmatpush2.msra.mxu0 0.0
    %4083 = vmatprep.subr.mxu0 0.0
    %4084 = vmatpush2.msra.mxu0 0.0
    %4085 = vmatprep.subr.mxu0 0.0
    %4086 = vmatpush2.msra.mxu0 0.0
    %4087 = vmatprep.subr.mxu0 0.0
    %4088 = vmatpush2.msra.mxu0 0.0
    %4089 = vmatprep.subr.mxu0 0.0
    %4090 = vmatpush2.msra.mxu0 0.0
    %4091 = vmatprep.subr.mxu0 0.0
    %4092 = vmatpush2.msra.mxu0 0.0
    %4093 = vmatprep.subr.mxu0 0.0
    %4094 = vmatpush2.msra.mxu0 0.0
    %4095 = vmatprep.subr.mxu0 0.0
    %4096 = vmatpush2.msra.mxu0 0.0
    %4097 = vmatprep.subr.mxu0 0.0
    %4098 = vmatpush2.msra.mxu0 0.0
    %4099 = vmatprep.subr.mxu0 0.0
    %4100 = vmatpush2.msra.mxu0 0.0
    %4101 = vmatprep.mubr.f32.mxu0 0.0
    %4102 = vmatmul.mubr.f32.gmra.mxu0 %v4035
    %v4103 = vpop.f32.mrf.mxu0
    %v4104 = vadd.f32 0.0, %v4103
    %v4105 = vpop.f32.mrf.mxu0
    %4106 = vdwg.mxu0
    %v4107 = vrcp.pop %v4033
    %v4108 = vmul.f32 %v4104, %v4107
    %4110 = vrot.lane.b32.xlu0 %v3790, 8
    %v4111 = vpop.permute.xlu0 %4110
    %4114 = vrot.lane.b32.xlu0 %v3949, 16
    %v4115 = vpop.permute.xlu0 %4114
    %4118 = vrot.lane.b32.xlu0 %v4108, 24
    %v4119 = vpop.permute.xlu0 %4118
    %v4121 = vsel %vm432, %v3631, %v4111
    %v4122 = vsel %vm1106, %v4121, %v4115
    %v4123 = vsel %vm1108, %v4122, %v4119
    %v4125 = vsel %vm432, %v3471, 0
    %4127 = vmatprep.subr.mxu0 0.0
    %4128 = vmatpush1.xpose.msra.mxu0 0.0
    %4129 = vmatprep.subr.mxu0 0.0
    %4130 = vmatpush1.xpose.msra.mxu0 0.0
    %4131 = vmatprep.subr.mxu0 0.0
    %4132 = vmatpush1.xpose.msra.mxu0 0.0
    %4133 = vmatprep.subr.mxu0 0.0
    %4134 = vmatpush1.xpose.msra.mxu0 0.0
    %4135 = vmatprep.subr.mxu0 0.0
    %4136 = vmatpush1.xpose.msra.mxu0 0.0
    %4137 = vmatprep.subr.mxu0 0.0
    %4138 = vmatpush1.xpose.msra.mxu0 0.0
    %4139 = vmatprep.subr.mxu0 0.0
    %4140 = vmatpush1.xpose.msra.mxu0 0.0
    %4141 = vmatprep.subr.mxu0 0.0
    %4142 = vmatpush1.xpose.msra.mxu0 0.0
    %4143 = vmatprep.subr.mxu0 0.0
    %4144 = vmatpush1.xpose.msra.mxu0 0.0
    %4145 = vmatprep.subr.mxu0 0.0
    %4146 = vmatpush1.xpose.msra.mxu0 0.0
    %4147 = vmatprep.subr.mxu0 0.0
    %4148 = vmatpush1.xpose.msra.mxu0 0.0
    %4149 = vmatprep.subr.mxu0 0.0
    %4150 = vmatpush1.xpose.msra.mxu0 0.0
    %4151 = vmatprep.subr.mxu0 0.0
    %4152 = vmatpush1.xpose.msra.mxu0 0.0
    %4153 = vmatprep.subr.mxu0 0.0
    %4154 = vmatpush1.xpose.msra.mxu0 0.0
    %4155 = vmatprep.subr.mxu0 0.0
    %4156 = vmatpush1.xpose.msra.mxu0 0.0
    %4157 = vmatprep.subr.mxu0 0.0
    %4158 = vmatpush1.xpose.msra.mxu0 %v1114
    %4159 = vmatprep.subr.mxu0 0.0
    %4160 = vmatpush2.xpose.msra.mxu0 0.0
    %4161 = vmatprep.subr.mxu0 0.0
    %4162 = vmatpush2.xpose.msra.mxu0 0.0
    %4163 = vmatprep.subr.mxu0 0.0
    %4164 = vmatpush2.xpose.msra.mxu0 0.0
    %4165 = vmatprep.subr.mxu0 0.0
    %4166 = vmatpush2.xpose.msra.mxu0 0.0
    %4167 = vmatprep.subr.mxu0 0.0
    %4168 = vmatpush2.xpose.msra.mxu0 0.0
    %4169 = vmatprep.subr.mxu0 0.0
    %4170 = vmatpush2.xpose.msra.mxu0 0.0
    %4171 = vmatprep.subr.mxu0 0.0
    %4172 = vmatpush2.xpose.msra.mxu0 0.0
    %4173 = vmatprep.subr.mxu0 0.0
    %4174 = vmatpush2.xpose.msra.mxu0 0.0
    %4175 = vmatprep.subr.mxu0 0.0
    %4176 = vmatpush2.xpose.msra.mxu0 0.0
    %4177 = vmatprep.subr.mxu0 0.0
    %4178 = vmatpush2.xpose.msra.mxu0 0.0
    %4179 = vmatprep.subr.mxu0 0.0
    %4180 = vmatpush2.xpose.msra.mxu0 0.0
    %4181 = vmatprep.subr.mxu0 0.0
    %4182 = vmatpush2.xpose.msra.mxu0 0.0
    %4183 = vmatprep.subr.mxu0 0.0
    %4184 = vmatpush2.xpose.msra.mxu0 0.0
    %4185 = vmatprep.subr.mxu0 0.0
    %4186 = vmatpush2.xpose.msra.mxu0 0.0
    %4187 = vmatprep.subr.mxu0 0.0
    %4188 = vmatpush2.xpose.msra.mxu0 0.0
    %4189 = vmatprep.subr.mxu0 0.0
    %4190 = vmatpush2.xpose.msra.mxu0 0.0
    %4191 = vmatprep.mubr.f32.mxu0 0.0
    %4192 = vmatmul.mubr.f32.gmra.mxu0 %v4125
    %v4193 = vpop.f32.mrf.mxu0
    %v4194 = vadd.f32 0.0, %v4193
    %v4195 = vpop.f32.mrf.mxu0
    %4196 = vdwg.mxu0
    %v4197 = vmul.f32 %v4194, 0.35355338
    %v4198 = vsel %vm432, %v4197, -inf
    %4199 = vmax.xlane.f32.xlu0 %v4198
    %v4200 = vpop.xlane.xlu0 %4199
    %v4201 = vsub.f32 %v4197, %v4200
    %v4202 = vmul.f32 %v4201, 1.442695
    %v4203 = vpow.pop %v4202
    %v4204 = vsel %vm432, %v4203, 0.0
    %4205 = vadd.xlane.f32.xlu0 %v4204
    %v4206 = vpop.xlane.xlu0 %4205
    %v4208 = vsel %vm432, %v4203, 0
    %4210 = vmatprep.subr.mxu0 0.0
    %4211 = vmatpush1.msra.mxu0 0.0
    %4212 = vmatprep.subr.mxu0 0.0
    %4213 = vmatpush1.msra.mxu0 0.0
    %4214 = vmatprep.subr.mxu0 0.0
    %4215 = vmatpush1.msra.mxu0 0.0
    %4216 = vmatprep.subr.mxu0 0.0
    %4217 = vmatpush1.msra.mxu0 0.0
    %4218 = vmatprep.subr.mxu0 0.0
    %4219 = vmatpush1.msra.mxu0 0.0
    %4220 = vmatprep.subr.mxu0 0.0
    %4221 = vmatpush1.msra.mxu0 0.0
    %4222 = vmatprep.subr.mxu0 0.0
    %4223 = vmatpush1.msra.mxu0 0.0
    %4224 = vmatprep.subr.mxu0 0.0
    %4225 = vmatpush1.msra.mxu0 0.0
    %4226 = vmatprep.subr.mxu0 0.0
    %4227 = vmatpush1.msra.mxu0 0.0
    %4228 = vmatprep.subr.mxu0 0.0
    %4229 = vmatpush1.msra.mxu0 0.0
    %4230 = vmatprep.subr.mxu0 0.0
    %4231 = vmatpush1.msra.mxu0 0.0
    %4232 = vmatprep.subr.mxu0 0.0
    %4233 = vmatpush1.msra.mxu0 0.0
    %4234 = vmatprep.subr.mxu0 0.0
    %4235 = vmatpush1.msra.mxu0 0.0
    %4236 = vmatprep.subr.mxu0 0.0
    %4237 = vmatpush1.msra.mxu0 0.0
    %4238 = vmatprep.subr.mxu0 0.0
    %4239 = vmatpush1.msra.mxu0 0.0
    %4240 = vmatprep.subr.mxu0 0.0
    %4241 = vmatpush1.msra.mxu0 %v431
    %4242 = vmatprep.subr.mxu0 0.0
    %4243 = vmatpush2.msra.mxu0 0.0
    %4244 = vmatprep.subr.mxu0 0.0
    %4245 = vmatpush2.msra.mxu0 0.0
    %4246 = vmatprep.subr.mxu0 0.0
    %4247 = vmatpush2.msra.mxu0 0.0
    %4248 = vmatprep.subr.mxu0 0.0
    %4249 = vmatpush2.msra.mxu0 0.0
    %4250 = vmatprep.subr.mxu0 0.0
    %4251 = vmatpush2.msra.mxu0 0.0
    %4252 = vmatprep.subr.mxu0 0.0
    %4253 = vmatpush2.msra.mxu0 0.0
    %4254 = vmatprep.subr.mxu0 0.0
    %4255 = vmatpush2.msra.mxu0 0.0
    %4256 = vmatprep.subr.mxu0 0.0
    %4257 = vmatpush2.msra.mxu0 0.0
    %4258 = vmatprep.subr.mxu0 0.0
    %4259 = vmatpush2.msra.mxu0 0.0
    %4260 = vmatprep.subr.mxu0 0.0
    %4261 = vmatpush2.msra.mxu0 0.0
    %4262 = vmatprep.subr.mxu0 0.0
    %4263 = vmatpush2.msra.mxu0 0.0
    %4264 = vmatprep.subr.mxu0 0.0
    %4265 = vmatpush2.msra.mxu0 0.0
    %4266 = vmatprep.subr.mxu0 0.0
    %4267 = vmatpush2.msra.mxu0 0.0
    %4268 = vmatprep.subr.mxu0 0.0
    %4269 = vmatpush2.msra.mxu0 0.0
    %4270 = vmatprep.subr.mxu0 0.0
    %4271 = vmatpush2.msra.mxu0 0.0
    %4272 = vmatprep.subr.mxu0 0.0
    %4273 = vmatpush2.msra.mxu0 0.0
    %4274 = vmatprep.mubr.f32.mxu0 0.0
    %4275 = vmatmul.mubr.f32.gmra.mxu0 %v4208
    %v4276 = vpop.f32.mrf.mxu0
    %v4277 = vadd.f32 0.0, %v4276
    %v4278 = vpop.f32.mrf.mxu0
    %4279 = vdwg.mxu0
    %v4280 = vrcp.pop %v4206
    %v4281 = vmul.f32 %v4277, %v4280
    %4282 = vrot.lane.b32.xlu0 %v3471, 120
    %v4283 = vpop.permute.xlu0 %4282
    %v4284 = vsel %vm432, %v4283, 0
    %4286 = vmatprep.subr.mxu0 0.0
    %4287 = vmatpush1.xpose.msra.mxu0 0.0
    %4288 = vmatprep.subr.mxu0 0.0
    %4289 = vmatpush1.xpose.msra.mxu0 0.0
    %4290 = vmatprep.subr.mxu0 0.0
    %4291 = vmatpush1.xpose.msra.mxu0 0.0
    %4292 = vmatprep.subr.mxu0 0.0
    %4293 = vmatpush1.xpose.msra.mxu0 0.0
    %4294 = vmatprep.subr.mxu0 0.0
    %4295 = vmatpush1.xpose.msra.mxu0 0.0
    %4296 = vmatprep.subr.mxu0 0.0
    %4297 = vmatpush1.xpose.msra.mxu0 0.0
    %4298 = vmatprep.subr.mxu0 0.0
    %4299 = vmatpush1.xpose.msra.mxu0 0.0
    %4300 = vmatprep.subr.mxu0 0.0
    %4301 = vmatpush1.xpose.msra.mxu0 0.0
    %4302 = vmatprep.subr.mxu0 0.0
    %4303 = vmatpush1.xpose.msra.mxu0 0.0
    %4304 = vmatprep.subr.mxu0 0.0
    %4305 = vmatpush1.xpose.msra.mxu0 0.0
    %4306 = vmatprep.subr.mxu0 0.0
    %4307 = vmatpush1.xpose.msra.mxu0 0.0
    %4308 = vmatprep.subr.mxu0 0.0
    %4309 = vmatpush1.xpose.msra.mxu0 0.0
    %4310 = vmatprep.subr.mxu0 0.0
    %4311 = vmatpush1.xpose.msra.mxu0 0.0
    %4312 = vmatprep.subr.mxu0 0.0
    %4313 = vmatpush1.xpose.msra.mxu0 0.0
    %4314 = vmatprep.subr.mxu0 0.0
    %4315 = vmatpush1.xpose.msra.mxu0 0.0
    %4316 = vmatprep.subr.mxu0 0.0
    %4317 = vmatpush1.xpose.msra.mxu0 %v1277
    %4318 = vmatprep.subr.mxu0 0.0
    %4319 = vmatpush2.xpose.msra.mxu0 0.0
    %4320 = vmatprep.subr.mxu0 0.0
    %4321 = vmatpush2.xpose.msra.mxu0 0.0
    %4322 = vmatprep.subr.mxu0 0.0
    %4323 = vmatpush2.xpose.msra.mxu0 0.0
    %4324 = vmatprep.subr.mxu0 0.0
    %4325 = vmatpush2.xpose.msra.mxu0 0.0
    %4326 = vmatprep.subr.mxu0 0.0
    %4327 = vmatpush2.xpose.msra.mxu0 0.0
    %4328 = vmatprep.subr.mxu0 0.0
    %4329 = vmatpush2.xpose.msra.mxu0 0.0
    %4330 = vmatprep.subr.mxu0 0.0
    %4331 = vmatpush2.xpose.msra.mxu0 0.0
    %4332 = vmatprep.subr.mxu0 0.0
    %4333 = vmatpush2.xpose.msra.mxu0 0.0
    %4334 = vmatprep.subr.mxu0 0.0
    %4335 = vmatpush2.xpose.msra.mxu0 0.0
    %4336 = vmatprep.subr.mxu0 0.0
    %4337 = vmatpush2.xpose.msra.mxu0 0.0
    %4338 = vmatprep.subr.mxu0 0.0
    %4339 = vmatpush2.xpose.msra.mxu0 0.0
    %4340 = vmatprep.subr.mxu0 0.0
    %4341 = vmatpush2.xpose.msra.mxu0 0.0
    %4342 = vmatprep.subr.mxu0 0.0
    %4343 = vmatpush2.xpose.msra.mxu0 0.0
    %4344 = vmatprep.subr.mxu0 0.0
    %4345 = vmatpush2.xpose.msra.mxu0 0.0
    %4346 = vmatprep.subr.mxu0 0.0
    %4347 = vmatpush2.xpose.msra.mxu0 0.0
    %4348 = vmatprep.subr.mxu0 0.0
    %4349 = vmatpush2.xpose.msra.mxu0 0.0
    %4350 = vmatprep.mubr.f32.mxu0 0.0
    %4351 = vmatmul.mubr.f32.gmra.mxu0 %v4284
    %v4352 = vpop.f32.mrf.mxu0
    %v4353 = vadd.f32 0.0, %v4352
    %v4354 = vpop.f32.mrf.mxu0
    %4355 = vdwg.mxu0
    %v4356 = vmul.f32 %v4353, 0.35355338
    %v4357 = vsel %vm432, %v4356, -inf
    %4358 = vmax.xlane.f32.xlu0 %v4357
    %v4359 = vpop.xlane.xlu0 %4358
    %v4360 = vsub.f32 %v4356, %v4359
    %v4361 = vmul.f32 %v4360, 1.442695
    %v4362 = vpow.pop %v4361
    %v4363 = vsel %vm432, %v4362, 0.0
    %4364 = vadd.xlane.f32.xlu0 %v4363
    %v4365 = vpop.xlane.xlu0 %4364
    %v4367 = vsel %vm432, %v4362, 0
    %4369 = vmatprep.subr.mxu0 0.0
    %4370 = vmatpush1.msra.mxu0 0.0
    %4371 = vmatprep.subr.mxu0 0.0
    %4372 = vmatpush1.msra.mxu0 0.0
    %4373 = vmatprep.subr.mxu0 0.0
    %4374 = vmatpush1.msra.mxu0 0.0
    %4375 = vmatprep.subr.mxu0 0.0
    %4376 = vmatpush1.msra.mxu0 0.0
    %4377 = vmatprep.subr.mxu0 0.0
    %4378 = vmatpush1.msra.mxu0 0.0
    %4379 = vmatprep.subr.mxu0 0.0
    %4380 = vmatpush1.msra.mxu0 0.0
    %4381 = vmatprep.subr.mxu0 0.0
    %4382 = vmatpush1.msra.mxu0 0.0
    %4383 = vmatprep.subr.mxu0 0.0
    %4384 = vmatpush1.msra.mxu0 0.0
    %4385 = vmatprep.subr.mxu0 0.0
    %4386 = vmatpush1.msra.mxu0 0.0
    %4387 = vmatprep.subr.mxu0 0.0
    %4388 = vmatpush1.msra.mxu0 0.0
    %4389 = vmatprep.subr.mxu0 0.0
    %4390 = vmatpush1.msra.mxu0 0.0
    %4391 = vmatprep.subr.mxu0 0.0
    %4392 = vmatpush1.msra.mxu0 0.0
    %4393 = vmatprep.subr.mxu0 0.0
    %4394 = vmatpush1.msra.mxu0 0.0
    %4395 = vmatprep.subr.mxu0 0.0
    %4396 = vmatpush1.msra.mxu0 0.0
    %4397 = vmatprep.subr.mxu0 0.0
    %4398 = vmatpush1.msra.mxu0 0.0
    %4399 = vmatprep.subr.mxu0 0.0
    %4400 = vmatpush1.msra.mxu0 %v1361
    %4401 = vmatprep.subr.mxu0 0.0
    %4402 = vmatpush2.msra.mxu0 0.0
    %4403 = vmatprep.subr.mxu0 0.0
    %4404 = vmatpush2.msra.mxu0 0.0
    %4405 = vmatprep.subr.mxu0 0.0
    %4406 = vmatpush2.msra.mxu0 0.0
    %4407 = vmatprep.subr.mxu0 0.0
    %4408 = vmatpush2.msra.mxu0 0.0
    %4409 = vmatprep.subr.mxu0 0.0
    %4410 = vmatpush2.msra.mxu0 0.0
    %4411 = vmatprep.subr.mxu0 0.0
    %4412 = vmatpush2.msra.mxu0 0.0
    %4413 = vmatprep.subr.mxu0 0.0
    %4414 = vmatpush2.msra.mxu0 0.0
    %4415 = vmatprep.subr.mxu0 0.0
    %4416 = vmatpush2.msra.mxu0 0.0
    %4417 = vmatprep.subr.mxu0 0.0
    %4418 = vmatpush2.msra.mxu0 0.0
    %4419 = vmatprep.subr.mxu0 0.0
    %4420 = vmatpush2.msra.mxu0 0.0
    %4421 = vmatprep.subr.mxu0 0.0
    %4422 = vmatpush2.msra.mxu0 0.0
    %4423 = vmatprep.subr.mxu0 0.0
    %4424 = vmatpush2.msra.mxu0 0.0
    %4425 = vmatprep.subr.mxu0 0.0
    %4426 = vmatpush2.msra.mxu0 0.0
    %4427 = vmatprep.subr.mxu0 0.0
    %4428 = vmatpush2.msra.mxu0 0.0
    %4429 = vmatprep.subr.mxu0 0.0
    %4430 = vmatpush2.msra.mxu0 0.0
    %4431 = vmatprep.subr.mxu0 0.0
    %4432 = vmatpush2.msra.mxu0 0.0
    %4433 = vmatprep.mubr.f32.mxu0 0.0
    %4434 = vmatmul.mubr.f32.gmra.mxu0 %v4367
    %v4435 = vpop.f32.mrf.mxu0
    %v4436 = vadd.f32 0.0, %v4435
    %v4437 = vpop.f32.mrf.mxu0
    %4438 = vdwg.mxu0
    %v4439 = vrcp.pop %v4365
    %v4440 = vmul.f32 %v4436, %v4439
    %4441 = vrot.lane.b32.xlu0 %v3471, 112
    %v4442 = vpop.permute.xlu0 %4441
    %v4443 = vsel %vm432, %v4442, 0
    %4445 = vmatprep.subr.mxu0 0.0
    %4446 = vmatpush1.xpose.msra.mxu0 0.0
    %4447 = vmatprep.subr.mxu0 0.0
    %4448 = vmatpush1.xpose.msra.mxu0 0.0
    %4449 = vmatprep.subr.mxu0 0.0
    %4450 = vmatpush1.xpose.msra.mxu0 0.0
    %4451 = vmatprep.subr.mxu0 0.0
    %4452 = vmatpush1.xpose.msra.mxu0 0.0
    %4453 = vmatprep.subr.mxu0 0.0
    %4454 = vmatpush1.xpose.msra.mxu0 0.0
    %4455 = vmatprep.subr.mxu0 0.0
    %4456 = vmatpush1.xpose.msra.mxu0 0.0
    %4457 = vmatprep.subr.mxu0 0.0
    %4458 = vmatpush1.xpose.msra.mxu0 0.0
    %4459 = vmatprep.subr.mxu0 0.0
    %4460 = vmatpush1.xpose.msra.mxu0 0.0
    %4461 = vmatprep.subr.mxu0 0.0
    %4462 = vmatpush1.xpose.msra.mxu0 0.0
    %4463 = vmatprep.subr.mxu0 0.0
    %4464 = vmatpush1.xpose.msra.mxu0 0.0
    %4465 = vmatprep.subr.mxu0 0.0
    %4466 = vmatpush1.xpose.msra.mxu0 0.0
    %4467 = vmatprep.subr.mxu0 0.0
    %4468 = vmatpush1.xpose.msra.mxu0 0.0
    %4469 = vmatprep.subr.mxu0 0.0
    %4470 = vmatpush1.xpose.msra.mxu0 0.0
    %4471 = vmatprep.subr.mxu0 0.0
    %4472 = vmatpush1.xpose.msra.mxu0 0.0
    %4473 = vmatprep.subr.mxu0 0.0
    %4474 = vmatpush1.xpose.msra.mxu0 0.0
    %4475 = vmatprep.subr.mxu0 0.0
    %4476 = vmatpush1.xpose.msra.mxu0 %v1444
    %4477 = vmatprep.subr.mxu0 0.0
    %4478 = vmatpush2.xpose.msra.mxu0 0.0
    %4479 = vmatprep.subr.mxu0 0.0
    %4480 = vmatpush2.xpose.msra.mxu0 0.0
    %4481 = vmatprep.subr.mxu0 0.0
    %4482 = vmatpush2.xpose.msra.mxu0 0.0
    %4483 = vmatprep.subr.mxu0 0.0
    %4484 = vmatpush2.xpose.msra.mxu0 0.0
    %4485 = vmatprep.subr.mxu0 0.0
    %4486 = vmatpush2.xpose.msra.mxu0 0.0
    %4487 = vmatprep.subr.mxu0 0.0
    %4488 = vmatpush2.xpose.msra.mxu0 0.0
    %4489 = vmatprep.subr.mxu0 0.0
    %4490 = vmatpush2.xpose.msra.mxu0 0.0
    %4491 = vmatprep.subr.mxu0 0.0
    %4492 = vmatpush2.xpose.msra.mxu0 0.0
    %4493 = vmatprep.subr.mxu0 0.0
    %4494 = vmatpush2.xpose.msra.mxu0 0.0
    %4495 = vmatprep.subr.mxu0 0.0
    %4496 = vmatpush2.xpose.msra.mxu0 0.0
    %4497 = vmatprep.subr.mxu0 0.0
    %4498 = vmatpush2.xpose.msra.mxu0 0.0
    %4499 = vmatprep.subr.mxu0 0.0
    %4500 = vmatpush2.xpose.msra.mxu0 0.0
    %4501 = vmatprep.subr.mxu0 0.0
    %4502 = vmatpush2.xpose.msra.mxu0 0.0
    %4503 = vmatprep.subr.mxu0 0.0
    %4504 = vmatpush2.xpose.msra.mxu0 0.0
    %4505 = vmatprep.subr.mxu0 0.0
    %4506 = vmatpush2.xpose.msra.mxu0 0.0
    %4507 = vmatprep.subr.mxu0 0.0
    %4508 = vmatpush2.xpose.msra.mxu0 0.0
    %4509 = vmatprep.mubr.f32.mxu0 0.0
    %4510 = vmatmul.mubr.f32.gmra.mxu0 %v4443
    %v4511 = vpop.f32.mrf.mxu0
    %v4512 = vadd.f32 0.0, %v4511
    %v4513 = vpop.f32.mrf.mxu0
    %4514 = vdwg.mxu0
    %v4515 = vmul.f32 %v4512, 0.35355338
    %v4516 = vsel %vm432, %v4515, -inf
    %4517 = vmax.xlane.f32.xlu0 %v4516
    %v4518 = vpop.xlane.xlu0 %4517
    %v4519 = vsub.f32 %v4515, %v4518
    %v4520 = vmul.f32 %v4519, 1.442695
    %v4521 = vpow.pop %v4520
    %v4522 = vsel %vm432, %v4521, 0.0
    %4523 = vadd.xlane.f32.xlu0 %v4522
    %v4524 = vpop.xlane.xlu0 %4523
    %v4526 = vsel %vm432, %v4521, 0
    %4528 = vmatprep.subr.mxu0 0.0
    %4529 = vmatpush1.msra.mxu0 0.0
    %4530 = vmatprep.subr.mxu0 0.0
    %4531 = vmatpush1.msra.mxu0 0.0
    %4532 = vmatprep.subr.mxu0 0.0
    %4533 = vmatpush1.msra.mxu0 0.0
    %4534 = vmatprep.subr.mxu0 0.0
    %4535 = vmatpush1.msra.mxu0 0.0
    %4536 = vmatprep.subr.mxu0 0.0
    %4537 = vmatpush1.msra.mxu0 0.0
    %4538 = vmatprep.subr.mxu0 0.0
    %4539 = vmatpush1.msra.mxu0 0.0
    %4540 = vmatprep.subr.mxu0 0.0
    %4541 = vmatpush1.msra.mxu0 0.0
    %4542 = vmatprep.subr.mxu0 0.0
    %4543 = vmatpush1.msra.mxu0 0.0
    %4544 = vmatprep.subr.mxu0 0.0
    %4545 = vmatpush1.msra.mxu0 0.0
    %4546 = vmatprep.subr.mxu0 0.0
    %4547 = vmatpush1.msra.mxu0 0.0
    %4548 = vmatprep.subr.mxu0 0.0
    %4549 = vmatpush1.msra.mxu0 0.0
    %4550 = vmatprep.subr.mxu0 0.0
    %4551 = vmatpush1.msra.mxu0 0.0
    %4552 = vmatprep.subr.mxu0 0.0
    %4553 = vmatpush1.msra.mxu0 0.0
    %4554 = vmatprep.subr.mxu0 0.0
    %4555 = vmatpush1.msra.mxu0 0.0
    %4556 = vmatprep.subr.mxu0 0.0
    %4557 = vmatpush1.msra.mxu0 0.0
    %4558 = vmatprep.subr.mxu0 0.0
    %4559 = vmatpush1.msra.mxu0 %v1527
    %4560 = vmatprep.subr.mxu0 0.0
    %4561 = vmatpush2.msra.mxu0 0.0
    %4562 = vmatprep.subr.mxu0 0.0
    %4563 = vmatpush2.msra.mxu0 0.0
    %4564 = vmatprep.subr.mxu0 0.0
    %4565 = vmatpush2.msra.mxu0 0.0
    %4566 = vmatprep.subr.mxu0 0.0
    %4567 = vmatpush2.msra.mxu0 0.0
    %4568 = vmatprep.subr.mxu0 0.0
    %4569 = vmatpush2.msra.mxu0 0.0
    %4570 = vmatprep.subr.mxu0 0.0
    %4571 = vmatpush2.msra.mxu0 0.0
    %4572 = vmatprep.subr.mxu0 0.0
    %4573 = vmatpush2.msra.mxu0 0.0
    %4574 = vmatprep.subr.mxu0 0.0
    %4575 = vmatpush2.msra.mxu0 0.0
    %4576 = vmatprep.subr.mxu0 0.0
    %4577 = vmatpush2.msra.mxu0 0.0
    %4578 = vmatprep.subr.mxu0 0.0
    %4579 = vmatpush2.msra.mxu0 0.0
    %4580 = vmatprep.subr.mxu0 0.0
    %4581 = vmatpush2.msra.mxu0 0.0
    %4582 = vmatprep.subr.mxu0 0.0
    %4583 = vmatpush2.msra.mxu0 0.0
    %4584 = vmatprep.subr.mxu0 0.0
    %4585 = vmatpush2.msra.mxu0 0.0
    %4586 = vmatprep.subr.mxu0 0.0
    %4587 = vmatpush2.msra.mxu0 0.0
    %4588 = vmatprep.subr.mxu0 0.0
    %4589 = vmatpush2.msra.mxu0 0.0
    %4590 = vmatprep.subr.mxu0 0.0
    %4591 = vmatpush2.msra.mxu0 0.0
    %4592 = vmatprep.mubr.f32.mxu0 0.0
    %4593 = vmatmul.mubr.f32.gmra.mxu0 %v4526
    %v4594 = vpop.f32.mrf.mxu0
    %v4595 = vadd.f32 0.0, %v4594
    %v4596 = vpop.f32.mrf.mxu0
    %4597 = vdwg.mxu0
    %v4598 = vrcp.pop %v4524
    %v4599 = vmul.f32 %v4595, %v4598
    %4600 = vrot.lane.b32.xlu0 %v3471, 104
    %v4601 = vpop.permute.xlu0 %4600
    %v4602 = vsel %vm432, %v4601, 0
    %4604 = vmatprep.subr.mxu0 0.0
    %4605 = vmatpush1.xpose.msra.mxu0 0.0
    %4606 = vmatprep.subr.mxu0 0.0
    %4607 = vmatpush1.xpose.msra.mxu0 0.0
    %4608 = vmatprep.subr.mxu0 0.0
    %4609 = vmatpush1.xpose.msra.mxu0 0.0
    %4610 = vmatprep.subr.mxu0 0.0
    %4611 = vmatpush1.xpose.msra.mxu0 0.0
    %4612 = vmatprep.subr.mxu0 0.0
    %4613 = vmatpush1.xpose.msra.mxu0 0.0
    %4614 = vmatprep.subr.mxu0 0.0
    %4615 = vmatpush1.xpose.msra.mxu0 0.0
    %4616 = vmatprep.subr.mxu0 0.0
    %4617 = vmatpush1.xpose.msra.mxu0 0.0
    %4618 = vmatprep.subr.mxu0 0.0
    %4619 = vmatpush1.xpose.msra.mxu0 0.0
    %4620 = vmatprep.subr.mxu0 0.0
    %4621 = vmatpush1.xpose.msra.mxu0 0.0
    %4622 = vmatprep.subr.mxu0 0.0
    %4623 = vmatpush1.xpose.msra.mxu0 0.0
    %4624 = vmatprep.subr.mxu0 0.0
    %4625 = vmatpush1.xpose.msra.mxu0 0.0
    %4626 = vmatprep.subr.mxu0 0.0
    %4627 = vmatpush1.xpose.msra.mxu0 0.0
    %4628 = vmatprep.subr.mxu0 0.0
    %4629 = vmatpush1.xpose.msra.mxu0 0.0
    %4630 = vmatprep.subr.mxu0 0.0
    %4631 = vmatpush1.xpose.msra.mxu0 0.0
    %4632 = vmatprep.subr.mxu0 0.0
    %4633 = vmatpush1.xpose.msra.mxu0 0.0
    %4634 = vmatprep.subr.mxu0 0.0
    %4635 = vmatpush1.xpose.msra.mxu0 %v1610
    %4636 = vmatprep.subr.mxu0 0.0
    %4637 = vmatpush2.xpose.msra.mxu0 0.0
    %4638 = vmatprep.subr.mxu0 0.0
    %4639 = vmatpush2.xpose.msra.mxu0 0.0
    %4640 = vmatprep.subr.mxu0 0.0
    %4641 = vmatpush2.xpose.msra.mxu0 0.0
    %4642 = vmatprep.subr.mxu0 0.0
    %4643 = vmatpush2.xpose.msra.mxu0 0.0
    %4644 = vmatprep.subr.mxu0 0.0
    %4645 = vmatpush2.xpose.msra.mxu0 0.0
    %4646 = vmatprep.subr.mxu0 0.0
    %4647 = vmatpush2.xpose.msra.mxu0 0.0
    %4648 = vmatprep.subr.mxu0 0.0
    %4649 = vmatpush2.xpose.msra.mxu0 0.0
    %4650 = vmatprep.subr.mxu0 0.0
    %4651 = vmatpush2.xpose.msra.mxu0 0.0
    %4652 = vmatprep.subr.mxu0 0.0
    %4653 = vmatpush2.xpose.msra.mxu0 0.0
    %4654 = vmatprep.subr.mxu0 0.0
    %4655 = vmatpush2.xpose.msra.mxu0 0.0
    %4656 = vmatprep.subr.mxu0 0.0
    %4657 = vmatpush2.xpose.msra.mxu0 0.0
    %4658 = vmatprep.subr.mxu0 0.0
    %4659 = vmatpush2.xpose.msra.mxu0 0.0
    %4660 = vmatprep.subr.mxu0 0.0
    %4661 = vmatpush2.xpose.msra.mxu0 0.0
    %4662 = vmatprep.subr.mxu0 0.0
    %4663 = vmatpush2.xpose.msra.mxu0 0.0
    %4664 = vmatprep.subr.mxu0 0.0
    %4665 = vmatpush2.xpose.msra.mxu0 0.0
    %4666 = vmatprep.subr.mxu0 0.0
    %4667 = vmatpush2.xpose.msra.mxu0 0.0
    %4668 = vmatprep.mubr.f32.mxu0 0.0
    %4669 = vmatmul.mubr.f32.gmra.mxu0 %v4602
    %v4670 = vpop.f32.mrf.mxu0
    %v4671 = vadd.f32 0.0, %v4670
    %v4672 = vpop.f32.mrf.mxu0
    %4673 = vdwg.mxu0
    %v4674 = vmul.f32 %v4671, 0.35355338
    %v4675 = vsel %vm432, %v4674, -inf
    %4676 = vmax.xlane.f32.xlu0 %v4675
    %v4677 = vpop.xlane.xlu0 %4676
    %v4678 = vsub.f32 %v4674, %v4677
    %v4679 = vmul.f32 %v4678, 1.442695
    %v4680 = vpow.pop %v4679
    %v4681 = vsel %vm432, %v4680, 0.0
    %4682 = vadd.xlane.f32.xlu0 %v4681
    %v4683 = vpop.xlane.xlu0 %4682
    %v4685 = vsel %vm432, %v4680, 0
    %4687 = vmatprep.subr.mxu0 0.0
    %4688 = vmatpush1.msra.mxu0 0.0
    %4689 = vmatprep.subr.mxu0 0.0
    %4690 = vmatpush1.msra.mxu0 0.0
    %4691 = vmatprep.subr.mxu0 0.0
    %4692 = vmatpush1.msra.mxu0 0.0
    %4693 = vmatprep.subr.mxu0 0.0
    %4694 = vmatpush1.msra.mxu0 0.0
    %4695 = vmatprep.subr.mxu0 0.0
    %4696 = vmatpush1.msra.mxu0 0.0
    %4697 = vmatprep.subr.mxu0 0.0
    %4698 = vmatpush1.msra.mxu0 0.0
    %4699 = vmatprep.subr.mxu0 0.0
    %4700 = vmatpush1.msra.mxu0 0.0
    %4701 = vmatprep.subr.mxu0 0.0
    %4702 = vmatpush1.msra.mxu0 0.0
    %4703 = vmatprep.subr.mxu0 0.0
    %4704 = vmatpush1.msra.mxu0 0.0
    %4705 = vmatprep.subr.mxu0 0.0
    %4706 = vmatpush1.msra.mxu0 0.0
    %4707 = vmatprep.subr.mxu0 0.0
    %4708 = vmatpush1.msra.mxu0 0.0
    %4709 = vmatprep.subr.mxu0 0.0
    %4710 = vmatpush1.msra.mxu0 0.0
    %4711 = vmatprep.subr.mxu0 0.0
    %4712 = vmatpush1.msra.mxu0 0.0
    %4713 = vmatprep.subr.mxu0 0.0
    %4714 = vmatpush1.msra.mxu0 0.0
    %4715 = vmatprep.subr.mxu0 0.0
    %4716 = vmatpush1.msra.mxu0 0.0
    %4717 = vmatprep.subr.mxu0 0.0
    %4718 = vmatpush1.msra.mxu0 %v1693
    %4719 = vmatprep.subr.mxu0 0.0
    %4720 = vmatpush2.msra.mxu0 0.0
    %4721 = vmatprep.subr.mxu0 0.0
    %4722 = vmatpush2.msra.mxu0 0.0
    %4723 = vmatprep.subr.mxu0 0.0
    %4724 = vmatpush2.msra.mxu0 0.0
    %4725 = vmatprep.subr.mxu0 0.0
    %4726 = vmatpush2.msra.mxu0 0.0
    %4727 = vmatprep.subr.mxu0 0.0
    %4728 = vmatpush2.msra.mxu0 0.0
    %4729 = vmatprep.subr.mxu0 0.0
    %4730 = vmatpush2.msra.mxu0 0.0
    %4731 = vmatprep.subr.mxu0 0.0
    %4732 = vmatpush2.msra.mxu0 0.0
    %4733 = vmatprep.subr.mxu0 0.0
    %4734 = vmatpush2.msra.mxu0 0.0
    %4735 = vmatprep.subr.mxu0 0.0
    %4736 = vmatpush2.msra.mxu0 0.0
    %4737 = vmatprep.subr.mxu0 0.0
    %4738 = vmatpush2.msra.mxu0 0.0
    %4739 = vmatprep.subr.mxu0 0.0
    %4740 = vmatpush2.msra.mxu0 0.0
    %4741 = vmatprep.subr.mxu0 0.0
    %4742 = vmatpush2.msra.mxu0 0.0
    %4743 = vmatprep.subr.mxu0 0.0
    %4744 = vmatpush2.msra.mxu0 0.0
    %4745 = vmatprep.subr.mxu0 0.0
    %4746 = vmatpush2.msra.mxu0 0.0
    %4747 = vmatprep.subr.mxu0 0.0
    %4748 = vmatpush2.msra.mxu0 0.0
    %4749 = vmatprep.subr.mxu0 0.0
    %4750 = vmatpush2.msra.mxu0 0.0
    %4751 = vmatprep.mubr.f32.mxu0 0.0
    %4752 = vmatmul.mubr.f32.gmra.mxu0 %v4685
    %v4753 = vpop.f32.mrf.mxu0
    %v4754 = vadd.f32 0.0, %v4753
    %v4755 = vpop.f32.mrf.mxu0
    %4756 = vdwg.mxu0
    %v4757 = vrcp.pop %v4683
    %v4758 = vmul.f32 %v4754, %v4757
    %4760 = vrot.lane.b32.xlu0 %v4440, 8
    %v4761 = vpop.permute.xlu0 %4760
    %4764 = vrot.lane.b32.xlu0 %v4599, 16
    %v4765 = vpop.permute.xlu0 %4764
    %4768 = vrot.lane.b32.xlu0 %v4758, 24
    %v4769 = vpop.permute.xlu0 %4768
    %v4771 = vsel %vm432, %v4281, %v4761
    %v4772 = vsel %vm1106, %v4771, %v4765
    %v4773 = vsel %vm1108, %v4772, %v4769
    %v4775 = vsel %vm139, %v4123, 0
    %v4778 = vsel %vm139, %v4773, 0
    %4780 = vmatprep.subr.mxu0 0.0
    %4781 = vmatpush1.msra.mxu0 0.0
    %4782 = vmatprep.subr.mxu0 0.0
    %4783 = vmatpush1.msra.mxu0 0.0
    %4784 = vmatprep.subr.mxu0 0.0
    %4785 = vmatpush1.msra.mxu0 0.0
    %4786 = vmatprep.subr.mxu0 0.0
    %4787 = vmatpush1.msra.mxu0 0.0
    %4788 = vmatprep.subr.mxu0 0.0
    %4789 = vmatpush1.msra.mxu0 0.0
    %4790 = vmatprep.subr.mxu0 0.0
    %4791 = vmatpush1.msra.mxu0 0.0
    %4792 = vmatprep.subr.mxu0 0.0
    %4793 = vmatpush1.msra.mxu0 0.0
    %4794 = vmatprep.subr.mxu0 0.0
    %4795 = vmatpush1.msra.mxu0 0.0
    %4796 = vmatprep.subr.mxu0 0.0
    %4797 = vmatpush1.msra.mxu0 0.0
    %4798 = vmatprep.subr.mxu0 0.0
    %4799 = vmatpush1.msra.mxu0 0.0
    %4800 = vmatprep.subr.mxu0 0.0
    %4801 = vmatpush1.msra.mxu0 0.0
    %4802 = vmatprep.subr.mxu0 0.0
    %4803 = vmatpush1.msra.mxu0 0.0
    %4804 = vmatprep.subr.mxu0 0.0
    %4805 = vmatpush1.msra.mxu0 %v318
    %4806 = vmatprep.subr.mxu0 0.0
    %4807 = vmatpush1.msra.mxu0 %v317
    %4808 = vmatprep.subr.mxu0 0.0
    %4809 = vmatpush1.msra.mxu0 %v316
    %4810 = vmatprep.subr.mxu0 0.0
    %4811 = vmatpush1.msra.mxu0 %v315
    %4812 = vmatprep.subr.mxu0 0.0
    %4813 = vmatpush2.msra.mxu0 0.0
    %4814 = vmatprep.subr.mxu0 0.0
    %4815 = vmatpush2.msra.mxu0 0.0
    %4816 = vmatprep.subr.mxu0 0.0
    %4817 = vmatpush2.msra.mxu0 0.0
    %4818 = vmatprep.subr.mxu0 0.0
    %4819 = vmatpush2.msra.mxu0 0.0
    %4820 = vmatprep.subr.mxu0 0.0
    %4821 = vmatpush2.msra.mxu0 0.0
    %4822 = vmatprep.subr.mxu0 0.0
    %4823 = vmatpush2.msra.mxu0 0.0
    %4824 = vmatprep.subr.mxu0 0.0
    %4825 = vmatpush2.msra.mxu0 0.0
    %4826 = vmatprep.subr.mxu0 0.0
    %4827 = vmatpush2.msra.mxu0 0.0
    %4828 = vmatprep.subr.mxu0 0.0
    %4829 = vmatpush2.msra.mxu0 0.0
    %4830 = vmatprep.subr.mxu0 0.0
    %4831 = vmatpush2.msra.mxu0 0.0
    %4832 = vmatprep.subr.mxu0 0.0
    %4833 = vmatpush2.msra.mxu0 0.0
    %4834 = vmatprep.subr.mxu0 0.0
    %4835 = vmatpush2.msra.mxu0 0.0
    %4836 = vmatprep.subr.mxu0 0.0
    %4837 = vmatpush2.msra.mxu0 0.0
    %4838 = vmatprep.subr.mxu0 0.0
    %4839 = vmatpush2.msra.mxu0 0.0
    %4840 = vmatprep.subr.mxu0 0.0
    %4841 = vmatpush2.msra.mxu0 0.0
    %4842 = vmatprep.subr.mxu0 0.0
    %4843 = vmatpush2.msra.mxu0 0.0
    %4844 = vmatprep.mubr.f32.mxu0 0.0
    %4845 = vmatmul.mubr.f32.gmra.mxu0 %v4775
    %v4846 = vpop.f32.mrf.mxu0
    %v4847 = vadd.f32 %v325, %v4846
    %v4848 = vpop.f32.mrf.mxu0
    %4849 = vmatprep.mubr.f32.mxu0 0.0
    %4850 = vmatmul.mubr.f32.gmra.mxu0 %v4778
    %v4851 = vpop.f32.mrf.mxu0
    %v4852 = vadd.f32 %v325, %v4851
    %v4853 = vpop.f32.mrf.mxu0
    %4854 = vdwg.mxu0
    %v4855 = vadd.f32 %v3391, %v4847
    %v4856 = vadd.f32 %v3392, %v4852
    %v4857 = vsel %vm139, %v4855, 0.0
    %4858 = vadd.xlane.f32.xlu0 %v4857
    %v4859 = vpop.xlane.xlu0 %4858
    %v4860 = vsel %vm139, %v4856, 0.0
    %4861 = vadd.xlane.f32.xlu0 %v4860
    %v4862 = vpop.xlane.xlu0 %4861
    %v4863 = vmul.f32 %v4859, %v1874
    %v4864 = vmul.f32 %v4862, %v1874
    %v4865 = vsub.f32 %v4855, %v4863
    %v4866 = vsub.f32 %v4856, %v4864
    %v4867 = vmul.f32 %v4865, %v4865
    %v4868 = vmul.f32 %v4866, %v4866
    %v4869 = vsel %vm139, %v4867, 0.0
    %4870 = vadd.xlane.f32.xlu0 %v4869
    %v4871 = vpop.xlane.xlu0 %4870
    %v4872 = vsel %vm139, %v4868, 0.0
    %4873 = vadd.xlane.f32.xlu0 %v4872
    %v4874 = vpop.xlane.xlu0 %4873
    %v4875 = vmul.f32 %v4871, %v1874
    %v4876 = vmul.f32 %v4874, %v1874
    %v4877 = vadd.f32 %v4875, 1e-05
    %v4878 = vadd.f32 %v4876, 1e-05
    %v4879 = vrsqrt.pop %v4877
    %v4880 = vrsqrt.pop %v4878
    %v4881 = vmul.f32 %v4865, %v4879
    %v4882 = vmul.f32 %v4866, %v4880
    %v4883 = vmul.f32 %v4881, %v332
    %v4884 = vmul.f32 %v4882, %v332
    %v4885 = vadd.f32 %v4883, %v339
    %v4886 = vadd.f32 %v4884, %v339
    %4887 = vst.msk [vmem:[#allocation15] sm:$0xff] %vm139, %v4885
    %4888 = vst.msk [vmem:[#allocation15 + $0x8] sm:$0xff] %vm139, %v4886
    // Predicated region
    $region74: #{tpu_custom_call.1} parent=1 // pred_check
      _
    $region75: #{tpu_custom_call.1} parent=1 // pred_check_branch
      %4890 = sbr.rel (0) target = $region77
    $region76: #{tpu_custom_call.1} parent=1 // pred_region
      %s4892 = ssub.s32 256, 256
      %4893 = vsyncadd [#allocation6], %s4892
      %s4894 = sshll.u32 [#allocation15], 4
      %s4895 = int_to_ptr.vmem [resolvable:$true] %s4894
      %4900 = dma.vmem_to_hbm [thread:$0]  %s4895, 256, %s12, [#allocation6], 128, 128, 8
    $region77: #{tpu_custom_call.1} parent=1 // pred_fallthru
      _
    // Predicated region
    $region78: #{tpu_custom_call.1} parent=1 // pred_check
      _
    $region79: #{tpu_custom_call.1} parent=1 // pred_check_branch
      %4902 = sbr.rel (0) target = $region81
    $region80: #{tpu_custom_call.1} parent=1 // pred_region
      %4903 = dma.done [#allocation6], 256
    $region81: #{tpu_custom_call.1} parent=1 // pred_fallthru
      _
    %4904 = vsyncpa [#allocation5], 1
    %4905 = vsyncpa [#allocation8], 1
    %4906 = vsyncpa [#allocation11], 1
    %4907 = vsyncpa [#allocation14], 1
    %4908 = vsyncpa [#allocation6], 1

</llo_original>
